<compile_context>
chip_gen: v6e
topology: v6e:2x2x1
jax: 0.10.0
libtpu: 0.0.40
codegen_flags: <defaults>
</compile_context>

<pallas_src>
import functools
import math

import jax
import jax.numpy as jnp
from jax.experimental import pallas as pl
from jax.experimental.pallas import tpu as pltpu


# MXU operand dtype (fp32 accumulation everywhere).  Set to jnp.float32 for
# bit-closer parity with the fp32 PyTorch reference.
_MXU_DTYPE = jnp.bfloat16
# Conservative scoped-VMEM limit that is safe on v5e/v6e (128 MiB) and v7x (64 MiB).
_VMEM_LIMIT = 48 * 1024 * 1024


def _pick_tile(dim, target, align):
    """Largest multiple of `align` that divides `dim` and is <= target; else full dim."""
    t = min(target, dim)
    t -= t % align
    while t >= align:
        if dim % t == 0:
            return t
        t -= align
    return dim  # full extent (always a legal block shape)


# ----------------------------------------------------------------------------
# Kernels
# ----------------------------------------------------------------------------
def _linear_kernel(x_ref, w_ref, b_ref, *rest, apply_ln, activation, add_residual):
    """o = [res +] act( LN?(x) @ w + b ); K un-tiled, M/N tiled by the grid."""
    idx = 0
    if apply_ln:
        g_ref, bln_ref = rest[0], rest[1]
        idx = 2
    if add_residual:
        res_ref = rest[idx]
        idx += 1
    o_ref = rest[idx]

    x = x_ref[...].astype(jnp.float32)
    if apply_ln:  # fp32 LayerNorm statistics (matches the fp16-safe LayerNorm)
        mu = jnp.mean(x, axis=-1, keepdims=True)
        var = jnp.mean(jnp.square(x - mu), axis=-1, keepdims=True)
        x = (x - mu) * jax.lax.rsqrt(var + 1e-5) * g_ref[...] + bln_ref[...]

    y = jnp.dot(
        x.astype(_MXU_DTYPE),
        w_ref[...].astype(_MXU_DTYPE),
        preferred_element_type=jnp.float32,
    ) + b_ref[...]
    if activation == "quick_gelu":
        y = y * jax.nn.sigmoid(1.702 * y)
    if add_residual:
        y = y + res_ref[...].astype(jnp.float32)
    o_ref[...] = y.astype(o_ref.dtype)


def _mlp_kernel(x_ref, g_ref, bln_ref, wfc_ref, bfc_ref, wcp_ref, bcp_ref,
                o_ref, xn_ref, acc_ref):
    """Fused ln_2 -> c_fc -> QuickGELU -> c_proj -> +residual.

    Grid = (M tiles, hidden chunks); hidden axis is the reduction ("arbitrary").
    The (tm, 4D) activation lives only chunk-by-chunk in VMEM.
    """
    h = pl.program_id(1)

    @pl.when(h == 0)
    def _():
        x = x_ref[...].astype(jnp.float32)
        mu = jnp.mean(x, axis=-1, keepdims=True)
        var = jnp.mean(jnp.square(x - mu), axis=-1, keepdims=True)
        xn = (x - mu) * jax.lax.rsqrt(var + 1e-5) * g_ref[...] + bln_ref[...]
        xn_ref[...] = xn.astype(xn_ref.dtype)
        acc_ref[...] = jnp.zeros_like(acc_ref)

    u = jnp.dot(
        xn_ref[...], wfc_ref[...].astype(_MXU_DTYPE),
        preferred_element_type=jnp.float32,
    ) + bfc_ref[...]
    u = u * jax.nn.sigmoid(1.702 * u)                      # QuickGELU
    acc_ref[...] += jnp.dot(
        u.astype(_MXU_DTYPE), wcp_ref[...].astype(_MXU_DTYPE),
        preferred_element_type=jnp.float32,
    )

    @pl.when(h == pl.num_programs(1) - 1)
    def _():
        o_ref[...] = (
            acc_ref[...] + bcp_ref[...] + x_ref[...].astype(jnp.float32)
        ).astype(o_ref.dtype)


def _attention_kernel(qkv_ref, *rest, heads, head_dim, need_probs):
    """All heads of one batch element per grid step.

    qkv_ref: (1, S, 3D) with columns [q | k | v], each D = heads*head_dim wide.
    Outputs: o (1, S, D) lane-dense slab; optionally head-averaged probs (1, S, S).
    """
    o_ref = rest[0]
    p_ref = rest[1] if need_probs else None
    D = heads * head_dim
    scale = 1.0 / math.sqrt(head_dim)

    qkv = qkv_ref[0]                                       # (S, 3D) fp32
    head_outs = []
    p_sum = None
    for h in range(heads):
        q = qkv[:, h * head_dim:(h + 1) * head_dim]
        k = qkv[:, D + h * head_dim:D + (h + 1) * head_dim]
        v = qkv[:, 2 * D + h * head_dim:2 * D + (h + 1) * head_dim]
        # scores = (q * scale) @ k^T (contract last dims, no explicit transpose)
        s = jax.lax.dot_general(
            (q * scale).astype(_MXU_DTYPE), k.astype(_MXU_DTYPE),
            (((1,), (1,)), ((), ())), preferred_element_type=jnp.float32)
        s = s - jnp.max(s, axis=-1, keepdims=True)
        e = jnp.exp(s)
        p = e * pl.reciprocal(jnp.sum(e, axis=-1, keepdims=True), approx=True)
        head_outs.append(
            jnp.dot(p.astype(_MXU_DTYPE), v.astype(_MXU_DTYPE),
                    preferred_element_type=jnp.float32))
        if need_probs:
            p_sum = p if p_sum is None else p_sum + p

    o_ref[0] = jnp.concatenate(head_outs, axis=-1)         # single lane-dense store
    if need_probs:
        p_ref[0] = p_sum * (1.0 / heads)                   # head-averaged in-kernel


def _layernorm_kernel(x_ref, g_ref, b_ref, o_ref):
    x = x_ref[...].astype(jnp.float32)
    mu = jnp.mean(x, axis=-1, keepdims=True)
    var = jnp.mean(jnp.square(x - mu), axis=-1, keepdims=True)
    o_ref[...] = ((x - mu) * jax.lax.rsqrt(var + 1e-5) * g_ref[...]
                  + b_ref[...]).astype(o_ref.dtype)


# ----------------------------------------------------------------------------
# Wrappers
# ----------------------------------------------------------------------------
def linear(x, w_t, b, *, ln=None, activation=None, residual=None,
           tm_target=256, tn_target=512):
    """x: (M, K) fp32, w_t: (K, N) (transposed PyTorch weight), b: (N,).

    Optional fused pre-LayerNorm (ln=(gamma, beta)) and fused residual add.
    K is un-tiled (d_model-sized, fits VMEM); M/N are tiled and double-buffered.
    """
    M, K = x.shape
    N = w_t.shape[1]
    tm = _pick_tile(M, tm_target, 8)
    tn = _pick_tile(N, tn_target, 128)

    in_specs = [
        pl.BlockSpec((tm, K), lambda i, j: (i, 0)),
        pl.BlockSpec((K, tn), lambda i, j: (0, j)),
        pl.BlockSpec((1, tn), lambda i, j: (0, j)),
    ]
    args = [x, w_t, b.reshape(1, N)]
    if ln is not None:
        gamma, beta = ln
        in_specs += [pl.BlockSpec((1, K), lambda i, j: (0, 0)),
                     pl.BlockSpec((1, K), lambda i, j: (0, 0))]
        args += [gamma.reshape(1, K), beta.reshape(1, K)]
    if residual is not None:
        in_specs.append(pl.BlockSpec((tm, tn), lambda i, j: (i, j)))
        args.append(residual)

    kernel = functools.partial(
        _linear_kernel,
        apply_ln=ln is not None,
        activation=activation,
        add_residual=residual is not None,
    )
    return pl.pallas_call(
        kernel,
        out_shape=jax.ShapeDtypeStruct((M, N), jnp.float32),
        grid=(M // tm, N // tn),
        in_specs=in_specs,
        out_specs=pl.BlockSpec((tm, tn), lambda i, j: (i, j)),
        compiler_params=pltpu.CompilerParams(
            dimension_semantics=("parallel", "parallel"),
            vmem_limit_bytes=_VMEM_LIMIT,
        ),
    )(*args)


def mlp_block(x2d, gamma, beta, wfc_t, bfc, wcp_t, bcp,
              tm_target=256, th_target=512):
    """x + c_proj(QuickGELU(c_fc(LN(x)))), fully fused."""
    M, D = x2d.shape
    H4 = wfc_t.shape[1]
    tm = _pick_tile(M, tm_target, 8)
    th = _pick_tile(H4, th_target, 128)
    return pl.pallas_call(
        _mlp_kernel,
        out_shape=jax.ShapeDtypeStruct((M, D), jnp.float32),
        grid=(M // tm, H4 // th),
        in_specs=[
            pl.BlockSpec((tm, D), lambda i, h: (i, 0)),    # x (also the residual)
            pl.BlockSpec((1, D), lambda i, h: (0, 0)),     # ln2 gamma
            pl.BlockSpec((1, D), lambda i, h: (0, 0)),     # ln2 beta
            pl.BlockSpec((D, th), lambda i, h: (0, h)),    # W_fc chunk
            pl.BlockSpec((1, th), lambda i, h: (0, h)),    # b_fc chunk
            pl.BlockSpec((th, D), lambda i, h: (h, 0)),    # W_cproj chunk
            pl.BlockSpec((1, D), lambda i, h: (0, 0)),     # b_cproj
        ],
        out_specs=pl.BlockSpec((tm, D), lambda i, h: (i, 0)),
        scratch_shapes=[
            pltpu.VMEM((tm, D), _MXU_DTYPE),               # LN(x) in matmul dtype
            pltpu.VMEM((tm, D), jnp.float32),              # fp32 accumulator
        ],
        compiler_params=pltpu.CompilerParams(
            dimension_semantics=("parallel", "arbitrary"),
            vmem_limit_bytes=_VMEM_LIMIT,
        ),
    )(x2d, gamma.reshape(1, D), beta.reshape(1, D),
      wfc_t, bfc.reshape(1, H4), wcp_t, bcp.reshape(1, D))


def mha(qkv, heads, need_probs):
    """qkv: (B, S, 3D) -> (attn_out (B, S, D), head-averaged probs (B, S, S) | None)."""
    B, S, threeD = qkv.shape
    D = threeD // 3
    hd = D // heads
    kernel = functools.partial(
        _attention_kernel, heads=heads, head_dim=hd, need_probs=need_probs)

    out_shapes = [jax.ShapeDtypeStruct((B, S, D), jnp.float32)]
    out_specs = [pl.BlockSpec((1, S, D), lambda b: (b, 0, 0))]
    if need_probs:
        out_shapes.append(jax.ShapeDtypeStruct((B, S, S), jnp.float32))
        out_specs.append(pl.BlockSpec((1, S, S), lambda b: (b, 0, 0)))

    outs = pl.pallas_call(
        kernel,
        out_shape=tuple(out_shapes),
        grid=(B,),
        in_specs=[pl.BlockSpec((1, S, threeD), lambda b: (b, 0, 0))],
        out_specs=tuple(out_specs),
        compiler_params=pltpu.CompilerParams(
            dimension_semantics=("parallel",),
            vmem_limit_bytes=_VMEM_LIMIT,
        ),
    )(qkv)
    if need_probs:
        return outs[0], outs[1]
    return outs[0], None


def layer_norm(x, gamma, beta, tm_target=512):
    """Standalone LayerNorm (ln_pre / ln_post), tiled over rows."""
    M, D = x.shape
    tm = _pick_tile(M, tm_target, 8)
    return pl.pallas_call(
        _layernorm_kernel,
        out_shape=jax.ShapeDtypeStruct((M, D), x.dtype),
        grid=(M // tm,),
        in_specs=[
            pl.BlockSpec((tm, D), lambda i: (i, 0)),
            pl.BlockSpec((1, D), lambda i: (0, 0)),
            pl.BlockSpec((1, D), lambda i: (0, 0)),
        ],
        out_specs=pl.BlockSpec((tm, D), lambda i: (i, 0)),
        compiler_params=pltpu.CompilerParams(
            dimension_semantics=("parallel",),
            vmem_limit_bytes=_VMEM_LIMIT,
        ),
    )(x, gamma.reshape(1, D), beta.reshape(1, D))


# ----------------------------------------------------------------------------
# Model forward
# ----------------------------------------------------------------------------
def residual_attention_block(x, p, heads, need_probs):
    """x: (B, S, D).  Returns (x_out, head-averaged probs (B,S,S) or None)."""
    B, S, D = x.shape
    x2d = x.reshape(B * S, D)

    # attention branch: ln_1 fused into the QKV projection
    qkv = linear(x2d, p["in_proj_w_t"], p["in_proj_b"],
                 ln=(p["ln1_g"], p["ln1_b"]))                       # (B*S, 3D)
    attn_out, probs = mha(qkv.reshape(B, S, 3 * D), heads, need_probs)
    # out_proj with fused residual add
    x2d = linear(attn_out.reshape(B * S, D), p["out_proj_w_t"], p["out_proj_b"],
                 residual=x2d)                                      # (B*S, D)

    # MLP branch fully fused (ln_2, c_fc, QuickGELU, c_proj, residual)
    x2d = mlp_block(x2d, p["ln2_g"], p["ln2_b"],
                    p["fc_w_t"], p["fc_b"], p["cproj_w_t"], p["cproj_b"])
    return x2d.reshape(B, S, D), probs


def vision_transformer(x_nchw, params, *, patch_size, heads):
    B, C, H, W = x_nchw.shape
    pch = patch_size
    gh, gw = H // pch, W // pch

    # Patchify glue: (B,C,H,W) -> (B*gh*gw, C*p*p) with (c, kh, kw) flattening
    # order, identical to conv1 -> reshape -> permute in the PyTorch model.
    patches = (
        x_nchw.reshape(B, C, gh, pch, gw, pch)
        .transpose(0, 2, 4, 1, 3, 5)
        .reshape(B * gh * gw, C * pch * pch)
    )
    D = params["conv1_w_t"].shape[1]
    tokens = linear(patches, params["conv1_w_t"], jnp.zeros((D,), jnp.float32))
    tokens = tokens.reshape(B, gh * gw, D)

    cls = jnp.broadcast_to(params["class_embedding"].reshape(1, 1, D), (B, 1, D))
    x = jnp.concatenate([cls, tokens], axis=1) + params["positional_embedding"][None]
    S = x.shape[1]

    x = layer_norm(x.reshape(B * S, D), params["ln_pre_g"], params["ln_pre_b"])
    x = x.reshape(B, S, D)

    attn_probs = None
    n_blocks = len(params["blocks"])
    for li, blk in enumerate(params["blocks"]):
        # only the last resblock has need_weights=True in the PyTorch module
        need = li == n_blocks - 1
        x, probs = residual_attention_block(x, blk, heads, need_probs=need)
        if probs is not None:
            attn_probs = probs

    pooled = layer_norm(x[:, 0, :], params["ln_post_g"], params["ln_post_b"])   # (B, D)
    out = linear(pooled, params["proj"],
                 jnp.zeros((params["proj"].shape[1],), jnp.float32))
    return out, attn_probs


# ----------------------------------------------------------------------------
# Deterministic parameter init (shapes mirror the PyTorch module)
# ----------------------------------------------------------------------------
def init_params(key, *, input_resolution, patch_size, width, layers, output_dim):
    num_patches = (input_resolution // patch_size) ** 2
    scale = width ** (-0.5)
    counter = [0]

    def rnd(shape, s=0.02):
        counter[0] += 1
        k = jax.random.fold_in(key, counter[0])
        return (s * jax.random.normal(k, shape)).astype(jnp.float32)

    params = {
        # Conv2d weight (width, 3, p, p) flattened & transposed -> (3*p*p, width)
        "conv1_w_t": rnd((width, 3 * patch_size * patch_size)).T,
        "class_embedding": rnd((width,), s=scale),
        "positional_embedding": rnd((num_patches + 1, width), s=scale),
        "ln_pre_g": jnp.ones((width,), jnp.float32),
        "ln_pre_b": jnp.zeros((width,), jnp.float32),
        "ln_post_g": jnp.ones((width,), jnp.float32),
        "ln_post_b": jnp.zeros((width,), jnp.float32),
        "proj": rnd((width, output_dim), s=scale),
        "blocks": [],
    }
    for _ in range(layers):
        blk = {
            "ln1_g": jnp.ones((width,), jnp.float32),
            "ln1_b": jnp.zeros((width,), jnp.float32),
            "ln2_g": jnp.ones((width,), jnp.float32),
            "ln2_b": jnp.zeros((width,), jnp.float32),
            # in_proj_weight (3D, D) -> transposed (D, 3D)
            "in_proj_w_t": rnd((3 * width, width)).T,
            "in_proj_b": rnd((3 * width,)),
            # out_proj (D, D) -> transposed
            "out_proj_w_t": rnd((width, width)).T,
            "out_proj_b": rnd((width,)),
            # mlp.c_fc (4D, D) -> (D, 4D);  mlp.c_proj (D, 4D) -> (4D, D)
            "fc_w_t": rnd((4 * width, width)).T,
            "fc_b": rnd((4 * width,)),
            "cproj_w_t": rnd((width, 4 * width)).T,
            "cproj_b": rnd((width,)),
        }
        params["blocks"].append(blk)
    return params


# ----------------------------------------------------------------------------
if __name__ == "__main__":
    # Small config: 16x16 image, 4x4 patches -> 16 patches + 1 cls = 17 tokens,
    # width=32, 2 layers, 4 heads, output_dim=16, batch=2.
    input_resolution = 16
    patch_size = 4
    width = 32
    layers = 2
    heads = 4
    output_dim = 16
    batch = 2

    root = jax.random.PRNGKey(0)
    k_params, k_x = jax.random.split(root)
    params = init_params(
        k_params,
        input_resolution=input_resolution,
        patch_size=patch_size,
        width=width,
        layers=layers,
        output_dim=output_dim,
    )
    x = jax.random.normal(k_x, (batch, 3, input_resolution, input_resolution), jnp.float32)

    fwd = jax.jit(
        functools.partial(vision_transformer, patch_size=patch_size, heads=heads)
    )
    out, attn_probs = fwd(x, params)
    out = jax.block_until_ready(out)
    attn_probs = jax.block_until_ready(attn_probs)

    seq = (input_resolution // patch_size) ** 2 + 1
    assert out.shape == (batch, output_dim), out.shape
    assert attn_probs.shape == (batch, seq, seq), attn_probs.shape
    assert bool(jnp.all(jnp.isfinite(out))) and bool(jnp.all(jnp.isfinite(attn_probs)))
    print("KERNEL_OK")
</pallas_src>

<mosaic_0001>
module attributes {stable_mosaic.version = 11 : i64} {
  func.func @_layernorm_kernel(%arg0: i32, %arg1: memref<34x32xf32, #tpu.memory_space<vmem>>, %arg2: memref<1x32xf32, #tpu.memory_space<vmem>>, %arg3: memref<1x32xf32, #tpu.memory_space<vmem>>, %arg4: memref<34x32xf32, #tpu.memory_space<vmem>>) attributes {dimension_semantics = [#tpu.dimension_semantics<parallel>], iteration_bounds = array<i64: 1>, scalar_prefetch = 0 : i64, scratch_operands = 0 : i64, tpu.core_type = #tpu.core_type<tc>, window_params = [{transform_indices = @transform_0, window_bounds = array<i64: 34, 32>}, {pipeline_mode = #tpu.pipeline_mode<synchronous>, transform_indices = @transform_1, window_bounds = array<i64: 1, 32>}, {pipeline_mode = #tpu.pipeline_mode<synchronous>, transform_indices = @transform_2, window_bounds = array<i64: 1, 32>}, {transform_indices = @transform_3, window_bounds = array<i64: 34, 32>}]} {
    %c0 = arith.constant 0 : index
    %c0_0 = arith.constant 0 : index
    %0 = vector.load %arg1[%c0, %c0_0] : memref<34x32xf32, #tpu.memory_space<vmem>>, vector<34x32xf32>
    %cst = arith.constant dense<0.000000e+00> : vector<34xf32>
    %1 = vector.multi_reduction <add>, %0, %cst [1] : vector<34x32xf32> to vector<34xf32>
    %2 = vector.shape_cast %1 : vector<34xf32> to vector<34x1xf32>
    %cst_1 = arith.constant 3.200000e+01 : f32
    %3 = vector.broadcast %cst_1 : f32 to vector<34x1xf32>
    %4 = arith.divf %2, %3 : vector<34x1xf32>
    %5 = vector.broadcast %4 : vector<34x1xf32> to vector<34x32xf32>
    %6 = arith.subf %0, %5 : vector<34x32xf32>
    %7 = arith.mulf %6, %6 : vector<34x32xf32>
    %cst_2 = arith.constant dense<0.000000e+00> : vector<34xf32>
    %8 = vector.multi_reduction <add>, %7, %cst_2 [1] : vector<34x32xf32> to vector<34xf32>
    %9 = vector.shape_cast %8 : vector<34xf32> to vector<34x1xf32>
    %cst_3 = arith.constant 3.200000e+01 : f32
    %10 = vector.broadcast %cst_3 : f32 to vector<34x1xf32>
    %11 = arith.divf %9, %10 : vector<34x1xf32>
    %12 = vector.broadcast %4 : vector<34x1xf32> to vector<34x32xf32>
    %13 = arith.subf %0, %12 : vector<34x32xf32>
    %cst_4 = arith.constant 9.99999974E-6 : f32
    %14 = vector.broadcast %cst_4 : f32 to vector<34x1xf32>
    %15 = arith.addf %11, %14 : vector<34x1xf32>
    %16 = math.rsqrt %15 : vector<34x1xf32>
    %17 = vector.broadcast %16 : vector<34x1xf32> to vector<34x32xf32>
    %18 = arith.mulf %13, %17 : vector<34x32xf32>
    %c0_5 = arith.constant 0 : index
    %c0_6 = arith.constant 0 : index
    %19 = vector.load %arg2[%c0_5, %c0_6] : memref<1x32xf32, #tpu.memory_space<vmem>>, vector<1x32xf32>
    %20 = vector.broadcast %19 : vector<1x32xf32> to vector<34x32xf32>
    %21 = arith.mulf %18, %20 : vector<34x32xf32>
    %c0_7 = arith.constant 0 : index
    %c0_8 = arith.constant 0 : index
    %22 = vector.load %arg3[%c0_7, %c0_8] : memref<1x32xf32, #tpu.memory_space<vmem>>, vector<1x32xf32>
    %23 = vector.broadcast %22 : vector<1x32xf32> to vector<34x32xf32>
    %24 = arith.addf %21, %23 : vector<34x32xf32>
    %c0_9 = arith.constant 0 : index
    %c0_10 = arith.constant 0 : index
    %25 = vector.load %arg4[%c0_9, %c0_10] : memref<34x32xf32, #tpu.memory_space<vmem>>, vector<34x32xf32>
    tpu.vector_store %arg4[%c0_9, %c0_10], %24 {strides = array<i32>} : memref<34x32xf32, #tpu.memory_space<vmem>>, vector<34x32xf32>,
    return
  }
  func.func @transform_0(%arg0: i32) -> (i32, i32) {
    %c0_i32 = arith.constant 0 : i32
    %c0_i32_0 = arith.constant 0 : i32
    return %arg0, %c0_i32 : i32, i32
  }
  func.func @transform_1(%arg0: i32) -> (i32, i32) {
    %c0_i32 = arith.constant 0 : i32
    %c0_i32_0 = arith.constant 0 : i32
    %c0_i32_1 = arith.constant 0 : i32
    return %c0_i32, %c0_i32_0 : i32, i32
  }
  func.func @transform_2(%arg0: i32) -> (i32, i32) {
    %c0_i32 = arith.constant 0 : i32
    %c0_i32_0 = arith.constant 0 : i32
    %c0_i32_1 = arith.constant 0 : i32
    return %c0_i32, %c0_i32_0 : i32, i32
  }
  func.func @transform_3(%arg0: i32) -> (i32, i32) {
    %c0_i32 = arith.constant 0 : i32
    %c0_i32_0 = arith.constant 0 : i32
    return %arg0, %c0_i32 : i32, i32
  }
}

module attributes {stable_mosaic.version = 11 : i64} {
  func.func @_linear_kernel(%arg0: i32, %arg1: i32, %arg2: memref<32x48xf32, #tpu.memory_space<vmem>>, %arg3: memref<48x32xf32, #tpu.memory_space<vmem>>, %arg4: memref<1x32xf32, #tpu.memory_space<vmem>>, %arg5: memref<32x32xf32, #tpu.memory_space<vmem>>) attributes {dimension_semantics = [#tpu.dimension_semantics<parallel>, #tpu.dimension_semantics<parallel>], iteration_bounds = array<i64: 1, 1>, scalar_prefetch = 0 : i64, scratch_operands = 0 : i64, tpu.core_type = #tpu.core_type<tc>, window_params = [{transform_indices = @transform_0, window_bounds = array<i64: 32, 48>}, {transform_indices = @transform_1, window_bounds = array<i64: 48, 32>}, {transform_indices = @transform_2, window_bounds = array<i64: 1, 32>}, {transform_indices = @transform_3, window_bounds = array<i64: 32, 32>}]} {
    %c0 = arith.constant 0 : index
    %c0_0 = arith.constant 0 : index
    %0 = vector.load %arg2[%c0, %c0_0] : memref<32x48xf32, #tpu.memory_space<vmem>>, vector<32x48xf32>
    %1 = arith.truncf %0 : vector<32x48xf32> to vector<32x48xbf16>
    %c0_1 = arith.constant 0 : index
    %c0_2 = arith.constant 0 : index
    %2 = vector.load %arg3[%c0_1, %c0_2] : memref<48x32xf32, #tpu.memory_space<vmem>>, vector<48x32xf32>
    %3 = arith.truncf %2 : vector<48x32xf32> to vector<48x32xbf16>
    %cst = arith.constant dense<0.000000e+00> : vector<32x32xf32>
    %4 = tpu.matmul %1, %3, %cst {dimension_numbers = #tpu.dot_dimension_numbers<[1], [0], [0], [1], [0, 0, 1, 1], [], []>} : vector<32x48xbf16>, vector<48x32xbf16>, vector<32x32xf32> -> vector<32x32xf32>
    %c0_3 = arith.constant 0 : index
    %c0_4 = arith.constant 0 : index
    %5 = vector.load %arg4[%c0_3, %c0_4] : memref<1x32xf32, #tpu.memory_space<vmem>>, vector<1x32xf32>
    %6 = vector.broadcast %5 : vector<1x32xf32> to vector<32x32xf32>
    %7 = arith.addf %4, %6 : vector<32x32xf32>
    %c0_5 = arith.constant 0 : index
    %c0_6 = arith.constant 0 : index
    %8 = vector.load %arg5[%c0_5, %c0_6] : memref<32x32xf32, #tpu.memory_space<vmem>>, vector<32x32xf32>
    tpu.vector_store %arg5[%c0_5, %c0_6], %7 {strides = array<i32>} : memref<32x32xf32, #tpu.memory_space<vmem>>, vector<32x32xf32>,
    return
  }
  func.func @transform_0(%arg0: i32, %arg1: i32) -> (i32, i32) {
    %c0_i32 = arith.constant 0 : i32
    %c0_i32_0 = arith.constant 0 : i32
    return %arg0, %c0_i32 : i32, i32
  }
  func.func @transform_1(%arg0: i32, %arg1: i32) -> (i32, i32) {
    %c0_i32 = arith.constant 0 : i32
    %c0_i32_0 = arith.constant 0 : i32
    return %c0_i32, %arg1 : i32, i32
  }
  func.func @transform_2(%arg0: i32, %arg1: i32) -> (i32, i32) {
    %c0_i32 = arith.constant 0 : i32
    %c0_i32_0 = arith.constant 0 : i32
    return %c0_i32, %arg1 : i32, i32
  }
  func.func @transform_3(%arg0: i32, %arg1: i32) -> (i32, i32) {
    %c0_i32 = arith.constant 0 : i32
    return %arg0, %arg1 : i32, i32
  }
}

module attributes {stable_mosaic.version = 11 : i64} {
  func.func @_linear_kernel(%arg0: i32, %arg1: i32, %arg2: memref<34x32xf32, #tpu.memory_space<vmem>>, %arg3: memref<32x96xf32, #tpu.memory_space<vmem>>, %arg4: memref<1x96xf32, #tpu.memory_space<vmem>>, %arg5: memref<1x32xf32, #tpu.memory_space<vmem>>, %arg6: memref<1x32xf32, #tpu.memory_space<vmem>>, %arg7: memref<34x96xf32, #tpu.memory_space<vmem>>) attributes {dimension_semantics = [#tpu.dimension_semantics<parallel>, #tpu.dimension_semantics<parallel>], iteration_bounds = array<i64: 1, 1>, scalar_prefetch = 0 : i64, scratch_operands = 0 : i64, tpu.core_type = #tpu.core_type<tc>, window_params = [{transform_indices = @transform_0, window_bounds = array<i64: 34, 32>}, {transform_indices = @transform_1, window_bounds = array<i64: 32, 96>}, {transform_indices = @transform_2, window_bounds = array<i64: 1, 96>}, {pipeline_mode = #tpu.pipeline_mode<synchronous>, transform_indices = @transform_3, window_bounds = array<i64: 1, 32>}, {pipeline_mode = #tpu.pipeline_mode<synchronous>, transform_indices = @transform_4, window_bounds = array<i64: 1, 32>}, {transform_indices = @transform_5, window_bounds = array<i64: 34, 96>}]} {
    %c0 = arith.constant 0 : index
    %c0_0 = arith.constant 0 : index
    %0 = vector.load %arg2[%c0, %c0_0] : memref<34x32xf32, #tpu.memory_space<vmem>>, vector<34x32xf32>
    %cst = arith.constant dense<0.000000e+00> : vector<34xf32>
    %1 = vector.multi_reduction <add>, %0, %cst [1] : vector<34x32xf32> to vector<34xf32>
    %2 = vector.shape_cast %1 : vector<34xf32> to vector<34x1xf32>
    %cst_1 = arith.constant 3.200000e+01 : f32
    %3 = vector.broadcast %cst_1 : f32 to vector<34x1xf32>
    %4 = arith.divf %2, %3 : vector<34x1xf32>
    %5 = vector.broadcast %4 : vector<34x1xf32> to vector<34x32xf32>
    %6 = arith.subf %0, %5 : vector<34x32xf32>
    %7 = arith.mulf %6, %6 : vector<34x32xf32>
    %cst_2 = arith.constant dense<0.000000e+00> : vector<34xf32>
    %8 = vector.multi_reduction <add>, %7, %cst_2 [1] : vector<34x32xf32> to vector<34xf32>
    %9 = vector.shape_cast %8 : vector<34xf32> to vector<34x1xf32>
    %cst_3 = arith.constant 3.200000e+01 : f32
    %10 = vector.broadcast %cst_3 : f32 to vector<34x1xf32>
    %11 = arith.divf %9, %10 : vector<34x1xf32>
    %12 = vector.broadcast %4 : vector<34x1xf32> to vector<34x32xf32>
    %13 = arith.subf %0, %12 : vector<34x32xf32>
    %cst_4 = arith.constant 9.99999974E-6 : f32
    %14 = vector.broadcast %cst_4 : f32 to vector<34x1xf32>
    %15 = arith.addf %11, %14 : vector<34x1xf32>
    %16 = math.rsqrt %15 : vector<34x1xf32>
    %17 = vector.broadcast %16 : vector<34x1xf32> to vector<34x32xf32>
    %18 = arith.mulf %13, %17 : vector<34x32xf32>
    %c0_5 = arith.constant 0 : index
    %c0_6 = arith.constant 0 : index
    %19 = vector.load %arg5[%c0_5, %c0_6] : memref<1x32xf32, #tpu.memory_space<vmem>>, vector<1x32xf32>
    %20 = vector.broadcast %19 : vector<1x32xf32> to vector<34x32xf32>
    %21 = arith.mulf %18, %20 : vector<34x32xf32>
    %c0_7 = arith.constant 0 : index
    %c0_8 = arith.constant 0 : index
    %22 = vector.load %arg6[%c0_7, %c0_8] : memref<1x32xf32, #tpu.memory_space<vmem>>, vector<1x32xf32>
    %23 = vector.broadcast %22 : vector<1x32xf32> to vector<34x32xf32>
    %24 = arith.addf %21, %23 : vector<34x32xf32>
    %25 = arith.truncf %24 : vector<34x32xf32> to vector<34x32xbf16>
    %c0_9 = arith.constant 0 : index
    %c0_10 = arith.constant 0 : index
    %26 = vector.load %arg3[%c0_9, %c0_10] : memref<32x96xf32, #tpu.memory_space<vmem>>, vector<32x96xf32>
    %27 = arith.truncf %26 : vector<32x96xf32> to vector<32x96xbf16>
    %cst_11 = arith.constant dense<0.000000e+00> : vector<34x96xf32>
    %28 = tpu.matmul %25, %27, %cst_11 {dimension_numbers = #tpu.dot_dimension_numbers<[1], [0], [0], [1], [0, 0, 1, 1], [], []>} : vector<34x32xbf16>, vector<32x96xbf16>, vector<34x96xf32> -> vector<34x96xf32>
    %c0_12 = arith.constant 0 : index
    %c0_13 = arith.constant 0 : index
    %29 = vector.load %arg4[%c0_12, %c0_13] : memref<1x96xf32, #tpu.memory_space<vmem>>, vector<1x96xf32>
    %30 = vector.broadcast %29 : vector<1x96xf32> to vector<34x96xf32>
    %31 = arith.addf %28, %30 : vector<34x96xf32>
    %c0_14 = arith.constant 0 : index
    %c0_15 = arith.constant 0 : index
    %32 = vector.load %arg7[%c0_14, %c0_15] : memref<34x96xf32, #tpu.memory_space<vmem>>, vector<34x96xf32>
    tpu.vector_store %arg7[%c0_14, %c0_15], %31 {strides = array<i32>} : memref<34x96xf32, #tpu.memory_space<vmem>>, vector<34x96xf32>,
    return
  }
  func.func @transform_0(%arg0: i32, %arg1: i32) -> (i32, i32) {
    %c0_i32 = arith.constant 0 : i32
    %c0_i32_0 = arith.constant 0 : i32
    return %arg0, %c0_i32 : i32, i32
  }
  func.func @transform_1(%arg0: i32, %arg1: i32) -> (i32, i32) {
    %c0_i32 = arith.constant 0 : i32
    %c0_i32_0 = arith.constant 0 : i32
    return %c0_i32, %arg1 : i32, i32
  }
  func.func @transform_2(%arg0: i32, %arg1: i32) -> (i32, i32) {
    %c0_i32 = arith.constant 0 : i32
    %c0_i32_0 = arith.constant 0 : i32
    return %c0_i32, %arg1 : i32, i32
  }
  func.func @transform_3(%arg0: i32, %arg1: i32) -> (i32, i32) {
    %c0_i32 = arith.constant 0 : i32
    %c0_i32_0 = arith.constant 0 : i32
    %c0_i32_1 = arith.constant 0 : i32
    return %c0_i32, %c0_i32_0 : i32, i32
  }
  func.func @transform_4(%arg0: i32, %arg1: i32) -> (i32, i32) {
    %c0_i32 = arith.constant 0 : i32
    %c0_i32_0 = arith.constant 0 : i32
    %c0_i32_1 = arith.constant 0 : i32
    return %c0_i32, %c0_i32_0 : i32, i32
  }
  func.func @transform_5(%arg0: i32, %arg1: i32) -> (i32, i32) {
    %c0_i32 = arith.constant 0 : i32
    return %arg0, %arg1 : i32, i32
  }
}

module attributes {stable_mosaic.version = 11 : i64} {
  func.func @_attention_kernel(%arg0: i32, %arg1: memref<1x17x96xf32, #tpu.memory_space<vmem>>, %arg2: memref<1x17x32xf32, #tpu.memory_space<vmem>>) attributes {dimension_semantics = [#tpu.dimension_semantics<parallel>], iteration_bounds = array<i64: 2>, scalar_prefetch = 0 : i64, scratch_operands = 0 : i64, tpu.core_type = #tpu.core_type<tc>, window_params = [{transform_indices = @transform_0, window_bounds = array<i64: 1, 17, 96>}, {transform_indices = @transform_1, window_bounds = array<i64: 1, 17, 32>}]} {
    %c0 = arith.constant 0 : index
    %c0_0 = arith.constant 0 : index
    %c0_1 = arith.constant 0 : index
    %0 = vector.load %arg1[%c0, %c0_0, %c0_1] : memref<1x17x96xf32, #tpu.memory_space<vmem>>, vector<1x17x96xf32>
    %1 = vector.shape_cast %0 : vector<1x17x96xf32> to vector<17x96xf32>
    %2 = vector.extract_strided_slice %1 {offsets = [0, 0], sizes = [17, 8], strides = [1, 1]} : vector<17x96xf32> to vector<17x8xf32>
    %3 = vector.extract_strided_slice %1 {offsets = [0, 32], sizes = [17, 8], strides = [1, 1]} : vector<17x96xf32> to vector<17x8xf32>
    %4 = vector.extract_strided_slice %1 {offsets = [0, 64], sizes = [17, 8], strides = [1, 1]} : vector<17x96xf32> to vector<17x8xf32>
    %cst = arith.constant 0.353553385 : f32
    %5 = vector.broadcast %cst : f32 to vector<17x8xf32>
    %6 = arith.mulf %2, %5 : vector<17x8xf32>
    %7 = arith.truncf %6 : vector<17x8xf32> to vector<17x8xbf16>
    %8 = arith.truncf %3 : vector<17x8xf32> to vector<17x8xbf16>
    %cst_2 = arith.constant dense<0.000000e+00> : vector<17x17xf32>
    %9 = tpu.matmul %7, %8, %cst_2 {dimension_numbers = #tpu.dot_dimension_numbers<[1], [1], [0], [0], [0, 0, 1, 0], [], []>} : vector<17x8xbf16>, vector<17x8xbf16>, vector<17x17xf32> -> vector<17x17xf32>
    %cst_3 = arith.constant dense<0xFF800000> : vector<17xf32>
    %10 = vector.multi_reduction <maximumf>, %9, %cst_3 [1] : vector<17x17xf32> to vector<17xf32>
    %11 = vector.shape_cast %10 : vector<17xf32> to vector<17x1xf32>
    %12 = vector.broadcast %11 : vector<17x1xf32> to vector<17x17xf32>
    %13 = arith.subf %9, %12 : vector<17x17xf32>
    %14 = math.exp %13 : vector<17x17xf32>
    %cst_4 = arith.constant dense<0.000000e+00> : vector<17xf32>
    %15 = vector.multi_reduction <add>, %14, %cst_4 [1] : vector<17x17xf32> to vector<17xf32>
    %16 = vector.shape_cast %15 : vector<17xf32> to vector<17x1xf32>
    %17 = tpu.reciprocal %16 {approx = true} : vector<17x1xf32> -> vector<17x1xf32>
    %18 = vector.broadcast %17 : vector<17x1xf32> to vector<17x17xf32>
    %19 = arith.mulf %14, %18 : vector<17x17xf32>
    %20 = arith.truncf %19 : vector<17x17xf32> to vector<17x17xbf16>
    %21 = arith.truncf %4 : vector<17x8xf32> to vector<17x8xbf16>
    %cst_5 = arith.constant dense<0.000000e+00> : vector<17x8xf32>
    %22 = tpu.matmul %20, %21, %cst_5 {dimension_numbers = #tpu.dot_dimension_numbers<[1], [0], [0], [1], [0, 0, 1, 1], [], []>} : vector<17x17xbf16>, vector<17x8xbf16>, vector<17x8xf32> -> vector<17x8xf32>
    %23 = vector.extract_strided_slice %1 {offsets = [0, 8], sizes = [17, 8], strides = [1, 1]} : vector<17x96xf32> to vector<17x8xf32>
    %24 = vector.extract_strided_slice %1 {offsets = [0, 40], sizes = [17, 8], strides = [1, 1]} : vector<17x96xf32> to vector<17x8xf32>
    %25 = vector.extract_strided_slice %1 {offsets = [0, 72], sizes = [17, 8], strides = [1, 1]} : vector<17x96xf32> to vector<17x8xf32>
    %cst_6 = arith.constant 0.353553385 : f32
    %26 = vector.broadcast %cst_6 : f32 to vector<17x8xf32>
    %27 = arith.mulf %23, %26 : vector<17x8xf32>
    %28 = arith.truncf %27 : vector<17x8xf32> to vector<17x8xbf16>
    %29 = arith.truncf %24 : vector<17x8xf32> to vector<17x8xbf16>
    %cst_7 = arith.constant dense<0.000000e+00> : vector<17x17xf32>
    %30 = tpu.matmul %28, %29, %cst_7 {dimension_numbers = #tpu.dot_dimension_numbers<[1], [1], [0], [0], [0, 0, 1, 0], [], []>} : vector<17x8xbf16>, vector<17x8xbf16>, vector<17x17xf32> -> vector<17x17xf32>
    %cst_8 = arith.constant dense<0xFF800000> : vector<17xf32>
    %31 = vector.multi_reduction <maximumf>, %30, %cst_8 [1] : vector<17x17xf32> to vector<17xf32>
    %32 = vector.shape_cast %31 : vector<17xf32> to vector<17x1xf32>
    %33 = vector.broadcast %32 : vector<17x1xf32> to vector<17x17xf32>
    %34 = arith.subf %30, %33 : vector<17x17xf32>
    %35 = math.exp %34 : vector<17x17xf32>
    %cst_9 = arith.constant dense<0.000000e+00> : vector<17xf32>
    %36 = vector.multi_reduction <add>, %35, %cst_9 [1] : vector<17x17xf32> to vector<17xf32>
    %37 = vector.shape_cast %36 : vector<17xf32> to vector<17x1xf32>
    %38 = tpu.reciprocal %37 {approx = true} : vector<17x1xf32> -> vector<17x1xf32>
    %39 = vector.broadcast %38 : vector<17x1xf32> to vector<17x17xf32>
    %40 = arith.mulf %35, %39 : vector<17x17xf32>
    %41 = arith.truncf %40 : vector<17x17xf32> to vector<17x17xbf16>
    %42 = arith.truncf %25 : vector<17x8xf32> to vector<17x8xbf16>
    %cst_10 = arith.constant dense<0.000000e+00> : vector<17x8xf32>
    %43 = tpu.matmul %41, %42, %cst_10 {dimension_numbers = #tpu.dot_dimension_numbers<[1], [0], [0], [1], [0, 0, 1, 1], [], []>} : vector<17x17xbf16>, vector<17x8xbf16>, vector<17x8xf32> -> vector<17x8xf32>
    %44 = vector.extract_strided_slice %1 {offsets = [0, 16], sizes = [17, 8], strides = [1, 1]} : vector<17x96xf32> to vector<17x8xf32>
    %45 = vector.extract_strided_slice %1 {offsets = [0, 48], sizes = [17, 8], strides = [1, 1]} : vector<17x96xf32> to vector<17x8xf32>
    %46 = vector.extract_strided_slice %1 {offsets = [0, 80], sizes = [17, 8], strides = [1, 1]} : vector<17x96xf32> to vector<17x8xf32>
    %cst_11 = arith.constant 0.353553385 : f32
    %47 = vector.broadcast %cst_11 : f32 to vector<17x8xf32>
    %48 = arith.mulf %44, %47 : vector<17x8xf32>
    %49 = arith.truncf %48 : vector<17x8xf32> to vector<17x8xbf16>
    %50 = arith.truncf %45 : vector<17x8xf32> to vector<17x8xbf16>
    %cst_12 = arith.constant dense<0.000000e+00> : vector<17x17xf32>
    %51 = tpu.matmul %49, %50, %cst_12 {dimension_numbers = #tpu.dot_dimension_numbers<[1], [1], [0], [0], [0, 0, 1, 0], [], []>} : vector<17x8xbf16>, vector<17x8xbf16>, vector<17x17xf32> -> vector<17x17xf32>
    %cst_13 = arith.constant dense<0xFF800000> : vector<17xf32>
    %52 = vector.multi_reduction <maximumf>, %51, %cst_13 [1] : vector<17x17xf32> to vector<17xf32>
    %53 = vector.shape_cast %52 : vector<17xf32> to vector<17x1xf32>
    %54 = vector.broadcast %53 : vector<17x1xf32> to vector<17x17xf32>
    %55 = arith.subf %51, %54 : vector<17x17xf32>
    %56 = math.exp %55 : vector<17x17xf32>
    %cst_14 = arith.constant dense<0.000000e+00> : vector<17xf32>
    %57 = vector.multi_reduction <add>, %56, %cst_14 [1] : vector<17x17xf32> to vector<17xf32>
    %58 = vector.shape_cast %57 : vector<17xf32> to vector<17x1xf32>
    %59 = tpu.reciprocal %58 {approx = true} : vector<17x1xf32> -> vector<17x1xf32>
    %60 = vector.broadcast %59 : vector<17x1xf32> to vector<17x17xf32>
    %61 = arith.mulf %56, %60 : vector<17x17xf32>
    %62 = arith.truncf %61 : vector<17x17xf32> to vector<17x17xbf16>
    %63 = arith.truncf %46 : vector<17x8xf32> to vector<17x8xbf16>
    %cst_15 = arith.constant dense<0.000000e+00> : vector<17x8xf32>
    %64 = tpu.matmul %62, %63, %cst_15 {dimension_numbers = #tpu.dot_dimension_numbers<[1], [0], [0], [1], [0, 0, 1, 1], [], []>} : vector<17x17xbf16>, vector<17x8xbf16>, vector<17x8xf32> -> vector<17x8xf32>
    %65 = vector.extract_strided_slice %1 {offsets = [0, 24], sizes = [17, 8], strides = [1, 1]} : vector<17x96xf32> to vector<17x8xf32>
    %66 = vector.extract_strided_slice %1 {offsets = [0, 56], sizes = [17, 8], strides = [1, 1]} : vector<17x96xf32> to vector<17x8xf32>
    %67 = vector.extract_strided_slice %1 {offsets = [0, 88], sizes = [17, 8], strides = [1, 1]} : vector<17x96xf32> to vector<17x8xf32>
    %cst_16 = arith.constant 0.353553385 : f32
    %68 = vector.broadcast %cst_16 : f32 to vector<17x8xf32>
    %69 = arith.mulf %65, %68 : vector<17x8xf32>
    %70 = arith.truncf %69 : vector<17x8xf32> to vector<17x8xbf16>
    %71 = arith.truncf %66 : vector<17x8xf32> to vector<17x8xbf16>
    %cst_17 = arith.constant dense<0.000000e+00> : vector<17x17xf32>
    %72 = tpu.matmul %70, %71, %cst_17 {dimension_numbers = #tpu.dot_dimension_numbers<[1], [1], [0], [0], [0, 0, 1, 0], [], []>} : vector<17x8xbf16>, vector<17x8xbf16>, vector<17x17xf32> -> vector<17x17xf32>
    %cst_18 = arith.constant dense<0xFF800000> : vector<17xf32>
    %73 = vector.multi_reduction <maximumf>, %72, %cst_18 [1] : vector<17x17xf32> to vector<17xf32>
    %74 = vector.shape_cast %73 : vector<17xf32> to vector<17x1xf32>
    %75 = vector.broadcast %74 : vector<17x1xf32> to vector<17x17xf32>
    %76 = arith.subf %72, %75 : vector<17x17xf32>
    %77 = math.exp %76 : vector<17x17xf32>
    %cst_19 = arith.constant dense<0.000000e+00> : vector<17xf32>
    %78 = vector.multi_reduction <add>, %77, %cst_19 [1] : vector<17x17xf32> to vector<17xf32>
    %79 = vector.shape_cast %78 : vector<17xf32> to vector<17x1xf32>
    %80 = tpu.reciprocal %79 {approx = true} : vector<17x1xf32> -> vector<17x1xf32>
    %81 = vector.broadcast %80 : vector<17x1xf32> to vector<17x17xf32>
    %82 = arith.mulf %77, %81 : vector<17x17xf32>
    %83 = arith.truncf %82 : vector<17x17xf32> to vector<17x17xbf16>
    %84 = arith.truncf %67 : vector<17x8xf32> to vector<17x8xbf16>
    %cst_20 = arith.constant dense<0.000000e+00> : vector<17x8xf32>
    %85 = tpu.matmul %83, %84, %cst_20 {dimension_numbers = #tpu.dot_dimension_numbers<[1], [0], [0], [1], [0, 0, 1, 1], [], []>} : vector<17x17xbf16>, vector<17x8xbf16>, vector<17x8xf32> -> vector<17x8xf32>
    %86 = tpu.concatenate %22, %43, %64, %85 in 1 : vector<17x8xf32>, vector<17x8xf32>, vector<17x8xf32>, vector<17x8xf32> -> vector<17x32xf32>
    %c0_21 = arith.constant 0 : index
    %c0_22 = arith.constant 0 : index
    %c0_23 = arith.constant 0 : index
    %87 = vector.load %arg2[%c0_21, %c0_22, %c0_23] : memref<1x17x32xf32, #tpu.memory_space<vmem>>, vector<1x17x32xf32>
    %88 = vector.shape_cast %87 : vector<1x17x32xf32> to vector<17x32xf32>
    %89 = vector.shape_cast %86 : vector<17x32xf32> to vector<1x17x32xf32>
    tpu.vector_store %arg2[%c0_21, %c0_22, %c0_23], %89 {strides = array<i32>} : memref<1x17x32xf32, #tpu.memory_space<vmem>>, vector<1x17x32xf32>,
    return
  }
  func.func @transform_0(%arg0: i32) -> (i32, i32, i32) {
    %c0_i32 = arith.constant 0 : i32
    %c0_i32_0 = arith.constant 0 : i32
    %c0_i32_1 = arith.constant 0 : i32
    return %arg0, %c0_i32, %c0_i32_0 : i32, i32, i32
  }
  func.func @transform_1(%arg0: i32) -> (i32, i32, i32) {
    %c0_i32 = arith.constant 0 : i32
    %c0_i32_0 = arith.constant 0 : i32
    %c0_i32_1 = arith.constant 0 : i32
    return %arg0, %c0_i32, %c0_i32_0 : i32, i32, i32
  }
}

module attributes {stable_mosaic.version = 11 : i64} {
  func.func @_linear_kernel(%arg0: i32, %arg1: i32, %arg2: memref<34x32xf32, #tpu.memory_space<vmem>>, %arg3: memref<32x32xf32, #tpu.memory_space<vmem>>, %arg4: memref<1x32xf32, #tpu.memory_space<vmem>>, %arg5: memref<34x32xf32, #tpu.memory_space<vmem>>, %arg6: memref<34x32xf32, #tpu.memory_space<vmem>>) attributes {dimension_semantics = [#tpu.dimension_semantics<parallel>, #tpu.dimension_semantics<parallel>], iteration_bounds = array<i64: 1, 1>, scalar_prefetch = 0 : i64, scratch_operands = 0 : i64, tpu.core_type = #tpu.core_type<tc>, window_params = [{transform_indices = @transform_0, window_bounds = array<i64: 34, 32>}, {transform_indices = @transform_1, window_bounds = array<i64: 32, 32>}, {transform_indices = @transform_2, window_bounds = array<i64: 1, 32>}, {transform_indices = @transform_3, window_bounds = array<i64: 34, 32>}, {transform_indices = @transform_4, window_bounds = array<i64: 34, 32>}]} {
    %c0 = arith.constant 0 : index
    %c0_0 = arith.constant 0 : index
    %0 = vector.load %arg2[%c0, %c0_0] : memref<34x32xf32, #tpu.memory_space<vmem>>, vector<34x32xf32>
    %1 = arith.truncf %0 : vector<34x32xf32> to vector<34x32xbf16>
    %c0_1 = arith.constant 0 : index
    %c0_2 = arith.constant 0 : index
    %2 = vector.load %arg3[%c0_1, %c0_2] : memref<32x32xf32, #tpu.memory_space<vmem>>, vector<32x32xf32>
    %3 = arith.truncf %2 : vector<32x32xf32> to vector<32x32xbf16>
    %cst = arith.constant dense<0.000000e+00> : vector<34x32xf32>
    %4 = tpu.matmul %1, %3, %cst {dimension_numbers = #tpu.dot_dimension_numbers<[1], [0], [0], [1], [0, 0, 1, 1], [], []>} : vector<34x32xbf16>, vector<32x32xbf16>, vector<34x32xf32> -> vector<34x32xf32>
    %c0_3 = arith.constant 0 : index
    %c0_4 = arith.constant 0 : index
    %5 = vector.load %arg4[%c0_3, %c0_4] : memref<1x32xf32, #tpu.memory_space<vmem>>, vector<1x32xf32>
    %6 = vector.broadcast %5 : vector<1x32xf32> to vector<34x32xf32>
    %7 = arith.addf %4, %6 : vector<34x32xf32>
    %c0_5 = arith.constant 0 : index
    %c0_6 = arith.constant 0 : index
    %8 = vector.load %arg5[%c0_5, %c0_6] : memref<34x32xf32, #tpu.memory_space<vmem>>, vector<34x32xf32>
    %9 = arith.addf %7, %8 : vector<34x32xf32>
    %c0_7 = arith.constant 0 : index
    %c0_8 = arith.constant 0 : index
    %10 = vector.load %arg6[%c0_7, %c0_8] : memref<34x32xf32, #tpu.memory_space<vmem>>, vector<34x32xf32>
    tpu.vector_store %arg6[%c0_7, %c0_8], %9 {strides = array<i32>} : memref<34x32xf32, #tpu.memory_space<vmem>>, vector<34x32xf32>,
    return
  }
  func.func @transform_0(%arg0: i32, %arg1: i32) -> (i32, i32) {
    %c0_i32 = arith.constant 0 : i32
    %c0_i32_0 = arith.constant 0 : i32
    return %arg0, %c0_i32 : i32, i32
  }
  func.func @transform_1(%arg0: i32, %arg1: i32) -> (i32, i32) {
    %c0_i32 = arith.constant 0 : i32
    %c0_i32_0 = arith.constant 0 : i32
    return %c0_i32, %arg1 : i32, i32
  }
  func.func @transform_2(%arg0: i32, %arg1: i32) -> (i32, i32) {
    %c0_i32 = arith.constant 0 : i32
    %c0_i32_0 = arith.constant 0 : i32
    return %c0_i32, %arg1 : i32, i32
  }
  func.func @transform_3(%arg0: i32, %arg1: i32) -> (i32, i32) {
    %c0_i32 = arith.constant 0 : i32
    return %arg0, %arg1 : i32, i32
  }
  func.func @transform_4(%arg0: i32, %arg1: i32) -> (i32, i32) {
    %c0_i32 = arith.constant 0 : i32
    return %arg0, %arg1 : i32, i32
  }
}

module attributes {stable_mosaic.version = 11 : i64} {
  func.func @_mlp_kernel(%arg0: i32, %arg1: i32, %arg2: memref<34x32xf32, #tpu.memory_space<vmem>>, %arg3: memref<1x32xf32, #tpu.memory_space<vmem>>, %arg4: memref<1x32xf32, #tpu.memory_space<vmem>>, %arg5: memref<32x128xf32, #tpu.memory_space<vmem>>, %arg6: memref<1x128xf32, #tpu.memory_space<vmem>>, %arg7: memref<128x32xf32, #tpu.memory_space<vmem>>, %arg8: memref<1x32xf32, #tpu.memory_space<vmem>>, %arg9: memref<34x32xf32, #tpu.memory_space<vmem>>, %arg10: memref<34x32xbf16, #tpu.memory_space<vmem>>, %arg11: memref<34x32xf32, #tpu.memory_space<vmem>>) attributes {dimension_semantics = [#tpu.dimension_semantics<parallel>, #tpu.dimension_semantics<arbitrary>], iteration_bounds = array<i64: 1, 1>, scalar_prefetch = 0 : i64, scratch_operands = 2 : i64, tpu.core_type = #tpu.core_type<tc>, window_params = [{transform_indices = @transform_0, window_bounds = array<i64: 34, 32>}, {pipeline_mode = #tpu.pipeline_mode<synchronous>, transform_indices = @transform_1, window_bounds = array<i64: 1, 32>}, {pipeline_mode = #tpu.pipeline_mode<synchronous>, transform_indices = @transform_2, window_bounds = array<i64: 1, 32>}, {transform_indices = @transform_3, window_bounds = array<i64: 32, 128>}, {transform_indices = @transform_4, window_bounds = array<i64: 1, 128>}, {transform_indices = @transform_5, window_bounds = array<i64: 128, 32>}, {pipeline_mode = #tpu.pipeline_mode<synchronous>, transform_indices = @transform_6, window_bounds = array<i64: 1, 32>}, {transform_indices = @transform_7, window_bounds = array<i64: 34, 32>}]} {
    %c0_i32 = arith.constant 0 : i32
    %0 = arith.cmpi eq, %arg1, %c0_i32 : i32
    %1 = arith.extui %0 : i1 to i32
    %c0_i32_0 = arith.constant 0 : i32
    %2 = arith.cmpi ne, %1, %c0_i32_0 : i32
    scf.if %2 {
      %c0_17 = arith.constant 0 : index
      %c0_18 = arith.constant 0 : index
      %28 = vector.load %arg2[%c0_17, %c0_18] : memref<34x32xf32, #tpu.memory_space<vmem>>, vector<34x32xf32>
      %cst_19 = arith.constant dense<0.000000e+00> : vector<34xf32>
      %29 = vector.multi_reduction <add>, %28, %cst_19 [1] : vector<34x32xf32> to vector<34xf32>
      %30 = vector.shape_cast %29 : vector<34xf32> to vector<34x1xf32>
      %cst_20 = arith.constant 3.200000e+01 : f32
      %31 = vector.broadcast %cst_20 : f32 to vector<34x1xf32>
      %32 = arith.divf %30, %31 : vector<34x1xf32>
      %33 = vector.broadcast %32 : vector<34x1xf32> to vector<34x32xf32>
      %34 = arith.subf %28, %33 : vector<34x32xf32>
      %35 = arith.mulf %34, %34 : vector<34x32xf32>
      %cst_21 = arith.constant dense<0.000000e+00> : vector<34xf32>
      %36 = vector.multi_reduction <add>, %35, %cst_21 [1] : vector<34x32xf32> to vector<34xf32>
      %37 = vector.shape_cast %36 : vector<34xf32> to vector<34x1xf32>
      %cst_22 = arith.constant 3.200000e+01 : f32
      %38 = vector.broadcast %cst_22 : f32 to vector<34x1xf32>
      %39 = arith.divf %37, %38 : vector<34x1xf32>
      %40 = vector.broadcast %32 : vector<34x1xf32> to vector<34x32xf32>
      %41 = arith.subf %28, %40 : vector<34x32xf32>
      %cst_23 = arith.constant 9.99999974E-6 : f32
      %42 = vector.broadcast %cst_23 : f32 to vector<34x1xf32>
      %43 = arith.addf %39, %42 : vector<34x1xf32>
      %44 = math.rsqrt %43 : vector<34x1xf32>
      %45 = vector.broadcast %44 : vector<34x1xf32> to vector<34x32xf32>
      %46 = arith.mulf %41, %45 : vector<34x32xf32>
      %c0_24 = arith.constant 0 : index
      %c0_25 = arith.constant 0 : index
      %47 = vector.load %arg3[%c0_24, %c0_25] : memref<1x32xf32, #tpu.memory_space<vmem>>, vector<1x32xf32>
      %48 = vector.broadcast %47 : vector<1x32xf32> to vector<34x32xf32>
      %49 = arith.mulf %46, %48 : vector<34x32xf32>
      %c0_26 = arith.constant 0 : index
      %c0_27 = arith.constant 0 : index
      %50 = vector.load %arg4[%c0_26, %c0_27] : memref<1x32xf32, #tpu.memory_space<vmem>>, vector<1x32xf32>
      %51 = vector.broadcast %50 : vector<1x32xf32> to vector<34x32xf32>
      %52 = arith.addf %49, %51 : vector<34x32xf32>
      %53 = arith.truncf %52 : vector<34x32xf32> to vector<34x32xbf16>
      %c0_28 = arith.constant 0 : index
      %c0_29 = arith.constant 0 : index
      %54 = vector.load %arg10[%c0_28, %c0_29] : memref<34x32xbf16, #tpu.memory_space<vmem>>, vector<34x32xbf16>
      tpu.vector_store %arg10[%c0_28, %c0_29], %53 {strides = array<i32>} : memref<34x32xbf16, #tpu.memory_space<vmem>>, vector<34x32xbf16>,
      %cst_30 = arith.constant 0.000000e+00 : f32
      %55 = vector.broadcast %cst_30 : f32 to vector<34x32xf32>
      %c0_31 = arith.constant 0 : index
      %c0_32 = arith.constant 0 : index
      %56 = vector.load %arg11[%c0_31, %c0_32] : memref<34x32xf32, #tpu.memory_space<vmem>>, vector<34x32xf32>
      tpu.vector_store %arg11[%c0_31, %c0_32], %55 {strides = array<i32>} : memref<34x32xf32, #tpu.memory_space<vmem>>, vector<34x32xf32>,
    } else {
    }
    %c0 = arith.constant 0 : index
    %c0_1 = arith.constant 0 : index
    %3 = vector.load %arg10[%c0, %c0_1] : memref<34x32xbf16, #tpu.memory_space<vmem>>, vector<34x32xbf16>
    %c0_2 = arith.constant 0 : index
    %c0_3 = arith.constant 0 : index
    %4 = vector.load %arg5[%c0_2, %c0_3] : memref<32x128xf32, #tpu.memory_space<vmem>>, vector<32x128xf32>
    %5 = arith.truncf %4 : vector<32x128xf32> to vector<32x128xbf16>
    %cst = arith.constant dense<0.000000e+00> : vector<34x128xf32>
    %6 = tpu.matmul %3, %5, %cst {dimension_numbers = #tpu.dot_dimension_numbers<[1], [0], [0], [1], [0, 0, 1, 1], [], []>} : vector<34x32xbf16>, vector<32x128xbf16>, vector<34x128xf32> -> vector<34x128xf32>
    %c0_4 = arith.constant 0 : index
    %c0_5 = arith.constant 0 : index
    %7 = vector.load %arg6[%c0_4, %c0_5] : memref<1x128xf32, #tpu.memory_space<vmem>>, vector<1x128xf32>
    %8 = vector.broadcast %7 : vector<1x128xf32> to vector<34x128xf32>
    %9 = arith.addf %6, %8 : vector<34x128xf32>
    %cst_6 = arith.constant 1.702000e+00 : f32
    %10 = vector.broadcast %cst_6 : f32 to vector<34x128xf32>
    %11 = arith.mulf %10, %9 : vector<34x128xf32>
    %12 = arith.negf %11 : vector<34x128xf32>
    %13 = math.exp %12 : vector<34x128xf32>
    %cst_7 = arith.constant 1.000000e+00 : f32
    %14 = vector.broadcast %cst_7 : f32 to vector<34x128xf32>
    %15 = arith.addf %14, %13 : vector<34x128xf32>
    %16 = arith.divf %14, %15 : vector<34x128xf32>
    %17 = arith.mulf %9, %16 : vector<34x128xf32>
    %c0_8 = arith.constant 0 : index
    %c0_9 = arith.constant 0 : index
    %18 = vector.load %arg11[%c0_8, %c0_9] : memref<34x32xf32, #tpu.memory_space<vmem>>, vector<34x32xf32>
    %19 = arith.truncf %17 : vector<34x128xf32> to vector<34x128xbf16>
    %c0_10 = arith.constant 0 : index
    %c0_11 = arith.constant 0 : index
    %20 = vector.load %arg7[%c0_10, %c0_11] : memref<128x32xf32, #tpu.memory_space<vmem>>, vector<128x32xf32>
    %21 = arith.truncf %20 : vector<128x32xf32> to vector<128x32xbf16>
    %cst_12 = arith.constant dense<0.000000e+00> : vector<34x32xf32>
    %22 = tpu.matmul %19, %21, %cst_12 {dimension_numbers = #tpu.dot_dimension_numbers<[1], [0], [0], [1], [0, 0, 1, 1], [], []>} : vector<34x128xbf16>, vector<128x32xbf16>, vector<34x32xf32> -> vector<34x32xf32>
    %23 = arith.addf %18, %22 : vector<34x32xf32>
    %c0_13 = arith.constant 0 : index
    %c0_14 = arith.constant 0 : index
    %24 = vector.load %arg11[%c0_13, %c0_14] : memref<34x32xf32, #tpu.memory_space<vmem>>, vector<34x32xf32>
    tpu.vector_store %arg11[%c0_13, %c0_14], %23 {strides = array<i32>} : memref<34x32xf32, #tpu.memory_space<vmem>>, vector<34x32xf32>,
    %c0_i32_15 = arith.constant 0 : i32
    %25 = arith.cmpi eq, %arg1, %c0_i32_15 : i32
    %26 = arith.extui %25 : i1 to i32
    %c0_i32_16 = arith.constant 0 : i32
    %27 = arith.cmpi ne, %26, %c0_i32_16 : i32
    scf.if %27 {
      %c0_17 = arith.constant 0 : index
      %c0_18 = arith.constant 0 : index
      %28 = vector.load %arg11[%c0_17, %c0_18] : memref<34x32xf32, #tpu.memory_space<vmem>>, vector<34x32xf32>
      %c0_19 = arith.constant 0 : index
      %c0_20 = arith.constant 0 : index
      %29 = vector.load %arg8[%c0_19, %c0_20] : memref<1x32xf32, #tpu.memory_space<vmem>>, vector<1x32xf32>
      %30 = vector.broadcast %29 : vector<1x32xf32> to vector<34x32xf32>
      %31 = arith.addf %28, %30 : vector<34x32xf32>
      %c0_21 = arith.constant 0 : index
      %c0_22 = arith.constant 0 : index
      %32 = vector.load %arg2[%c0_21, %c0_22] : memref<34x32xf32, #tpu.memory_space<vmem>>, vector<34x32xf32>
      %33 = arith.addf %31, %32 : vector<34x32xf32>
      %c0_23 = arith.constant 0 : index
      %c0_24 = arith.constant 0 : index
      %34 = vector.load %arg9[%c0_23, %c0_24] : memref<34x32xf32, #tpu.memory_space<vmem>>, vector<34x32xf32>
      tpu.vector_store %arg9[%c0_23, %c0_24], %33 {strides = array<i32>} : memref<34x32xf32, #tpu.memory_space<vmem>>, vector<34x32xf32>,
    } else {
    }
    return
  }
  func.func @transform_0(%arg0: i32, %arg1: i32) -> (i32, i32) {
    %c0_i32 = arith.constant 0 : i32
    %c0_i32_0 = arith.constant 0 : i32
    return %arg0, %c0_i32 : i32, i32
  }
  func.func @transform_1(%arg0: i32, %arg1: i32) -> (i32, i32) {
    %c0_i32 = arith.constant 0 : i32
    %c0_i32_0 = arith.constant 0 : i32
    %c0_i32_1 = arith.constant 0 : i32
    return %c0_i32, %c0_i32_0 : i32, i32
  }
  func.func @transform_2(%arg0: i32, %arg1: i32) -> (i32, i32) {
    %c0_i32 = arith.constant 0 : i32
    %c0_i32_0 = arith.constant 0 : i32
    %c0_i32_1 = arith.constant 0 : i32
    return %c0_i32, %c0_i32_0 : i32, i32
  }
  func.func @transform_3(%arg0: i32, %arg1: i32) -> (i32, i32) {
    %c0_i32 = arith.constant 0 : i32
    %c0_i32_0 = arith.constant 0 : i32
    return %c0_i32, %arg1 : i32, i32
  }
  func.func @transform_4(%arg0: i32, %arg1: i32) -> (i32, i32) {
    %c0_i32 = arith.constant 0 : i32
    %c0_i32_0 = arith.constant 0 : i32
    return %c0_i32, %arg1 : i32, i32
  }
  func.func @transform_5(%arg0: i32, %arg1: i32) -> (i32, i32) {
    %c0_i32 = arith.constant 0 : i32
    %c0_i32_0 = arith.constant 0 : i32
    return %arg1, %c0_i32 : i32, i32
  }
  func.func @transform_6(%arg0: i32, %arg1: i32) -> (i32, i32) {
    %c0_i32 = arith.constant 0 : i32
    %c0_i32_0 = arith.constant 0 : i32
    %c0_i32_1 = arith.constant 0 : i32
    return %c0_i32, %c0_i32_0 : i32, i32
  }
  func.func @transform_7(%arg0: i32, %arg1: i32) -> (i32, i32) {
    %c0_i32 = arith.constant 0 : i32
    %c0_i32_0 = arith.constant 0 : i32
    return %arg0, %c0_i32 : i32, i32
  }
}

module attributes {stable_mosaic.version = 11 : i64} {
  func.func @_layernorm_kernel(%arg0: i32, %arg1: memref<2x32xf32, #tpu.memory_space<vmem>>, %arg2: memref<1x32xf32, #tpu.memory_space<vmem>>, %arg3: memref<1x32xf32, #tpu.memory_space<vmem>>, %arg4: memref<2x32xf32, #tpu.memory_space<vmem>>) attributes {dimension_semantics = [#tpu.dimension_semantics<parallel>], iteration_bounds = array<i64: 1>, scalar_prefetch = 0 : i64, scratch_operands = 0 : i64, tpu.core_type = #tpu.core_type<tc>, window_params = [{transform_indices = @transform_0, window_bounds = array<i64: 2, 32>}, {pipeline_mode = #tpu.pipeline_mode<synchronous>, transform_indices = @transform_1, window_bounds = array<i64: 1, 32>}, {pipeline_mode = #tpu.pipeline_mode<synchronous>, transform_indices = @transform_2, window_bounds = array<i64: 1, 32>}, {transform_indices = @transform_3, window_bounds = array<i64: 2, 32>}]} {
    %c0 = arith.constant 0 : index
    %c0_0 = arith.constant 0 : index
    %0 = vector.load %arg1[%c0, %c0_0] : memref<2x32xf32, #tpu.memory_space<vmem>>, vector<2x32xf32>
    %cst = arith.constant dense<0.000000e+00> : vector<2xf32>
    %1 = vector.multi_reduction <add>, %0, %cst [1] : vector<2x32xf32> to vector<2xf32>
    %2 = vector.shape_cast %1 : vector<2xf32> to vector<2x1xf32>
    %cst_1 = arith.constant 3.200000e+01 : f32
    %3 = vector.broadcast %cst_1 : f32 to vector<2x1xf32>
    %4 = arith.divf %2, %3 : vector<2x1xf32>
    %5 = vector.broadcast %4 : vector<2x1xf32> to vector<2x32xf32>
    %6 = arith.subf %0, %5 : vector<2x32xf32>
    %7 = arith.mulf %6, %6 : vector<2x32xf32>
    %cst_2 = arith.constant dense<0.000000e+00> : vector<2xf32>
    %8 = vector.multi_reduction <add>, %7, %cst_2 [1] : vector<2x32xf32> to vector<2xf32>
    %9 = vector.shape_cast %8 : vector<2xf32> to vector<2x1xf32>
    %cst_3 = arith.constant 3.200000e+01 : f32
    %10 = vector.broadcast %cst_3 : f32 to vector<2x1xf32>
    %11 = arith.divf %9, %10 : vector<2x1xf32>
    %12 = vector.broadcast %4 : vector<2x1xf32> to vector<2x32xf32>
    %13 = arith.subf %0, %12 : vector<2x32xf32>
    %cst_4 = arith.constant 9.99999974E-6 : f32
    %14 = vector.broadcast %cst_4 : f32 to vector<2x1xf32>
    %15 = arith.addf %11, %14 : vector<2x1xf32>
    %16 = math.rsqrt %15 : vector<2x1xf32>
    %17 = vector.broadcast %16 : vector<2x1xf32> to vector<2x32xf32>
    %18 = arith.mulf %13, %17 : vector<2x32xf32>
    %c0_5 = arith.constant 0 : index
    %c0_6 = arith.constant 0 : index
    %19 = vector.load %arg2[%c0_5, %c0_6] : memref<1x32xf32, #tpu.memory_space<vmem>>, vector<1x32xf32>
    %20 = vector.broadcast %19 : vector<1x32xf32> to vector<2x32xf32>
    %21 = arith.mulf %18, %20 : vector<2x32xf32>
    %c0_7 = arith.constant 0 : index
    %c0_8 = arith.constant 0 : index
    %22 = vector.load %arg3[%c0_7, %c0_8] : memref<1x32xf32, #tpu.memory_space<vmem>>, vector<1x32xf32>
    %23 = vector.broadcast %22 : vector<1x32xf32> to vector<2x32xf32>
    %24 = arith.addf %21, %23 : vector<2x32xf32>
    %c0_9 = arith.constant 0 : index
    %c0_10 = arith.constant 0 : index
    %25 = vector.load %arg4[%c0_9, %c0_10] : memref<2x32xf32, #tpu.memory_space<vmem>>, vector<2x32xf32>
    tpu.vector_store %arg4[%c0_9, %c0_10], %24 {strides = array<i32>} : memref<2x32xf32, #tpu.memory_space<vmem>>, vector<2x32xf32>,
    return
  }
  func.func @transform_0(%arg0: i32) -> (i32, i32) {
    %c0_i32 = arith.constant 0 : i32
    %c0_i32_0 = arith.constant 0 : i32
    return %arg0, %c0_i32 : i32, i32
  }
  func.func @transform_1(%arg0: i32) -> (i32, i32) {
    %c0_i32 = arith.constant 0 : i32
    %c0_i32_0 = arith.constant 0 : i32
    %c0_i32_1 = arith.constant 0 : i32
    return %c0_i32, %c0_i32_0 : i32, i32
  }
  func.func @transform_2(%arg0: i32) -> (i32, i32) {
    %c0_i32 = arith.constant 0 : i32
    %c0_i32_0 = arith.constant 0 : i32
    %c0_i32_1 = arith.constant 0 : i32
    return %c0_i32, %c0_i32_0 : i32, i32
  }
  func.func @transform_3(%arg0: i32) -> (i32, i32) {
    %c0_i32 = arith.constant 0 : i32
    %c0_i32_0 = arith.constant 0 : i32
    return %arg0, %c0_i32 : i32, i32
  }
}

module attributes {stable_mosaic.version = 11 : i64} {
  func.func @_attention_kernel(%arg0: i32, %arg1: memref<1x17x96xf32, #tpu.memory_space<vmem>>, %arg2: memref<1x17x32xf32, #tpu.memory_space<vmem>>, %arg3: memref<1x17x17xf32, #tpu.memory_space<vmem>>) attributes {dimension_semantics = [#tpu.dimension_semantics<parallel>], iteration_bounds = array<i64: 2>, scalar_prefetch = 0 : i64, scratch_operands = 0 : i64, tpu.core_type = #tpu.core_type<tc>, window_params = [{transform_indices = @transform_0, window_bounds = array<i64: 1, 17, 96>}, {transform_indices = @transform_1, window_bounds = array<i64: 1, 17, 32>}, {transform_indices = @transform_2, window_bounds = array<i64: 1, 17, 17>}]} {
    %c0 = arith.constant 0 : index
    %c0_0 = arith.constant 0 : index
    %c0_1 = arith.constant 0 : index
    %0 = vector.load %arg1[%c0, %c0_0, %c0_1] : memref<1x17x96xf32, #tpu.memory_space<vmem>>, vector<1x17x96xf32>
    %1 = vector.shape_cast %0 : vector<1x17x96xf32> to vector<17x96xf32>
    %2 = vector.extract_strided_slice %1 {offsets = [0, 0], sizes = [17, 8], strides = [1, 1]} : vector<17x96xf32> to vector<17x8xf32>
    %3 = vector.extract_strided_slice %1 {offsets = [0, 32], sizes = [17, 8], strides = [1, 1]} : vector<17x96xf32> to vector<17x8xf32>
    %4 = vector.extract_strided_slice %1 {offsets = [0, 64], sizes = [17, 8], strides = [1, 1]} : vector<17x96xf32> to vector<17x8xf32>
    %cst = arith.constant 0.353553385 : f32
    %5 = vector.broadcast %cst : f32 to vector<17x8xf32>
    %6 = arith.mulf %2, %5 : vector<17x8xf32>
    %7 = arith.truncf %6 : vector<17x8xf32> to vector<17x8xbf16>
    %8 = arith.truncf %3 : vector<17x8xf32> to vector<17x8xbf16>
    %cst_2 = arith.constant dense<0.000000e+00> : vector<17x17xf32>
    %9 = tpu.matmul %7, %8, %cst_2 {dimension_numbers = #tpu.dot_dimension_numbers<[1], [1], [0], [0], [0, 0, 1, 0], [], []>} : vector<17x8xbf16>, vector<17x8xbf16>, vector<17x17xf32> -> vector<17x17xf32>
    %cst_3 = arith.constant dense<0xFF800000> : vector<17xf32>
    %10 = vector.multi_reduction <maximumf>, %9, %cst_3 [1] : vector<17x17xf32> to vector<17xf32>
    %11 = vector.shape_cast %10 : vector<17xf32> to vector<17x1xf32>
    %12 = vector.broadcast %11 : vector<17x1xf32> to vector<17x17xf32>
    %13 = arith.subf %9, %12 : vector<17x17xf32>
    %14 = math.exp %13 : vector<17x17xf32>
    %cst_4 = arith.constant dense<0.000000e+00> : vector<17xf32>
    %15 = vector.multi_reduction <add>, %14, %cst_4 [1] : vector<17x17xf32> to vector<17xf32>
    %16 = vector.shape_cast %15 : vector<17xf32> to vector<17x1xf32>
    %17 = tpu.reciprocal %16 {approx = true} : vector<17x1xf32> -> vector<17x1xf32>
    %18 = vector.broadcast %17 : vector<17x1xf32> to vector<17x17xf32>
    %19 = arith.mulf %14, %18 : vector<17x17xf32>
    %20 = arith.truncf %19 : vector<17x17xf32> to vector<17x17xbf16>
    %21 = arith.truncf %4 : vector<17x8xf32> to vector<17x8xbf16>
    %cst_5 = arith.constant dense<0.000000e+00> : vector<17x8xf32>
    %22 = tpu.matmul %20, %21, %cst_5 {dimension_numbers = #tpu.dot_dimension_numbers<[1], [0], [0], [1], [0, 0, 1, 1], [], []>} : vector<17x17xbf16>, vector<17x8xbf16>, vector<17x8xf32> -> vector<17x8xf32>
    %23 = vector.extract_strided_slice %1 {offsets = [0, 8], sizes = [17, 8], strides = [1, 1]} : vector<17x96xf32> to vector<17x8xf32>
    %24 = vector.extract_strided_slice %1 {offsets = [0, 40], sizes = [17, 8], strides = [1, 1]} : vector<17x96xf32> to vector<17x8xf32>
    %25 = vector.extract_strided_slice %1 {offsets = [0, 72], sizes = [17, 8], strides = [1, 1]} : vector<17x96xf32> to vector<17x8xf32>
    %cst_6 = arith.constant 0.353553385 : f32
    %26 = vector.broadcast %cst_6 : f32 to vector<17x8xf32>
    %27 = arith.mulf %23, %26 : vector<17x8xf32>
    %28 = arith.truncf %27 : vector<17x8xf32> to vector<17x8xbf16>
    %29 = arith.truncf %24 : vector<17x8xf32> to vector<17x8xbf16>
    %cst_7 = arith.constant dense<0.000000e+00> : vector<17x17xf32>
    %30 = tpu.matmul %28, %29, %cst_7 {dimension_numbers = #tpu.dot_dimension_numbers<[1], [1], [0], [0], [0, 0, 1, 0], [], []>} : vector<17x8xbf16>, vector<17x8xbf16>, vector<17x17xf32> -> vector<17x17xf32>
    %cst_8 = arith.constant dense<0xFF800000> : vector<17xf32>
    %31 = vector.multi_reduction <maximumf>, %30, %cst_8 [1] : vector<17x17xf32> to vector<17xf32>
    %32 = vector.shape_cast %31 : vector<17xf32> to vector<17x1xf32>
    %33 = vector.broadcast %32 : vector<17x1xf32> to vector<17x17xf32>
    %34 = arith.subf %30, %33 : vector<17x17xf32>
    %35 = math.exp %34 : vector<17x17xf32>
    %cst_9 = arith.constant dense<0.000000e+00> : vector<17xf32>
    %36 = vector.multi_reduction <add>, %35, %cst_9 [1] : vector<17x17xf32> to vector<17xf32>
    %37 = vector.shape_cast %36 : vector<17xf32> to vector<17x1xf32>
    %38 = tpu.reciprocal %37 {approx = true} : vector<17x1xf32> -> vector<17x1xf32>
    %39 = vector.broadcast %38 : vector<17x1xf32> to vector<17x17xf32>
    %40 = arith.mulf %35, %39 : vector<17x17xf32>
    %41 = arith.truncf %40 : vector<17x17xf32> to vector<17x17xbf16>
    %42 = arith.truncf %25 : vector<17x8xf32> to vector<17x8xbf16>
    %cst_10 = arith.constant dense<0.000000e+00> : vector<17x8xf32>
    %43 = tpu.matmul %41, %42, %cst_10 {dimension_numbers = #tpu.dot_dimension_numbers<[1], [0], [0], [1], [0, 0, 1, 1], [], []>} : vector<17x17xbf16>, vector<17x8xbf16>, vector<17x8xf32> -> vector<17x8xf32>
    %44 = arith.addf %19, %40 : vector<17x17xf32>
    %45 = vector.extract_strided_slice %1 {offsets = [0, 16], sizes = [17, 8], strides = [1, 1]} : vector<17x96xf32> to vector<17x8xf32>
    %46 = vector.extract_strided_slice %1 {offsets = [0, 48], sizes = [17, 8], strides = [1, 1]} : vector<17x96xf32> to vector<17x8xf32>
    %47 = vector.extract_strided_slice %1 {offsets = [0, 80], sizes = [17, 8], strides = [1, 1]} : vector<17x96xf32> to vector<17x8xf32>
    %cst_11 = arith.constant 0.353553385 : f32
    %48 = vector.broadcast %cst_11 : f32 to vector<17x8xf32>
    %49 = arith.mulf %45, %48 : vector<17x8xf32>
    %50 = arith.truncf %49 : vector<17x8xf32> to vector<17x8xbf16>
    %51 = arith.truncf %46 : vector<17x8xf32> to vector<17x8xbf16>
    %cst_12 = arith.constant dense<0.000000e+00> : vector<17x17xf32>
    %52 = tpu.matmul %50, %51, %cst_12 {dimension_numbers = #tpu.dot_dimension_numbers<[1], [1], [0], [0], [0, 0, 1, 0], [], []>} : vector<17x8xbf16>, vector<17x8xbf16>, vector<17x17xf32> -> vector<17x17xf32>
    %cst_13 = arith.constant dense<0xFF800000> : vector<17xf32>
    %53 = vector.multi_reduction <maximumf>, %52, %cst_13 [1] : vector<17x17xf32> to vector<17xf32>
    %54 = vector.shape_cast %53 : vector<17xf32> to vector<17x1xf32>
    %55 = vector.broadcast %54 : vector<17x1xf32> to vector<17x17xf32>
    %56 = arith.subf %52, %55 : vector<17x17xf32>
    %57 = math.exp %56 : vector<17x17xf32>
    %cst_14 = arith.constant dense<0.000000e+00> : vector<17xf32>
    %58 = vector.multi_reduction <add>, %57, %cst_14 [1] : vector<17x17xf32> to vector<17xf32>
    %59 = vector.shape_cast %58 : vector<17xf32> to vector<17x1xf32>
    %60 = tpu.reciprocal %59 {approx = true} : vector<17x1xf32> -> vector<17x1xf32>
    %61 = vector.broadcast %60 : vector<17x1xf32> to vector<17x17xf32>
    %62 = arith.mulf %57, %61 : vector<17x17xf32>
    %63 = arith.truncf %62 : vector<17x17xf32> to vector<17x17xbf16>
    %64 = arith.truncf %47 : vector<17x8xf32> to vector<17x8xbf16>
    %cst_15 = arith.constant dense<0.000000e+00> : vector<17x8xf32>
    %65 = tpu.matmul %63, %64, %cst_15 {dimension_numbers = #tpu.dot_dimension_numbers<[1], [0], [0], [1], [0, 0, 1, 1], [], []>} : vector<17x17xbf16>, vector<17x8xbf16>, vector<17x8xf32> -> vector<17x8xf32>
    %66 = arith.addf %44, %62 : vector<17x17xf32>
    %67 = vector.extract_strided_slice %1 {offsets = [0, 24], sizes = [17, 8], strides = [1, 1]} : vector<17x96xf32> to vector<17x8xf32>
    %68 = vector.extract_strided_slice %1 {offsets = [0, 56], sizes = [17, 8], strides = [1, 1]} : vector<17x96xf32> to vector<17x8xf32>
    %69 = vector.extract_strided_slice %1 {offsets = [0, 88], sizes = [17, 8], strides = [1, 1]} : vector<17x96xf32> to vector<17x8xf32>
    %cst_16 = arith.constant 0.353553385 : f32
    %70 = vector.broadcast %cst_16 : f32 to vector<17x8xf32>
    %71 = arith.mulf %67, %70 : vector<17x8xf32>
    %72 = arith.truncf %71 : vector<17x8xf32> to vector<17x8xbf16>
    %73 = arith.truncf %68 : vector<17x8xf32> to vector<17x8xbf16>
    %cst_17 = arith.constant dense<0.000000e+00> : vector<17x17xf32>
    %74 = tpu.matmul %72, %73, %cst_17 {dimension_numbers = #tpu.dot_dimension_numbers<[1], [1], [0], [0], [0, 0, 1, 0], [], []>} : vector<17x8xbf16>, vector<17x8xbf16>, vector<17x17xf32> -> vector<17x17xf32>
    %cst_18 = arith.constant dense<0xFF800000> : vector<17xf32>
    %75 = vector.multi_reduction <maximumf>, %74, %cst_18 [1] : vector<17x17xf32> to vector<17xf32>
    %76 = vector.shape_cast %75 : vector<17xf32> to vector<17x1xf32>
    %77 = vector.broadcast %76 : vector<17x1xf32> to vector<17x17xf32>
    %78 = arith.subf %74, %77 : vector<17x17xf32>
    %79 = math.exp %78 : vector<17x17xf32>
    %cst_19 = arith.constant dense<0.000000e+00> : vector<17xf32>
    %80 = vector.multi_reduction <add>, %79, %cst_19 [1] : vector<17x17xf32> to vector<17xf32>
    %81 = vector.shape_cast %80 : vector<17xf32> to vector<17x1xf32>
    %82 = tpu.reciprocal %81 {approx = true} : vector<17x1xf32> -> vector<17x1xf32>
    %83 = vector.broadcast %82 : vector<17x1xf32> to vector<17x17xf32>
    %84 = arith.mulf %79, %83 : vector<17x17xf32>
    %85 = arith.truncf %84 : vector<17x17xf32> to vector<17x17xbf16>
    %86 = arith.truncf %69 : vector<17x8xf32> to vector<17x8xbf16>
    %cst_20 = arith.constant dense<0.000000e+00> : vector<17x8xf32>
    %87 = tpu.matmul %85, %86, %cst_20 {dimension_numbers = #tpu.dot_dimension_numbers<[1], [0], [0], [1], [0, 0, 1, 1], [], []>} : vector<17x17xbf16>, vector<17x8xbf16>, vector<17x8xf32> -> vector<17x8xf32>
    %88 = arith.addf %66, %84 : vector<17x17xf32>
    %89 = tpu.concatenate %22, %43, %65, %87 in 1 : vector<17x8xf32>, vector<17x8xf32>, vector<17x8xf32>, vector<17x8xf32> -> vector<17x32xf32>
    %c0_21 = arith.constant 0 : index
    %c0_22 = arith.constant 0 : index
    %c0_23 = arith.constant 0 : index
    %90 = vector.load %arg2[%c0_21, %c0_22, %c0_23] : memref<1x17x32xf32, #tpu.memory_space<vmem>>, vector<1x17x32xf32>
    %91 = vector.shape_cast %90 : vector<1x17x32xf32> to vector<17x32xf32>
    %92 = vector.shape_cast %89 : vector<17x32xf32> to vector<1x17x32xf32>
    tpu.vector_store %arg2[%c0_21, %c0_22, %c0_23], %92 {strides = array<i32>} : memref<1x17x32xf32, #tpu.memory_space<vmem>>, vector<1x17x32xf32>,
    %cst_24 = arith.constant 2.500000e-01 : f32
    %93 = vector.broadcast %cst_24 : f32 to vector<17x17xf32>
    %94 = arith.mulf %88, %93 : vector<17x17xf32>
    %c0_25 = arith.constant 0 : index
    %c0_26 = arith.constant 0 : index
    %c0_27 = arith.constant 0 : index
    %95 = vector.load %arg3[%c0_25, %c0_26, %c0_27] : memref<1x17x17xf32, #tpu.memory_space<vmem>>, vector<1x17x17xf32>
    %96 = vector.shape_cast %95 : vector<1x17x17xf32> to vector<17x17xf32>
    %97 = vector.shape_cast %94 : vector<17x17xf32> to vector<1x17x17xf32>
    tpu.vector_store %arg3[%c0_25, %c0_26, %c0_27], %97 {strides = array<i32>} : memref<1x17x17xf32, #tpu.memory_space<vmem>>, vector<1x17x17xf32>,
    return
  }
  func.func @transform_0(%arg0: i32) -> (i32, i32, i32) {
    %c0_i32 = arith.constant 0 : i32
    %c0_i32_0 = arith.constant 0 : i32
    %c0_i32_1 = arith.constant 0 : i32
    return %arg0, %c0_i32, %c0_i32_0 : i32, i32, i32
  }
  func.func @transform_1(%arg0: i32) -> (i32, i32, i32) {
    %c0_i32 = arith.constant 0 : i32
    %c0_i32_0 = arith.constant 0 : i32
    %c0_i32_1 = arith.constant 0 : i32
    return %arg0, %c0_i32, %c0_i32_0 : i32, i32, i32
  }
  func.func @transform_2(%arg0: i32) -> (i32, i32, i32) {
    %c0_i32 = arith.constant 0 : i32
    %c0_i32_0 = arith.constant 0 : i32
    %c0_i32_1 = arith.constant 0 : i32
    return %arg0, %c0_i32, %c0_i32_0 : i32, i32, i32
  }
}

module attributes {stable_mosaic.version = 11 : i64} {
  func.func @_linear_kernel(%arg0: i32, %arg1: i32, %arg2: memref<2x32xf32, #tpu.memory_space<vmem>>, %arg3: memref<32x16xf32, #tpu.memory_space<vmem>>, %arg4: memref<1x16xf32, #tpu.memory_space<vmem>>, %arg5: memref<2x16xf32, #tpu.memory_space<vmem>>) attributes {dimension_semantics = [#tpu.dimension_semantics<parallel>, #tpu.dimension_semantics<parallel>], iteration_bounds = array<i64: 1, 1>, scalar_prefetch = 0 : i64, scratch_operands = 0 : i64, tpu.core_type = #tpu.core_type<tc>, window_params = [{transform_indices = @transform_0, window_bounds = array<i64: 2, 32>}, {transform_indices = @transform_1, window_bounds = array<i64: 32, 16>}, {transform_indices = @transform_2, window_bounds = array<i64: 1, 16>}, {transform_indices = @transform_3, window_bounds = array<i64: 2, 16>}]} {
    %c0 = arith.constant 0 : index
    %c0_0 = arith.constant 0 : index
    %0 = vector.load %arg2[%c0, %c0_0] : memref<2x32xf32, #tpu.memory_space<vmem>>, vector<2x32xf32>
    %1 = arith.truncf %0 : vector<2x32xf32> to vector<2x32xbf16>
    %c0_1 = arith.constant 0 : index
    %c0_2 = arith.constant 0 : index
    %2 = vector.load %arg3[%c0_1, %c0_2] : memref<32x16xf32, #tpu.memory_space<vmem>>, vector<32x16xf32>
    %3 = arith.truncf %2 : vector<32x16xf32> to vector<32x16xbf16>
    %cst = arith.constant dense<0.000000e+00> : vector<2x16xf32>
    %4 = tpu.matmul %1, %3, %cst {dimension_numbers = #tpu.dot_dimension_numbers<[1], [0], [0], [1], [0, 0, 1, 1], [], []>} : vector<2x32xbf16>, vector<32x16xbf16>, vector<2x16xf32> -> vector<2x16xf32>
    %c0_3 = arith.constant 0 : index
    %c0_4 = arith.constant 0 : index
    %5 = vector.load %arg4[%c0_3, %c0_4] : memref<1x16xf32, #tpu.memory_space<vmem>>, vector<1x16xf32>
    %6 = vector.broadcast %5 : vector<1x16xf32> to vector<2x16xf32>
    %7 = arith.addf %4, %6 : vector<2x16xf32>
    %c0_5 = arith.constant 0 : index
    %c0_6 = arith.constant 0 : index
    %8 = vector.load %arg5[%c0_5, %c0_6] : memref<2x16xf32, #tpu.memory_space<vmem>>, vector<2x16xf32>
    tpu.vector_store %arg5[%c0_5, %c0_6], %7 {strides = array<i32>} : memref<2x16xf32, #tpu.memory_space<vmem>>, vector<2x16xf32>,
    return
  }
  func.func @transform_0(%arg0: i32, %arg1: i32) -> (i32, i32) {
    %c0_i32 = arith.constant 0 : i32
    %c0_i32_0 = arith.constant 0 : i32
    return %arg0, %c0_i32 : i32, i32
  }
  func.func @transform_1(%arg0: i32, %arg1: i32) -> (i32, i32) {
    %c0_i32 = arith.constant 0 : i32
    %c0_i32_0 = arith.constant 0 : i32
    return %c0_i32, %arg1 : i32, i32
  }
  func.func @transform_2(%arg0: i32, %arg1: i32) -> (i32, i32) {
    %c0_i32 = arith.constant 0 : i32
    %c0_i32_0 = arith.constant 0 : i32
    return %c0_i32, %arg1 : i32, i32
  }
  func.func @transform_3(%arg0: i32, %arg1: i32) -> (i32, i32) {
    %c0_i32 = arith.constant 0 : i32
    return %arg0, %arg1 : i32, i32
  }
}

</mosaic_0001>

<llo_original>
// kernel: vision_transformer.14
$region0: #{vision_transformer.14}
  #allocation0 [shape = 'u32[]', space=smem, size = 0x4, offset = 0x4, fixed_abs, tag = 'smem constant byte address 0x4 - core index']
  #allocation1 [shape = 'u32[144,128]{1,0:T(1,128)}', space=vmem, size = 0x12000, scoped, tag = 'internal scratch']
  %s0 = inlined_call_operand.vmem [shape: f32[34,32], index: 0, kind: input, shape index: {}]
  %s1 = inlined_call_operand.vmem [shape: f32[32,96], index: 1, kind: input, shape index: {}]
  %s2 = inlined_call_operand.vmem [shape: f32[1,96], index: 2, kind: input, shape index: {}]
  %s3 = inlined_call_operand.vmem [shape: f32[1,32], index: 3, kind: input, shape index: {}]
  %s4 = inlined_call_operand.vmem [shape: f32[1,32], index: 4, kind: input, shape index: {}]
  %s5 = inlined_call_operand.vmem [shape: f32[34,96], index: 5, kind: output, shape index: {}]
  %s6 = sld [smem:[#allocation0]]
  $region30: #{vision_transformer.14} parent=0
    _
  %s8 = ssub.s32 1, %s6
  %s9 = scalar_select 0, %s8, %s6
  // Predicated region
  $region2: #{vision_transformer.14} parent=0 // pred_check
    _
  $region3: #{vision_transformer.14} parent=0 // pred_check_branch
    %11 = sbr.rel (0) target = $region5
  $region4: #{vision_transformer.14} parent=0 // pred_region
    _
  $region5: #{vision_transformer.14} parent=0 // pred_fallthru
    _
  // Predicated region
  $region6: #{vision_transformer.14} parent=0 // pred_check
    _
  $region7: #{vision_transformer.14} parent=0 // pred_check_branch
    %13 = sbr.rel (0) target = $region9
  $region8: #{vision_transformer.14} parent=0 // pred_region
    _
  $region9: #{vision_transformer.14} parent=0 // pred_fallthru
    _
  // Predicated region
  $region10: #{vision_transformer.14} parent=0 // pred_check
    _
  $region11: #{vision_transformer.14} parent=0 // pred_check_branch
    %15 = sbr.rel (0) target = $region13
  $region12: #{vision_transformer.14} parent=0 // pred_region
    _
  $region13: #{vision_transformer.14} parent=0 // pred_fallthru
    _
  // Predicated region
  $region14: #{vision_transformer.14} parent=0 // pred_check
    _
  $region15: #{vision_transformer.14} parent=0 // pred_check_branch
    %17 = sbr.rel (0) target = $region17
  $region16: #{vision_transformer.14} parent=0 // pred_region
    _
  $region17: #{vision_transformer.14} parent=0 // pred_fallthru
    _
  // Predicated region
  $region18: #{vision_transformer.14} parent=0 // pred_check
    _
  $region19: #{vision_transformer.14} parent=0 // pred_check_branch
    %19 = sbr.rel (0) target = $region21
  $region20: #{vision_transformer.14} parent=0 // pred_region
    _
  $region21: #{vision_transformer.14} parent=0 // pred_fallthru
    _
  %v21 = vld [vmem:[%s0] sm:$0xff]
  %v22 = vld [vmem:[%s0 + $0x8] sm:$0xff]
  %v23 = vld [vmem:[%s0 + $0x10] sm:$0xff]
  %v24 = vld [vmem:[%s0 + $0x18] sm:$0xff]
  %v25 = vld [vmem:[%s0 + $0x20] sm:$0x3]
  %vm26 = vcmask 261120
  %v27 = vsel %vm26, %v21, 0.0
  %28 = vadd.xlane.f32.xlu0 %v27
  %v29 = vpop.xlane.xlu0 %28
  %v30 = vsel %vm26, %v22, 0.0
  %31 = vadd.xlane.f32.xlu0 %v30
  %v32 = vpop.xlane.xlu0 %31
  %v33 = vsel %vm26, %v23, 0.0
  %34 = vadd.xlane.f32.xlu0 %v33
  %v35 = vpop.xlane.xlu0 %34
  %v36 = vsel %vm26, %v24, 0.0
  %37 = vadd.xlane.f32.xlu0 %v36
  %v38 = vpop.xlane.xlu0 %37
  %vm39 = vcmask 254976
  %v40 = vsel %vm39, %v25, 0.0
  %41 = vadd.xlane.f32.xlu0 %v40
  %v42 = vpop.xlane.xlu0 %41
  %v43 = vrcp.pop 32.0
  %v44 = vmul.f32 %v29, %v43
  %v45 = vmul.f32 %v32, %v43
  %v46 = vmul.f32 %v35, %v43
  %v47 = vmul.f32 %v38, %v43
  %v48 = vmul.f32 %v42, %v43
  %v49 = vsub.f32 %v21, %v44
  %v50 = vsub.f32 %v22, %v45
  %v51 = vsub.f32 %v23, %v46
  %v52 = vsub.f32 %v24, %v47
  %v53 = vsub.f32 %v25, %v48
  %v54 = vmul.f32 %v49, %v49
  %v55 = vmul.f32 %v50, %v50
  %v56 = vmul.f32 %v51, %v51
  %v57 = vmul.f32 %v52, %v52
  %v58 = vmul.f32 %v53, %v53
  %v59 = vsel %vm26, %v54, 0.0
  %60 = vadd.xlane.f32.xlu0 %v59
  %v61 = vpop.xlane.xlu0 %60
  %v62 = vsel %vm26, %v55, 0.0
  %63 = vadd.xlane.f32.xlu0 %v62
  %v64 = vpop.xlane.xlu0 %63
  %v65 = vsel %vm26, %v56, 0.0
  %66 = vadd.xlane.f32.xlu0 %v65
  %v67 = vpop.xlane.xlu0 %66
  %v68 = vsel %vm26, %v57, 0.0
  %69 = vadd.xlane.f32.xlu0 %v68
  %v70 = vpop.xlane.xlu0 %69
  %v71 = vsel %vm39, %v58, 0.0
  %72 = vadd.xlane.f32.xlu0 %v71
  %v73 = vpop.xlane.xlu0 %72
  %v74 = vmul.f32 %v61, %v43
  %v75 = vmul.f32 %v64, %v43
  %v76 = vmul.f32 %v67, %v43
  %v77 = vmul.f32 %v70, %v43
  %v78 = vmul.f32 %v73, %v43
  %v79 = vadd.f32 %v74, 1e-05
  %v80 = vadd.f32 %v75, 1e-05
  %v81 = vadd.f32 %v76, 1e-05
  %v82 = vadd.f32 %v77, 1e-05
  %v83 = vadd.f32 %v78, 1e-05
  %v84 = vrsqrt.pop %v79
  %v85 = vrsqrt.pop %v80
  %v86 = vrsqrt.pop %v81
  %v87 = vrsqrt.pop %v82
  %v88 = vrsqrt.pop %v83
  %v89 = vmul.f32 %v49, %v84
  %v90 = vmul.f32 %v50, %v85
  %v91 = vmul.f32 %v51, %v86
  %v92 = vmul.f32 %v52, %v87
  %v93 = vmul.f32 %v53, %v88
  %v94 = vld [vmem:[%s3] sm:$0x1]
  %v96 = vlaneseq
  %v97 = vshrl.u32 %v96, 7
  %v98 = vsub.s32 0, %v97
  %v99 = vrot.slane %v94, %v98
  %v101 = vmul.f32 %v89, %v99
  %v102 = vmul.f32 %v90, %v99
  %v103 = vmul.f32 %v91, %v99
  %v104 = vmul.f32 %v92, %v99
  %v105 = vmul.f32 %v93, %v99
  %v106 = vld [vmem:[%s4] sm:$0x1]
  %v108 = vlaneseq
  %v109 = vshrl.u32 %v108, 7
  %v110 = vsub.s32 0, %v109
  %v111 = vrot.slane %v106, %v110
  %v113 = vadd.f32 %v101, %v111
  %v114 = vadd.f32 %v102, %v111
  %v115 = vadd.f32 %v103, %v111
  %v116 = vadd.f32 %v104, %v111
  %v117 = vadd.f32 %v105, %v111
  %v118 = vpack.c.bf16 %v114, %v113
  %v119 = vpack.c.bf16 %v116, %v115
  %v120 = vpack.c.bf16 %v117, %v117
  %v121 = vld [vmem:[%s1] sm:$0xff]
  %v122 = vld [vmem:[%s1 + $0x8] sm:$0xff]
  %v123 = vld [vmem:[%s1 + $0x10] sm:$0xff]
  %v124 = vld [vmem:[%s1 + $0x18] sm:$0xff]
  %v125 = vpack.c.bf16 %v122, %v121
  %v126 = vpack.c.bf16 %v124, %v123
  %v127 = vld [vmem:[%s2] sm:$0x1]
  %v129 = vlaneseq
  %v130 = vshrl.u32 %v129, 7
  %v131 = vsub.s32 0, %v130
  %v132 = vrot.slane %v127, %v131
  %v135 = vsel %vm26, %v118, 0
  %v138 = vsel %vm26, %v119, 0
  %v141 = vsel %vm26, %v120, 0
  %143 = vmatprep.subr.bf16.mxu0 0
  %144 = vmatpush1.bf16.msra.mxu0 0
  %145 = vmatprep.subr.bf16.mxu0 0
  %146 = vmatpush1.bf16.msra.mxu0 0
  %147 = vmatprep.subr.bf16.mxu0 0
  %148 = vmatpush1.bf16.msra.mxu0 0
  %149 = vmatprep.subr.bf16.mxu0 0
  %150 = vmatpush1.bf16.msra.mxu0 0
  %151 = vmatprep.subr.bf16.mxu0 0
  %152 = vmatpush1.bf16.msra.mxu0 0
  %153 = vmatprep.subr.bf16.mxu0 0
  %154 = vmatpush1.bf16.msra.mxu0 0
  %155 = vmatprep.subr.bf16.mxu0 0
  %156 = vmatpush1.bf16.msra.mxu0 %v126
  %157 = vmatprep.subr.bf16.mxu0 0
  %158 = vmatpush1.bf16.msra.mxu0 %v125
  %159 = vmatprep.subr.bf16.mxu0 0
  %160 = vmatpush2.bf16.msra.mxu0 0
  %161 = vmatprep.subr.bf16.mxu0 0
  %162 = vmatpush2.bf16.msra.mxu0 0
  %163 = vmatprep.subr.bf16.mxu0 0
  %164 = vmatpush2.bf16.msra.mxu0 0
  %165 = vmatprep.subr.bf16.mxu0 0
  %166 = vmatpush2.bf16.msra.mxu0 0
  %167 = vmatprep.subr.bf16.mxu0 0
  %168 = vmatpush2.bf16.msra.mxu0 0
  %169 = vmatprep.subr.bf16.mxu0 0
  %170 = vmatpush2.bf16.msra.mxu0 0
  %171 = vmatprep.subr.bf16.mxu0 0
  %172 = vmatpush2.bf16.msra.mxu0 0
  %173 = vmatprep.subr.bf16.mxu0 0
  %174 = vmatpush2.bf16.msra.mxu0 0
  %175 = vmatprep.mubr.bf16.mxu0 0
  %176 = vmatmul.mubr.bf16.gmra.mxu0 %v135
  %v177 = vpop.f32.mrf.mxu0
  %v178 = vadd.f32 %v132, %v177
  %v179 = vpop.f32.mrf.mxu0
  %v180 = vpop.f32.mrf.mxu0
  %v181 = vadd.f32 %v132, %v180
  %v182 = vpop.f32.mrf.mxu0
  %183 = vmatprep.mubr.bf16.mxu0 0
  %184 = vmatmul.mubr.bf16.gmra.mxu0 %v138
  %v185 = vpop.f32.mrf.mxu0
  %v186 = vadd.f32 %v132, %v185
  %v187 = vpop.f32.mrf.mxu0
  %v188 = vpop.f32.mrf.mxu0
  %v189 = vadd.f32 %v132, %v188
  %v190 = vpop.f32.mrf.mxu0
  %191 = vmatprep.mubr.bf16.mxu0 0
  %192 = vmatmul.mubr.bf16.gmra.mxu0 %v141
  %v193 = vpop.f32.mrf.mxu0
  %v194 = vadd.f32 %v132, %v193
  %v195 = vpop.f32.mrf.mxu0
  %v196 = vpop.f32.mrf.mxu0
  %v197 = vpop.f32.mrf.mxu0
  %198 = vdwg.mxu0
  %vm199 = vcmask 785408
  %200 = vst.msk [vmem:[%s5] sm:$0xff] %vm199, %v178
  %201 = vst.msk [vmem:[%s5 + $0x8] sm:$0xff] %vm199, %v181
  %202 = vst.msk [vmem:[%s5 + $0x10] sm:$0xff] %vm199, %v186
  %203 = vst.msk [vmem:[%s5 + $0x18] sm:$0xff] %vm199, %v189
  %vm204 = vcmask 779264
  %205 = vst.msk [vmem:[%s5 + $0x20] sm:$0x3] %vm204, %v194
  // Predicated region
  $region22: #{vision_transformer.14} parent=0 // pred_check
    _
  $region23: #{vision_transformer.14} parent=0 // pred_check_branch
    %207 = sbr.rel (0) target = $region25
  $region24: #{vision_transformer.14} parent=0 // pred_region
    _
  $region25: #{vision_transformer.14} parent=0 // pred_fallthru
    _
  // Predicated region
  $region26: #{vision_transformer.14} parent=0 // pred_check
    _
  $region27: #{vision_transformer.14} parent=0 // pred_check_branch
    %209 = sbr.rel (0) target = $region29
  $region28: #{vision_transformer.14} parent=0 // pred_region
    _
  $region29: #{vision_transformer.14} parent=0 // pred_fallthru
    _

// kernel: vision_transformer.13
$region0: #{vision_transformer.13}
  #allocation0 [shape = 'u32[]', space=smem, size = 0x4, offset = 0x4, fixed_abs, tag = 'smem constant byte address 0x4 - core index']
  #allocation1 [shape = 'u32[144,128]{1,0:T(1,128)}', space=vmem, size = 0x12000, scoped, tag = 'internal scratch']
  %s0 = inlined_call_operand.vmem [shape: f32[34,32], index: 0, kind: input, shape index: {}]
  %s1 = inlined_call_operand.vmem [shape: f32[1,32], index: 1, kind: input, shape index: {}]
  %s2 = inlined_call_operand.vmem [shape: f32[1,32], index: 2, kind: input, shape index: {}]
  %s3 = inlined_call_operand.vmem [shape: f32[34,32], index: 3, kind: output, shape index: {}]
  %s4 = sld [smem:[#allocation0]]
  $region22: #{vision_transformer.13} parent=0
    _
  %s6 = ssub.s32 1, %s4
  %s7 = scalar_select 0, %s6, %s4
  // Predicated region
  $region2: #{vision_transformer.13} parent=0 // pred_check
    _
  $region3: #{vision_transformer.13} parent=0 // pred_check_branch
    %9 = sbr.rel (0) target = $region5
  $region4: #{vision_transformer.13} parent=0 // pred_region
    _
  $region5: #{vision_transformer.13} parent=0 // pred_fallthru
    _
  // Predicated region
  $region6: #{vision_transformer.13} parent=0 // pred_check
    _
  $region7: #{vision_transformer.13} parent=0 // pred_check_branch
    %11 = sbr.rel (0) target = $region9
  $region8: #{vision_transformer.13} parent=0 // pred_region
    _
  $region9: #{vision_transformer.13} parent=0 // pred_fallthru
    _
  // Predicated region
  $region10: #{vision_transformer.13} parent=0 // pred_check
    _
  $region11: #{vision_transformer.13} parent=0 // pred_check_branch
    %13 = sbr.rel (0) target = $region13
  $region12: #{vision_transformer.13} parent=0 // pred_region
    _
  $region13: #{vision_transformer.13} parent=0 // pred_fallthru
    _
  %v14 = vld [vmem:[%s0] sm:$0xff]
  %v15 = vld [vmem:[%s0 + $0x8] sm:$0xff]
  %v16 = vld [vmem:[%s0 + $0x10] sm:$0xff]
  %v17 = vld [vmem:[%s0 + $0x18] sm:$0xff]
  %v18 = vld [vmem:[%s0 + $0x20] sm:$0x3]
  %vm19 = vcmask 261120
  %v20 = vsel %vm19, %v14, 0.0
  %21 = vadd.xlane.f32.xlu0 %v20
  %v22 = vpop.xlane.xlu0 %21
  %v23 = vsel %vm19, %v15, 0.0
  %24 = vadd.xlane.f32.xlu0 %v23
  %v25 = vpop.xlane.xlu0 %24
  %v26 = vsel %vm19, %v16, 0.0
  %27 = vadd.xlane.f32.xlu0 %v26
  %v28 = vpop.xlane.xlu0 %27
  %v29 = vsel %vm19, %v17, 0.0
  %30 = vadd.xlane.f32.xlu0 %v29
  %v31 = vpop.xlane.xlu0 %30
  %vm32 = vcmask 254976
  %v33 = vsel %vm32, %v18, 0.0
  %34 = vadd.xlane.f32.xlu0 %v33
  %v35 = vpop.xlane.xlu0 %34
  %v36 = vrcp.pop 32.0
  %v37 = vmul.f32 %v22, %v36
  %v38 = vmul.f32 %v25, %v36
  %v39 = vmul.f32 %v28, %v36
  %v40 = vmul.f32 %v31, %v36
  %v41 = vmul.f32 %v35, %v36
  %v42 = vsub.f32 %v14, %v37
  %v43 = vsub.f32 %v15, %v38
  %v44 = vsub.f32 %v16, %v39
  %v45 = vsub.f32 %v17, %v40
  %v46 = vsub.f32 %v18, %v41
  %v47 = vmul.f32 %v42, %v42
  %v48 = vmul.f32 %v43, %v43
  %v49 = vmul.f32 %v44, %v44
  %v50 = vmul.f32 %v45, %v45
  %v51 = vmul.f32 %v46, %v46
  %v52 = vsel %vm19, %v47, 0.0
  %53 = vadd.xlane.f32.xlu0 %v52
  %v54 = vpop.xlane.xlu0 %53
  %v55 = vsel %vm19, %v48, 0.0
  %56 = vadd.xlane.f32.xlu0 %v55
  %v57 = vpop.xlane.xlu0 %56
  %v58 = vsel %vm19, %v49, 0.0
  %59 = vadd.xlane.f32.xlu0 %v58
  %v60 = vpop.xlane.xlu0 %59
  %v61 = vsel %vm19, %v50, 0.0
  %62 = vadd.xlane.f32.xlu0 %v61
  %v63 = vpop.xlane.xlu0 %62
  %v64 = vsel %vm32, %v51, 0.0
  %65 = vadd.xlane.f32.xlu0 %v64
  %v66 = vpop.xlane.xlu0 %65
  %v67 = vmul.f32 %v54, %v36
  %v68 = vmul.f32 %v57, %v36
  %v69 = vmul.f32 %v60, %v36
  %v70 = vmul.f32 %v63, %v36
  %v71 = vmul.f32 %v66, %v36
  %v72 = vadd.f32 %v67, 1e-05
  %v73 = vadd.f32 %v68, 1e-05
  %v74 = vadd.f32 %v69, 1e-05
  %v75 = vadd.f32 %v70, 1e-05
  %v76 = vadd.f32 %v71, 1e-05
  %v77 = vrsqrt.pop %v72
  %v78 = vrsqrt.pop %v73
  %v79 = vrsqrt.pop %v74
  %v80 = vrsqrt.pop %v75
  %v81 = vrsqrt.pop %v76
  %v82 = vmul.f32 %v42, %v77
  %v83 = vmul.f32 %v43, %v78
  %v84 = vmul.f32 %v44, %v79
  %v85 = vmul.f32 %v45, %v80
  %v86 = vmul.f32 %v46, %v81
  %v87 = vld [vmem:[%s1] sm:$0x1]
  %v89 = vlaneseq
  %v90 = vshrl.u32 %v89, 7
  %v91 = vsub.s32 0, %v90
  %v92 = vrot.slane %v87, %v91
  %v94 = vmul.f32 %v82, %v92
  %v95 = vmul.f32 %v83, %v92
  %v96 = vmul.f32 %v84, %v92
  %v97 = vmul.f32 %v85, %v92
  %v98 = vmul.f32 %v86, %v92
  %v99 = vld [vmem:[%s2] sm:$0x1]
  %v101 = vlaneseq
  %v102 = vshrl.u32 %v101, 7
  %v103 = vsub.s32 0, %v102
  %v104 = vrot.slane %v99, %v103
  %v106 = vadd.f32 %v94, %v104
  %v107 = vadd.f32 %v95, %v104
  %v108 = vadd.f32 %v96, %v104
  %v109 = vadd.f32 %v97, %v104
  %v110 = vadd.f32 %v98, %v104
  %111 = vst.msk [vmem:[%s3] sm:$0xff] %vm19, %v106
  %112 = vst.msk [vmem:[%s3 + $0x8] sm:$0xff] %vm19, %v107
  %113 = vst.msk [vmem:[%s3 + $0x10] sm:$0xff] %vm19, %v108
  %114 = vst.msk [vmem:[%s3 + $0x18] sm:$0xff] %vm19, %v109
  %115 = vst.msk [vmem:[%s3 + $0x20] sm:$0x3] %vm32, %v110
  // Predicated region
  $region14: #{vision_transformer.13} parent=0 // pred_check
    _
  $region15: #{vision_transformer.13} parent=0 // pred_check_branch
    %117 = sbr.rel (0) target = $region17
  $region16: #{vision_transformer.13} parent=0 // pred_region
    _
  $region17: #{vision_transformer.13} parent=0 // pred_fallthru
    _
  // Predicated region
  $region18: #{vision_transformer.13} parent=0 // pred_check
    _
  $region19: #{vision_transformer.13} parent=0 // pred_check_branch
    %119 = sbr.rel (0) target = $region21
  $region20: #{vision_transformer.13} parent=0 // pred_region
    _
  $region21: #{vision_transformer.13} parent=0 // pred_fallthru
    _

// kernel: vision_transformer.12
$region0: #{vision_transformer.12}
  #allocation0 [shape = 'u32[]', space=smem, size = 0x4, offset = 0x4, fixed_abs, tag = 'smem constant byte address 0x4 - core index']
  #allocation1 [shape = 'u32[144,128]{1,0:T(1,128)}', space=vmem, size = 0x12000, scoped, tag = 'internal scratch']
  %s0 = inlined_call_operand.vmem [shape: f32[32,48], index: 0, kind: input, shape index: {}]
  %s1 = inlined_call_operand.vmem [shape: f32[48,32], index: 1, kind: input, shape index: {}]
  %s2 = inlined_call_operand.vmem [shape: f32[1,32], index: 2, kind: input, shape index: {}]
  %s3 = inlined_call_operand.vmem [shape: f32[32,32], index: 3, kind: output, shape index: {}]
  %s4 = sld [smem:[#allocation0]]
  $region22: #{vision_transformer.12} parent=0
    _
  %s6 = ssub.s32 1, %s4
  %s7 = scalar_select 0, %s6, %s4
  // Predicated region
  $region2: #{vision_transformer.12} parent=0 // pred_check
    _
  $region3: #{vision_transformer.12} parent=0 // pred_check_branch
    %9 = sbr.rel (0) target = $region5
  $region4: #{vision_transformer.12} parent=0 // pred_region
    _
  $region5: #{vision_transformer.12} parent=0 // pred_fallthru
    _
  // Predicated region
  $region6: #{vision_transformer.12} parent=0 // pred_check
    _
  $region7: #{vision_transformer.12} parent=0 // pred_check_branch
    %11 = sbr.rel (0) target = $region9
  $region8: #{vision_transformer.12} parent=0 // pred_region
    _
  $region9: #{vision_transformer.12} parent=0 // pred_fallthru
    _
  // Predicated region
  $region10: #{vision_transformer.12} parent=0 // pred_check
    _
  $region11: #{vision_transformer.12} parent=0 // pred_check_branch
    %13 = sbr.rel (0) target = $region13
  $region12: #{vision_transformer.12} parent=0 // pred_region
    _
  $region13: #{vision_transformer.12} parent=0 // pred_fallthru
    _
  %v15 = vld [vmem:[%s0] sm:$0xff]
  %v16 = vld [vmem:[%s0 + $0x8] sm:$0xff]
  %v17 = vld [vmem:[%s0 + $0x10] sm:$0xff]
  %v18 = vld [vmem:[%s0 + $0x18] sm:$0xff]
  %v19 = vpack.c.bf16 %v16, %v15
  %v20 = vpack.c.bf16 %v18, %v17
  %v21 = vld [vmem:[%s1] sm:$0xff]
  %v22 = vld [vmem:[%s1 + $0x8] sm:$0xff]
  %v23 = vld [vmem:[%s1 + $0x10] sm:$0xff]
  %v24 = vld [vmem:[%s1 + $0x18] sm:$0xff]
  %v25 = vld [vmem:[%s1 + $0x20] sm:$0xff]
  %v26 = vld [vmem:[%s1 + $0x28] sm:$0xff]
  %v27 = vpack.c.bf16 %v22, %v21
  %v28 = vpack.c.bf16 %v24, %v23
  %v29 = vpack.c.bf16 %v26, %v25
  %v30 = vld [vmem:[%s2] sm:$0x1]
  %v32 = vlaneseq
  %v33 = vshrl.u32 %v32, 7
  %v34 = vsub.s32 0, %v33
  %v35 = vrot.slane %v30, %v34
  %vm37 = vcmask 392192
  %v39 = vsel %vm37, %v19, 0
  %v42 = vsel %vm37, %v20, 0
  %44 = vmatprep.subr.bf16.mxu0 0
  %45 = vmatpush1.bf16.msra.mxu0 0
  %46 = vmatprep.subr.bf16.mxu0 0
  %47 = vmatpush1.bf16.msra.mxu0 0
  %48 = vmatprep.subr.bf16.mxu0 0
  %49 = vmatpush1.bf16.msra.mxu0 0
  %50 = vmatprep.subr.bf16.mxu0 0
  %51 = vmatpush1.bf16.msra.mxu0 0
  %52 = vmatprep.subr.bf16.mxu0 0
  %53 = vmatpush1.bf16.msra.mxu0 0
  %54 = vmatprep.subr.bf16.mxu0 0
  %55 = vmatpush1.bf16.msra.mxu0 %v29
  %56 = vmatprep.subr.bf16.mxu0 0
  %57 = vmatpush1.bf16.msra.mxu0 %v28
  %58 = vmatprep.subr.bf16.mxu0 0
  %59 = vmatpush1.bf16.msra.mxu0 %v27
  %60 = vmatprep.subr.bf16.mxu0 0
  %61 = vmatpush2.bf16.msra.mxu0 0
  %62 = vmatprep.subr.bf16.mxu0 0
  %63 = vmatpush2.bf16.msra.mxu0 0
  %64 = vmatprep.subr.bf16.mxu0 0
  %65 = vmatpush2.bf16.msra.mxu0 0
  %66 = vmatprep.subr.bf16.mxu0 0
  %67 = vmatpush2.bf16.msra.mxu0 0
  %68 = vmatprep.subr.bf16.mxu0 0
  %69 = vmatpush2.bf16.msra.mxu0 0
  %70 = vmatprep.subr.bf16.mxu0 0
  %71 = vmatpush2.bf16.msra.mxu0 0
  %72 = vmatprep.subr.bf16.mxu0 0
  %73 = vmatpush2.bf16.msra.mxu0 0
  %74 = vmatprep.subr.bf16.mxu0 0
  %75 = vmatpush2.bf16.msra.mxu0 0
  %76 = vmatprep.mubr.bf16.mxu0 0
  %77 = vmatmul.mubr.bf16.gmra.mxu0 %v39
  %v78 = vpop.f32.mrf.mxu0
  %v79 = vadd.f32 %v35, %v78
  %v80 = vpop.f32.mrf.mxu0
  %v81 = vpop.f32.mrf.mxu0
  %v82 = vadd.f32 %v35, %v81
  %v83 = vpop.f32.mrf.mxu0
  %84 = vmatprep.mubr.bf16.mxu0 0
  %85 = vmatmul.mubr.bf16.gmra.mxu0 %v42
  %v86 = vpop.f32.mrf.mxu0
  %v87 = vadd.f32 %v35, %v86
  %v88 = vpop.f32.mrf.mxu0
  %v89 = vpop.f32.mrf.mxu0
  %v90 = vadd.f32 %v35, %v89
  %v91 = vpop.f32.mrf.mxu0
  %92 = vdwg.mxu0
  %vm93 = vcmask 261120
  %94 = vst.msk [vmem:[%s3] sm:$0xff] %vm93, %v79
  %95 = vst.msk [vmem:[%s3 + $0x8] sm:$0xff] %vm93, %v82
  %96 = vst.msk [vmem:[%s3 + $0x10] sm:$0xff] %vm93, %v87
  %97 = vst.msk [vmem:[%s3 + $0x18] sm:$0xff] %vm93, %v90
  // Predicated region
  $region14: #{vision_transformer.12} parent=0 // pred_check
    _
  $region15: #{vision_transformer.12} parent=0 // pred_check_branch
    %99 = sbr.rel (0) target = $region17
  $region16: #{vision_transformer.12} parent=0 // pred_region
    _
  $region17: #{vision_transformer.12} parent=0 // pred_fallthru
    _
  // Predicated region
  $region18: #{vision_transformer.12} parent=0 // pred_check
    _
  $region19: #{vision_transformer.12} parent=0 // pred_check_branch
    %101 = sbr.rel (0) target = $region21
  $region20: #{vision_transformer.12} parent=0 // pred_region
    _
  $region21: #{vision_transformer.12} parent=0 // pred_fallthru
    _

// kernel: vision_transformer.15
$region0: #{vision_transformer.15}
  #allocation0 [shape = 'u32[]', space=smem, size = 0x4, offset = 0x4, fixed_abs, tag = 'smem constant byte address 0x4 - core index']
  #allocation1 [shape = 'u32[144,128]{1,0:T(1,128)}', space=vmem, size = 0x12000, scoped, tag = 'internal scratch']
  %s0 = inlined_call_operand.vmem [shape: f32[2,17,96], index: 0, kind: input, shape index: {}]
  %s1 = inlined_call_operand.vmem [shape: f32[2,17,32], index: 1, kind: output, shape index: {}]
  %s2 = sld [smem:[#allocation0]]
  $region37: #{vision_transformer.15} parent=0
    _
  %s4 = ssub.s32 1, %s2
  %s5 = scalar_select 0, %s4, %s2
  loop: start=0, step=1, limit=4
  $region2: #{vision_transformer.15} parent=0 // loop_pre_header
    _
  $region3: #{vision_transformer.15} parent=0 // loop_header
    %s7 = sphi 0, %s11
    %p8 = scmp.ge.s32.totalorder %s7, 4
    %s17 = sphi 0, %s19
    %s20 = sphi 0, %s17
    %s21 = sphi 0, %s20
    %s37 = sphi 0, %s21
    %s43 = sphi 0, %s45
    %s46 = sphi 0, %s43
    %s47 = sphi 0, %s46
    %s63 = sphi 0, %s47
  $region4: #{vision_transformer.15} parent=0 // loop_header_branch
    %10 = sbr.rel (%p8) target = $region8
  $region5: #{vision_transformer.15} parent=0 // loop_body
    %s12 = ssub.s32 %s7, 1
    %s13 = ssub.s32 %s7, 2
    %s14 = sadd.s32 %s7, 1
    %s15 = ssub.s32 %s7, %s14
    %p16 = scmp.eq.s32.totalorder %s15, 0
    %s18 = sadd.s32 %s17, 1
    %s19 = scalar_select %p16, %s17, %s18
    %p22 = pneg %p16
    %p23 = scmp.eq.s32.totalorder %s7, 1
    %p24 = por %p22, %p23
    %p25 = scmp.ne.s32.totalorder %s17, %s20
    %p26 = scmp.eq.s32.totalorder %s7, 0
    %p27 = por %p25, %p26
    %p28 = scmp.ne.s32.totalorder %s17, %s20
    %p29 = scmp.eq.s32.totalorder %s12, 1
    %p30 = por %p28, %p29
    %p31 = scmp.ne.s32.totalorder %s20, %s21
    %p32 = scmp.eq.s32.totalorder %s12, 0
    %p33 = por %p31, %p32
    %p34 = scmp.ne.s32.totalorder %s20, %s21
    %p35 = scmp.eq.s32.totalorder %s13, 1
    %p36 = por %p34, %p35
    %p38 = scmp.ne.s32.totalorder %s21, %s37
    %p39 = scmp.eq.s32.totalorder %s13, 0
    %p40 = por %p38, %p39
    %s41 = ssub.s32 %s7, %s14
    %p42 = scmp.eq.s32.totalorder %s41, 0
    %s44 = sadd.s32 %s43, 1
    %s45 = scalar_select %p42, %s43, %s44
    %p48 = pneg %p42
    %p49 = scmp.eq.s32.totalorder %s7, 1
    %p50 = por %p48, %p49
    %p51 = scmp.ne.s32.totalorder %s43, %s46
    %p52 = scmp.eq.s32.totalorder %s7, 0
    %p53 = por %p51, %p52
    %p54 = scmp.ne.s32.totalorder %s43, %s46
    %p55 = scmp.eq.s32.totalorder %s12, 1
    %p56 = por %p54, %p55
    %p57 = scmp.ne.s32.totalorder %s46, %s47
    %p58 = scmp.eq.s32.totalorder %s12, 0
    %p59 = por %p57, %p58
    %p60 = scmp.ne.s32.totalorder %s46, %s47
    %p61 = scmp.eq.s32.totalorder %s13, 1
    %p62 = por %p60, %p61
    %p64 = scmp.ne.s32.totalorder %s47, %s63
    %p65 = scmp.eq.s32.totalorder %s13, 0
    %p66 = por %p64, %p65
    %p67 = scmp.le.s32.totalorder 1, %s7
    %p68 = scmp.lt.s32.totalorder %s7, 3
    %p69 = pnand %p67, %p68
    %p70 = pneg %p69
    // Predicated region
    $region9: #{vision_transformer.15} parent=5 // pred_check
      _
    $region10: #{vision_transformer.15} parent=5 // pred_check_branch
      %72 = sbr.rel (%p69) target = $region12
    $region11: #{vision_transformer.15} parent=5 // pred_region
      %s73 = ssub.s32 %s7, 1
    $region12: #{vision_transformer.15} parent=5 // pred_fallthru
      _
    %p74 = scmp.lt.s32.totalorder %s7, 2
    // Predicated region
    $region13: #{vision_transformer.15} parent=5 // pred_check
      %p75 = pneg %p74
    $region14: #{vision_transformer.15} parent=5 // pred_check_branch
      %77 = sbr.rel (%p75) target = $region16
    $region15: #{vision_transformer.15} parent=5 // pred_region
      // Predicated region
      $region17: #{vision_transformer.15} parent=15 // pred_check
        %p78 = pneg %p27
      $region18: #{vision_transformer.15} parent=15 // pred_check_branch
        %80 = sbr.rel (%p78) target = $region20
      $region19: #{vision_transformer.15} parent=15 // pred_region
        %p81 = scmp.lt.s32.totalorder %s7, 1
        %s82 = scalar_select %p81, %s7, 1
        %s83 = smul.addr %s82, 3
        %s84 = smul.addr %s83, 8
        %s85 = scalar_lea.vmem %s0, %s84
      $region20: #{vision_transformer.15} parent=15 // pred_fallthru
        _
    $region16: #{vision_transformer.15} parent=5 // pred_fallthru
      _
    %p86 = scmp.le.s32.totalorder 1, %s7
    %p87 = scmp.lt.s32.totalorder %s7, 3
    %p88 = pnand %p86, %p87
    %p89 = pneg %p88
    // Predicated region
    $region21: #{vision_transformer.15} parent=5 // pred_check
      _
    $region22: #{vision_transformer.15} parent=5 // pred_check_branch
      %91 = sbr.rel (%p88) target = $region24
    $region23: #{vision_transformer.15} parent=5 // pred_region
      %s92 = ssub.s32 %s7, 1
      %p93 = scmp.lt.s32.totalorder %s12, 1
      %s94 = scalar_select %p93, %s12, 1
      %s95 = smul.addr %s94, 3
      %s96 = smul.addr %s95, 8
      %s97 = scalar_lea.vmem %s0, %s96
      %p98 = pneg %p33
      %p99 = pneg %p30
      %p100 = pneg %p59
      %p101 = pneg %p56
      %p102 = scmp.lt.s32.totalorder %s12, 1
      %s103 = scalar_select %p102, %s12, 1
      %s104 = smul.addr %s103, 3
      %s105 = smul.addr %s104, 8
      %s106 = scalar_lea.vmem %s1, %s105
      %p107 = scmp.lt.s32.totalorder %s12, 1
      %s108 = scalar_select %p107, %s12, 1
      %s109 = smul.addr %s108, 3
      %s110 = smul.addr %s109, 8
      %s111 = scalar_lea.vmem %s0, %s110
      %p112 = scmp.lt.s32.totalorder %s12, 1
      %s113 = scalar_select %p112, %s12, 1
      %s114 = smul.addr %s113, 3
      %s115 = smul.addr %s114, 8
      %s116 = scalar_lea.vmem %s1, %s115
      %v118 = vld [vmem:[%s111] sm:$0xff]
      %v119 = vld [vmem:[%s111 + $0x8] sm:$0xff]
      %v120 = vld [vmem:[%s111 + $0x10] sm:$0x1]
      %v121 = vmul.f32 %v118, 0.35355338
      %v122 = vmul.f32 %v119, 0.35355338
      %v123 = vmul.f32 %v120, 0.35355338
      %v124 = vpack.c.bf16 %v122, %v121
      %v125 = vpack.c.bf16 %v123, %v123
      %v126 = vpack.c.bf16 %v119, %v118
      %v127 = vpack.c.bf16 %v120, %v120
      %130 = vrot.lane.b32.xlu0 %v126, 96
      %v131 = vpop.permute.xlu0 %130
      %132 = vrot.lane.b32.xlu0 %v127, 96
      %v133 = vpop.permute.xlu0 %132
      %vm134 = vcmask 64512
      %v136 = vsel %vm134, %v124, 0
      %v139 = vsel %vm134, %v125, 0
      %v142 = vsel %vm134, %v131, 0
      %v145 = vsel %vm134, %v133, 0
      %147 = vmatprep.subr.bf16.mxu0 0
      %148 = vmatpush1.bf16.xpose.msra.mxu0 0
      %149 = vmatprep.subr.bf16.mxu0 0
      %150 = vmatpush1.bf16.xpose.msra.mxu0 0
      %151 = vmatprep.subr.bf16.mxu0 0
      %152 = vmatpush1.bf16.xpose.msra.mxu0 0
      %153 = vmatprep.subr.bf16.mxu0 0
      %154 = vmatpush1.bf16.xpose.msra.mxu0 0
      %155 = vmatprep.subr.bf16.mxu0 0
      %156 = vmatpush1.bf16.xpose.msra.mxu0 0
      %157 = vmatprep.subr.bf16.mxu0 0
      %158 = vmatpush1.bf16.xpose.msra.mxu0 0
      %159 = vmatprep.subr.bf16.mxu0 0
      %160 = vmatpush1.bf16.xpose.msra.mxu0 %v145
      %161 = vmatprep.subr.bf16.mxu0 0
      %162 = vmatpush1.bf16.xpose.msra.mxu0 %v142
      %163 = vmatprep.subr.bf16.mxu0 0
      %164 = vmatpush2.bf16.xpose.msra.mxu0 0
      %165 = vmatprep.subr.bf16.mxu0 0
      %166 = vmatpush2.bf16.xpose.msra.mxu0 0
      %167 = vmatprep.subr.bf16.mxu0 0
      %168 = vmatpush2.bf16.xpose.msra.mxu0 0
      %169 = vmatprep.subr.bf16.mxu0 0
      %170 = vmatpush2.bf16.xpose.msra.mxu0 0
      %171 = vmatprep.subr.bf16.mxu0 0
      %172 = vmatpush2.bf16.xpose.msra.mxu0 0
      %173 = vmatprep.subr.bf16.mxu0 0
      %174 = vmatpush2.bf16.xpose.msra.mxu0 0
      %175 = vmatprep.subr.bf16.mxu0 0
      %176 = vmatpush2.bf16.xpose.msra.mxu0 0
      %177 = vmatprep.subr.bf16.mxu0 0
      %178 = vmatpush2.bf16.xpose.msra.mxu0 0
      %179 = vmatprep.mubr.bf16.mxu0 0
      %180 = vmatmul.mubr.bf16.gmra.mxu0 %v136
      %v181 = vpop.f32.mrf.mxu0
      %v182 = vadd.f32 0.0, %v181
      %v183 = vpop.f32.mrf.mxu0
      %v184 = vpop.f32.mrf.mxu0
      %v185 = vadd.f32 0.0, %v184
      %v186 = vpop.f32.mrf.mxu0
      %187 = vmatprep.mubr.bf16.mxu0 0
      %188 = vmatmul.mubr.bf16.gmra.mxu0 %v139
      %v189 = vpop.f32.mrf.mxu0
      %v190 = vadd.f32 0.0, %v189
      %v191 = vpop.f32.mrf.mxu0
      %v192 = vpop.f32.mrf.mxu0
      %v193 = vpop.f32.mrf.mxu0
      %194 = vdwg.mxu0
      %vm195 = vcmask 138240
      %v196 = vsel %vm195, %v182, -inf
      %197 = vmax.xlane.f32.xlu0 %v196
      %v198 = vpop.xlane.xlu0 %197
      %v199 = vsel %vm195, %v185, -inf
      %200 = vmax.xlane.f32.xlu0 %v199
      %v201 = vpop.xlane.xlu0 %200
      %vm202 = vcmask 131072
      %v203 = vsel %vm202, %v190, -inf
      %204 = vmax.xlane.f32.xlu0 %v203
      %v205 = vpop.xlane.xlu0 %204
      %v206 = vsub.f32 %v182, %v198
      %v207 = vsub.f32 %v185, %v201
      %v208 = vsub.f32 %v190, %v205
      %v209 = vmul.f32 %v206, 1.442695
      %v210 = vpow.pop %v209
      %v211 = vmul.f32 %v207, 1.442695
      %v212 = vpow.pop %v211
      %v213 = vmul.f32 %v208, 1.442695
      %v214 = vpow.pop %v213
      %v215 = vsel %vm195, %v210, 0.0
      %216 = vadd.xlane.f32.xlu0 %v215
      %v217 = vpop.xlane.xlu0 %216
      %v218 = vsel %vm195, %v212, 0.0
      %219 = vadd.xlane.f32.xlu0 %v218
      %v220 = vpop.xlane.xlu0 %219
      %v221 = vsel %vm202, %v214, 0.0
      %222 = vadd.xlane.f32.xlu0 %v221
      %v223 = vpop.xlane.xlu0 %222
      %v224 = vrcp.pop %v217
      %v225 = vrcp.pop %v220
      %v226 = vrcp.pop %v223
      %v227 = vmul.f32 %v210, %v224
      %v228 = vmul.f32 %v212, %v225
      %v229 = vmul.f32 %v214, %v226
      %v230 = vpack.c.bf16 %v228, %v227
      %v231 = vpack.c.bf16 %v229, %v229
      %232 = vrot.lane.b32.xlu0 %v126, 64
      %v233 = vpop.permute.xlu0 %232
      %234 = vrot.lane.b32.xlu0 %v127, 64
      %v235 = vpop.permute.xlu0 %234
      %v238 = vsel %vm195, %v230, 0
      %v241 = vsel %vm195, %v231, 0
      %vm243 = vcmask 1040384
      %v244 = vsel 0, 4294967295, 65535
      %v245 = vsel %vm243, %v244, 0
      %v247 = vand.u32 %v235, %v245
      %249 = vmatprep.subr.bf16.mxu0 0
      %250 = vmatpush1.bf16.msra.mxu0 0
      %251 = vmatprep.subr.bf16.mxu0 0
      %252 = vmatpush1.bf16.msra.mxu0 0
      %253 = vmatprep.subr.bf16.mxu0 0
      %254 = vmatpush1.bf16.msra.mxu0 0
      %255 = vmatprep.subr.bf16.mxu0 0
      %256 = vmatpush1.bf16.msra.mxu0 0
      %257 = vmatprep.subr.bf16.mxu0 0
      %258 = vmatpush1.bf16.msra.mxu0 0
      %259 = vmatprep.subr.bf16.mxu0 0
      %260 = vmatpush1.bf16.msra.mxu0 0
      %261 = vmatprep.subr.bf16.mxu0 0
      %262 = vmatpush1.bf16.msra.mxu0 %v247
      %263 = vmatprep.subr.bf16.mxu0 0
      %264 = vmatpush1.bf16.msra.mxu0 %v233
      %265 = vmatprep.subr.bf16.mxu0 0
      %266 = vmatpush2.bf16.msra.mxu0 0
      %267 = vmatprep.subr.bf16.mxu0 0
      %268 = vmatpush2.bf16.msra.mxu0 0
      %269 = vmatprep.subr.bf16.mxu0 0
      %270 = vmatpush2.bf16.msra.mxu0 0
      %271 = vmatprep.subr.bf16.mxu0 0
      %272 = vmatpush2.bf16.msra.mxu0 0
      %273 = vmatprep.subr.bf16.mxu0 0
      %274 = vmatpush2.bf16.msra.mxu0 0
      %275 = vmatprep.subr.bf16.mxu0 0
      %276 = vmatpush2.bf16.msra.mxu0 0
      %277 = vmatprep.subr.bf16.mxu0 0
      %278 = vmatpush2.bf16.msra.mxu0 0
      %279 = vmatprep.subr.bf16.mxu0 0
      %280 = vmatpush2.bf16.msra.mxu0 0
      %281 = vmatprep.mubr.bf16.mxu0 0
      %282 = vmatmul.mubr.bf16.gmra.mxu0 %v238
      %v283 = vpop.f32.mrf.mxu0
      %v284 = vadd.f32 0.0, %v283
      %v285 = vpop.f32.mrf.mxu0
      %v286 = vpop.f32.mrf.mxu0
      %v287 = vadd.f32 0.0, %v286
      %v288 = vpop.f32.mrf.mxu0
      %289 = vmatprep.mubr.bf16.mxu0 0
      %290 = vmatmul.mubr.bf16.gmra.mxu0 %v241
      %v291 = vpop.f32.mrf.mxu0
      %v292 = vadd.f32 0.0, %v291
      %v293 = vpop.f32.mrf.mxu0
      %v294 = vpop.f32.mrf.mxu0
      %v295 = vpop.f32.mrf.mxu0
      %296 = vdwg.mxu0
      %299 = vrot.lane.b32.xlu0 %v124, 120
      %v300 = vpop.permute.xlu0 %299
      %301 = vrot.lane.b32.xlu0 %v125, 120
      %v302 = vpop.permute.xlu0 %301
      %303 = vrot.lane.b32.xlu0 %v126, 88
      %v304 = vpop.permute.xlu0 %303
      %305 = vrot.lane.b32.xlu0 %v127, 88
      %v306 = vpop.permute.xlu0 %305
      %v308 = vsel %vm134, %v300, 0
      %v311 = vsel %vm134, %v302, 0
      %v314 = vsel %vm134, %v304, 0
      %v317 = vsel %vm134, %v306, 0
      %319 = vmatprep.subr.bf16.mxu0 0
      %320 = vmatpush1.bf16.xpose.msra.mxu0 0
      %321 = vmatprep.subr.bf16.mxu0 0
      %322 = vmatpush1.bf16.xpose.msra.mxu0 0
      %323 = vmatprep.subr.bf16.mxu0 0
      %324 = vmatpush1.bf16.xpose.msra.mxu0 0
      %325 = vmatprep.subr.bf16.mxu0 0
      %326 = vmatpush1.bf16.xpose.msra.mxu0 0
      %327 = vmatprep.subr.bf16.mxu0 0
      %328 = vmatpush1.bf16.xpose.msra.mxu0 0
      %329 = vmatprep.subr.bf16.mxu0 0
      %330 = vmatpush1.bf16.xpose.msra.mxu0 0
      %331 = vmatprep.subr.bf16.mxu0 0
      %332 = vmatpush1.bf16.xpose.msra.mxu0 %v317
      %333 = vmatprep.subr.bf16.mxu0 0
      %334 = vmatpush1.bf16.xpose.msra.mxu0 %v314
      %335 = vmatprep.subr.bf16.mxu0 0
      %336 = vmatpush2.bf16.xpose.msra.mxu0 0
      %337 = vmatprep.subr.bf16.mxu0 0
      %338 = vmatpush2.bf16.xpose.msra.mxu0 0
      %339 = vmatprep.subr.bf16.mxu0 0
      %340 = vmatpush2.bf16.xpose.msra.mxu0 0
      %341 = vmatprep.subr.bf16.mxu0 0
      %342 = vmatpush2.bf16.xpose.msra.mxu0 0
      %343 = vmatprep.subr.bf16.mxu0 0
      %344 = vmatpush2.bf16.xpose.msra.mxu0 0
      %345 = vmatprep.subr.bf16.mxu0 0
      %346 = vmatpush2.bf16.xpose.msra.mxu0 0
      %347 = vmatprep.subr.bf16.mxu0 0
      %348 = vmatpush2.bf16.xpose.msra.mxu0 0
      %349 = vmatprep.subr.bf16.mxu0 0
      %350 = vmatpush2.bf16.xpose.msra.mxu0 0
      %351 = vmatprep.mubr.bf16.mxu0 0
      %352 = vmatmul.mubr.bf16.gmra.mxu0 %v308
      %v353 = vpop.f32.mrf.mxu0
      %v354 = vadd.f32 0.0, %v353
      %v355 = vpop.f32.mrf.mxu0
      %v356 = vpop.f32.mrf.mxu0
      %v357 = vadd.f32 0.0, %v356
      %v358 = vpop.f32.mrf.mxu0
      %359 = vmatprep.mubr.bf16.mxu0 0
      %360 = vmatmul.mubr.bf16.gmra.mxu0 %v311
      %v361 = vpop.f32.mrf.mxu0
      %v362 = vadd.f32 0.0, %v361
      %v363 = vpop.f32.mrf.mxu0
      %v364 = vpop.f32.mrf.mxu0
      %v365 = vpop.f32.mrf.mxu0
      %366 = vdwg.mxu0
      %v367 = vsel %vm195, %v354, -inf
      %368 = vmax.xlane.f32.xlu0 %v367
      %v369 = vpop.xlane.xlu0 %368
      %v370 = vsel %vm195, %v357, -inf
      %371 = vmax.xlane.f32.xlu0 %v370
      %v372 = vpop.xlane.xlu0 %371
      %v373 = vsel %vm202, %v362, -inf
      %374 = vmax.xlane.f32.xlu0 %v373
      %v375 = vpop.xlane.xlu0 %374
      %v376 = vsub.f32 %v354, %v369
      %v377 = vsub.f32 %v357, %v372
      %v378 = vsub.f32 %v362, %v375
      %v379 = vmul.f32 %v376, 1.442695
      %v380 = vpow.pop %v379
      %v381 = vmul.f32 %v377, 1.442695
      %v382 = vpow.pop %v381
      %v383 = vmul.f32 %v378, 1.442695
      %v384 = vpow.pop %v383
      %v385 = vsel %vm195, %v380, 0.0
      %386 = vadd.xlane.f32.xlu0 %v385
      %v387 = vpop.xlane.xlu0 %386
      %v388 = vsel %vm195, %v382, 0.0
      %389 = vadd.xlane.f32.xlu0 %v388
      %v390 = vpop.xlane.xlu0 %389
      %v391 = vsel %vm202, %v384, 0.0
      %392 = vadd.xlane.f32.xlu0 %v391
      %v393 = vpop.xlane.xlu0 %392
      %v394 = vrcp.pop %v387
      %v395 = vrcp.pop %v390
      %v396 = vrcp.pop %v393
      %v397 = vmul.f32 %v380, %v394
      %v398 = vmul.f32 %v382, %v395
      %v399 = vmul.f32 %v384, %v396
      %v400 = vpack.c.bf16 %v398, %v397
      %v401 = vpack.c.bf16 %v399, %v399
      %402 = vrot.lane.b32.xlu0 %v126, 56
      %v403 = vpop.permute.xlu0 %402
      %404 = vrot.lane.b32.xlu0 %v127, 56
      %v405 = vpop.permute.xlu0 %404
      %v408 = vsel %vm195, %v400, 0
      %v411 = vsel %vm195, %v401, 0
      %v414 = vand.u32 %v405, %v245
      %416 = vmatprep.subr.bf16.mxu0 0
      %417 = vmatpush1.bf16.msra.mxu0 0
      %418 = vmatprep.subr.bf16.mxu0 0
      %419 = vmatpush1.bf16.msra.mxu0 0
      %420 = vmatprep.subr.bf16.mxu0 0
      %421 = vmatpush1.bf16.msra.mxu0 0
      %422 = vmatprep.subr.bf16.mxu0 0
      %423 = vmatpush1.bf16.msra.mxu0 0
      %424 = vmatprep.subr.bf16.mxu0 0
      %425 = vmatpush1.bf16.msra.mxu0 0
      %426 = vmatprep.subr.bf16.mxu0 0
      %427 = vmatpush1.bf16.msra.mxu0 0
      %428 = vmatprep.subr.bf16.mxu0 0
      %429 = vmatpush1.bf16.msra.mxu0 %v414
      %430 = vmatprep.subr.bf16.mxu0 0
      %431 = vmatpush1.bf16.msra.mxu0 %v403
      %432 = vmatprep.subr.bf16.mxu0 0
      %433 = vmatpush2.bf16.msra.mxu0 0
      %434 = vmatprep.subr.bf16.mxu0 0
      %435 = vmatpush2.bf16.msra.mxu0 0
      %436 = vmatprep.subr.bf16.mxu0 0
      %437 = vmatpush2.bf16.msra.mxu0 0
      %438 = vmatprep.subr.bf16.mxu0 0
      %439 = vmatpush2.bf16.msra.mxu0 0
      %440 = vmatprep.subr.bf16.mxu0 0
      %441 = vmatpush2.bf16.msra.mxu0 0
      %442 = vmatprep.subr.bf16.mxu0 0
      %443 = vmatpush2.bf16.msra.mxu0 0
      %444 = vmatprep.subr.bf16.mxu0 0
      %445 = vmatpush2.bf16.msra.mxu0 0
      %446 = vmatprep.subr.bf16.mxu0 0
      %447 = vmatpush2.bf16.msra.mxu0 0
      %448 = vmatprep.mubr.bf16.mxu0 0
      %449 = vmatmul.mubr.bf16.gmra.mxu0 %v408
      %v450 = vpop.f32.mrf.mxu0
      %v451 = vadd.f32 0.0, %v450
      %v452 = vpop.f32.mrf.mxu0
      %v453 = vpop.f32.mrf.mxu0
      %v454 = vadd.f32 0.0, %v453
      %v455 = vpop.f32.mrf.mxu0
      %456 = vmatprep.mubr.bf16.mxu0 0
      %457 = vmatmul.mubr.bf16.gmra.mxu0 %v411
      %v458 = vpop.f32.mrf.mxu0
      %v459 = vadd.f32 0.0, %v458
      %v460 = vpop.f32.mrf.mxu0
      %v461 = vpop.f32.mrf.mxu0
      %v462 = vpop.f32.mrf.mxu0
      %463 = vdwg.mxu0
      %464 = vrot.lane.b32.xlu0 %v124, 112
      %v465 = vpop.permute.xlu0 %464
      %466 = vrot.lane.b32.xlu0 %v125, 112
      %v467 = vpop.permute.xlu0 %466
      %468 = vrot.lane.b32.xlu0 %v126, 80
      %v469 = vpop.permute.xlu0 %468
      %470 = vrot.lane.b32.xlu0 %v127, 80
      %v471 = vpop.permute.xlu0 %470
      %v473 = vsel %vm134, %v465, 0
      %v476 = vsel %vm134, %v467, 0
      %v479 = vsel %vm134, %v469, 0
      %v482 = vsel %vm134, %v471, 0
      %484 = vmatprep.subr.bf16.mxu0 0
      %485 = vmatpush1.bf16.xpose.msra.mxu0 0
      %486 = vmatprep.subr.bf16.mxu0 0
      %487 = vmatpush1.bf16.xpose.msra.mxu0 0
      %488 = vmatprep.subr.bf16.mxu0 0
      %489 = vmatpush1.bf16.xpose.msra.mxu0 0
      %490 = vmatprep.subr.bf16.mxu0 0
      %491 = vmatpush1.bf16.xpose.msra.mxu0 0
      %492 = vmatprep.subr.bf16.mxu0 0
      %493 = vmatpush1.bf16.xpose.msra.mxu0 0
      %494 = vmatprep.subr.bf16.mxu0 0
      %495 = vmatpush1.bf16.xpose.msra.mxu0 0
      %496 = vmatprep.subr.bf16.mxu0 0
      %497 = vmatpush1.bf16.xpose.msra.mxu0 %v482
      %498 = vmatprep.subr.bf16.mxu0 0
      %499 = vmatpush1.bf16.xpose.msra.mxu0 %v479
      %500 = vmatprep.subr.bf16.mxu0 0
      %501 = vmatpush2.bf16.xpose.msra.mxu0 0
      %502 = vmatprep.subr.bf16.mxu0 0
      %503 = vmatpush2.bf16.xpose.msra.mxu0 0
      %504 = vmatprep.subr.bf16.mxu0 0
      %505 = vmatpush2.bf16.xpose.msra.mxu0 0
      %506 = vmatprep.subr.bf16.mxu0 0
      %507 = vmatpush2.bf16.xpose.msra.mxu0 0
      %508 = vmatprep.subr.bf16.mxu0 0
      %509 = vmatpush2.bf16.xpose.msra.mxu0 0
      %510 = vmatprep.subr.bf16.mxu0 0
      %511 = vmatpush2.bf16.xpose.msra.mxu0 0
      %512 = vmatprep.subr.bf16.mxu0 0
      %513 = vmatpush2.bf16.xpose.msra.mxu0 0
      %514 = vmatprep.subr.bf16.mxu0 0
      %515 = vmatpush2.bf16.xpose.msra.mxu0 0
      %516 = vmatprep.mubr.bf16.mxu0 0
      %517 = vmatmul.mubr.bf16.gmra.mxu0 %v473
      %v518 = vpop.f32.mrf.mxu0
      %v519 = vadd.f32 0.0, %v518
      %v520 = vpop.f32.mrf.mxu0
      %v521 = vpop.f32.mrf.mxu0
      %v522 = vadd.f32 0.0, %v521
      %v523 = vpop.f32.mrf.mxu0
      %524 = vmatprep.mubr.bf16.mxu0 0
      %525 = vmatmul.mubr.bf16.gmra.mxu0 %v476
      %v526 = vpop.f32.mrf.mxu0
      %v527 = vadd.f32 0.0, %v526
      %v528 = vpop.f32.mrf.mxu0
      %v529 = vpop.f32.mrf.mxu0
      %v530 = vpop.f32.mrf.mxu0
      %531 = vdwg.mxu0
      %v532 = vsel %vm195, %v519, -inf
      %533 = vmax.xlane.f32.xlu0 %v532
      %v534 = vpop.xlane.xlu0 %533
      %v535 = vsel %vm195, %v522, -inf
      %536 = vmax.xlane.f32.xlu0 %v535
      %v537 = vpop.xlane.xlu0 %536
      %v538 = vsel %vm202, %v527, -inf
      %539 = vmax.xlane.f32.xlu0 %v538
      %v540 = vpop.xlane.xlu0 %539
      %v541 = vsub.f32 %v519, %v534
      %v542 = vsub.f32 %v522, %v537
      %v543 = vsub.f32 %v527, %v540
      %v544 = vmul.f32 %v541, 1.442695
      %v545 = vpow.pop %v544
      %v546 = vmul.f32 %v542, 1.442695
      %v547 = vpow.pop %v546
      %v548 = vmul.f32 %v543, 1.442695
      %v549 = vpow.pop %v548
      %v550 = vsel %vm195, %v545, 0.0
      %551 = vadd.xlane.f32.xlu0 %v550
      %v552 = vpop.xlane.xlu0 %551
      %v553 = vsel %vm195, %v547, 0.0
      %554 = vadd.xlane.f32.xlu0 %v553
      %v555 = vpop.xlane.xlu0 %554
      %v556 = vsel %vm202, %v549, 0.0
      %557 = vadd.xlane.f32.xlu0 %v556
      %v558 = vpop.xlane.xlu0 %557
      %v559 = vrcp.pop %v552
      %v560 = vrcp.pop %v555
      %v561 = vrcp.pop %v558
      %v562 = vmul.f32 %v545, %v559
      %v563 = vmul.f32 %v547, %v560
      %v564 = vmul.f32 %v549, %v561
      %v565 = vpack.c.bf16 %v563, %v562
      %v566 = vpack.c.bf16 %v564, %v564
      %567 = vrot.lane.b32.xlu0 %v126, 48
      %v568 = vpop.permute.xlu0 %567
      %569 = vrot.lane.b32.xlu0 %v127, 48
      %v570 = vpop.permute.xlu0 %569
      %v573 = vsel %vm195, %v565, 0
      %v576 = vsel %vm195, %v566, 0
      %v579 = vand.u32 %v570, %v245
      %581 = vmatprep.subr.bf16.mxu0 0
      %582 = vmatpush1.bf16.msra.mxu0 0
      %583 = vmatprep.subr.bf16.mxu0 0
      %584 = vmatpush1.bf16.msra.mxu0 0
      %585 = vmatprep.subr.bf16.mxu0 0
      %586 = vmatpush1.bf16.msra.mxu0 0
      %587 = vmatprep.subr.bf16.mxu0 0
      %588 = vmatpush1.bf16.msra.mxu0 0
      %589 = vmatprep.subr.bf16.mxu0 0
      %590 = vmatpush1.bf16.msra.mxu0 0
      %591 = vmatprep.subr.bf16.mxu0 0
      %592 = vmatpush1.bf16.msra.mxu0 0
      %593 = vmatprep.subr.bf16.mxu0 0
      %594 = vmatpush1.bf16.msra.mxu0 %v579
      %595 = vmatprep.subr.bf16.mxu0 0
      %596 = vmatpush1.bf16.msra.mxu0 %v568
      %597 = vmatprep.subr.bf16.mxu0 0
      %598 = vmatpush2.bf16.msra.mxu0 0
      %599 = vmatprep.subr.bf16.mxu0 0
      %600 = vmatpush2.bf16.msra.mxu0 0
      %601 = vmatprep.subr.bf16.mxu0 0
      %602 = vmatpush2.bf16.msra.mxu0 0
      %603 = vmatprep.subr.bf16.mxu0 0
      %604 = vmatpush2.bf16.msra.mxu0 0
      %605 = vmatprep.subr.bf16.mxu0 0
      %606 = vmatpush2.bf16.msra.mxu0 0
      %607 = vmatprep.subr.bf16.mxu0 0
      %608 = vmatpush2.bf16.msra.mxu0 0
      %609 = vmatprep.subr.bf16.mxu0 0
      %610 = vmatpush2.bf16.msra.mxu0 0
      %611 = vmatprep.subr.bf16.mxu0 0
      %612 = vmatpush2.bf16.msra.mxu0 0
      %613 = vmatprep.mubr.bf16.mxu0 0
      %614 = vmatmul.mubr.bf16.gmra.mxu0 %v573
      %v615 = vpop.f32.mrf.mxu0
      %v616 = vadd.f32 0.0, %v615
      %v617 = vpop.f32.mrf.mxu0
      %v618 = vpop.f32.mrf.mxu0
      %v619 = vadd.f32 0.0, %v618
      %v620 = vpop.f32.mrf.mxu0
      %621 = vmatprep.mubr.bf16.mxu0 0
      %622 = vmatmul.mubr.bf16.gmra.mxu0 %v576
      %v623 = vpop.f32.mrf.mxu0
      %v624 = vadd.f32 0.0, %v623
      %v625 = vpop.f32.mrf.mxu0
      %v626 = vpop.f32.mrf.mxu0
      %v627 = vpop.f32.mrf.mxu0
      %628 = vdwg.mxu0
      %629 = vrot.lane.b32.xlu0 %v124, 104
      %v630 = vpop.permute.xlu0 %629
      %631 = vrot.lane.b32.xlu0 %v125, 104
      %v632 = vpop.permute.xlu0 %631
      %633 = vrot.lane.b32.xlu0 %v126, 72
      %v634 = vpop.permute.xlu0 %633
      %635 = vrot.lane.b32.xlu0 %v127, 72
      %v636 = vpop.permute.xlu0 %635
      %v638 = vsel %vm134, %v630, 0
      %v641 = vsel %vm134, %v632, 0
      %v644 = vsel %vm134, %v634, 0
      %v647 = vsel %vm134, %v636, 0
      %649 = vmatprep.subr.bf16.mxu0 0
      %650 = vmatpush1.bf16.xpose.msra.mxu0 0
      %651 = vmatprep.subr.bf16.mxu0 0
      %652 = vmatpush1.bf16.xpose.msra.mxu0 0
      %653 = vmatprep.subr.bf16.mxu0 0
      %654 = vmatpush1.bf16.xpose.msra.mxu0 0
      %655 = vmatprep.subr.bf16.mxu0 0
      %656 = vmatpush1.bf16.xpose.msra.mxu0 0
      %657 = vmatprep.subr.bf16.mxu0 0
      %658 = vmatpush1.bf16.xpose.msra.mxu0 0
      %659 = vmatprep.subr.bf16.mxu0 0
      %660 = vmatpush1.bf16.xpose.msra.mxu0 0
      %661 = vmatprep.subr.bf16.mxu0 0
      %662 = vmatpush1.bf16.xpose.msra.mxu0 %v647
      %663 = vmatprep.subr.bf16.mxu0 0
      %664 = vmatpush1.bf16.xpose.msra.mxu0 %v644
      %665 = vmatprep.subr.bf16.mxu0 0
      %666 = vmatpush2.bf16.xpose.msra.mxu0 0
      %667 = vmatprep.subr.bf16.mxu0 0
      %668 = vmatpush2.bf16.xpose.msra.mxu0 0
      %669 = vmatprep.subr.bf16.mxu0 0
      %670 = vmatpush2.bf16.xpose.msra.mxu0 0
      %671 = vmatprep.subr.bf16.mxu0 0
      %672 = vmatpush2.bf16.xpose.msra.mxu0 0
      %673 = vmatprep.subr.bf16.mxu0 0
      %674 = vmatpush2.bf16.xpose.msra.mxu0 0
      %675 = vmatprep.subr.bf16.mxu0 0
      %676 = vmatpush2.bf16.xpose.msra.mxu0 0
      %677 = vmatprep.subr.bf16.mxu0 0
      %678 = vmatpush2.bf16.xpose.msra.mxu0 0
      %679 = vmatprep.subr.bf16.mxu0 0
      %680 = vmatpush2.bf16.xpose.msra.mxu0 0
      %681 = vmatprep.mubr.bf16.mxu0 0
      %682 = vmatmul.mubr.bf16.gmra.mxu0 %v638
      %v683 = vpop.f32.mrf.mxu0
      %v684 = vadd.f32 0.0, %v683
      %v685 = vpop.f32.mrf.mxu0
      %v686 = vpop.f32.mrf.mxu0
      %v687 = vadd.f32 0.0, %v686
      %v688 = vpop.f32.mrf.mxu0
      %689 = vmatprep.mubr.bf16.mxu0 0
      %690 = vmatmul.mubr.bf16.gmra.mxu0 %v641
      %v691 = vpop.f32.mrf.mxu0
      %v692 = vadd.f32 0.0, %v691
      %v693 = vpop.f32.mrf.mxu0
      %v694 = vpop.f32.mrf.mxu0
      %v695 = vpop.f32.mrf.mxu0
      %696 = vdwg.mxu0
      %v697 = vsel %vm195, %v684, -inf
      %698 = vmax.xlane.f32.xlu0 %v697
      %v699 = vpop.xlane.xlu0 %698
      %v700 = vsel %vm195, %v687, -inf
      %701 = vmax.xlane.f32.xlu0 %v700
      %v702 = vpop.xlane.xlu0 %701
      %v703 = vsel %vm202, %v692, -inf
      %704 = vmax.xlane.f32.xlu0 %v703
      %v705 = vpop.xlane.xlu0 %704
      %v706 = vsub.f32 %v684, %v699
      %v707 = vsub.f32 %v687, %v702
      %v708 = vsub.f32 %v692, %v705
      %v709 = vmul.f32 %v706, 1.442695
      %v710 = vpow.pop %v709
      %v711 = vmul.f32 %v707, 1.442695
      %v712 = vpow.pop %v711
      %v713 = vmul.f32 %v708, 1.442695
      %v714 = vpow.pop %v713
      %v715 = vsel %vm195, %v710, 0.0
      %716 = vadd.xlane.f32.xlu0 %v715
      %v717 = vpop.xlane.xlu0 %716
      %v718 = vsel %vm195, %v712, 0.0
      %719 = vadd.xlane.f32.xlu0 %v718
      %v720 = vpop.xlane.xlu0 %719
      %v721 = vsel %vm202, %v714, 0.0
      %722 = vadd.xlane.f32.xlu0 %v721
      %v723 = vpop.xlane.xlu0 %722
      %v724 = vrcp.pop %v717
      %v725 = vrcp.pop %v720
      %v726 = vrcp.pop %v723
      %v727 = vmul.f32 %v710, %v724
      %v728 = vmul.f32 %v712, %v725
      %v729 = vmul.f32 %v714, %v726
      %v730 = vpack.c.bf16 %v728, %v727
      %v731 = vpack.c.bf16 %v729, %v729
      %732 = vrot.lane.b32.xlu0 %v126, 40
      %v733 = vpop.permute.xlu0 %732
      %734 = vrot.lane.b32.xlu0 %v127, 40
      %v735 = vpop.permute.xlu0 %734
      %v738 = vsel %vm195, %v730, 0
      %v741 = vsel %vm195, %v731, 0
      %v744 = vand.u32 %v735, %v245
      %746 = vmatprep.subr.bf16.mxu0 0
      %747 = vmatpush1.bf16.msra.mxu0 0
      %748 = vmatprep.subr.bf16.mxu0 0
      %749 = vmatpush1.bf16.msra.mxu0 0
      %750 = vmatprep.subr.bf16.mxu0 0
      %751 = vmatpush1.bf16.msra.mxu0 0
      %752 = vmatprep.subr.bf16.mxu0 0
      %753 = vmatpush1.bf16.msra.mxu0 0
      %754 = vmatprep.subr.bf16.mxu0 0
      %755 = vmatpush1.bf16.msra.mxu0 0
      %756 = vmatprep.subr.bf16.mxu0 0
      %757 = vmatpush1.bf16.msra.mxu0 0
      %758 = vmatprep.subr.bf16.mxu0 0
      %759 = vmatpush1.bf16.msra.mxu0 %v744
      %760 = vmatprep.subr.bf16.mxu0 0
      %761 = vmatpush1.bf16.msra.mxu0 %v733
      %762 = vmatprep.subr.bf16.mxu0 0
      %763 = vmatpush2.bf16.msra.mxu0 0
      %764 = vmatprep.subr.bf16.mxu0 0
      %765 = vmatpush2.bf16.msra.mxu0 0
      %766 = vmatprep.subr.bf16.mxu0 0
      %767 = vmatpush2.bf16.msra.mxu0 0
      %768 = vmatprep.subr.bf16.mxu0 0
      %769 = vmatpush2.bf16.msra.mxu0 0
      %770 = vmatprep.subr.bf16.mxu0 0
      %771 = vmatpush2.bf16.msra.mxu0 0
      %772 = vmatprep.subr.bf16.mxu0 0
      %773 = vmatpush2.bf16.msra.mxu0 0
      %774 = vmatprep.subr.bf16.mxu0 0
      %775 = vmatpush2.bf16.msra.mxu0 0
      %776 = vmatprep.subr.bf16.mxu0 0
      %777 = vmatpush2.bf16.msra.mxu0 0
      %778 = vmatprep.mubr.bf16.mxu0 0
      %779 = vmatmul.mubr.bf16.gmra.mxu0 %v738
      %v780 = vpop.f32.mrf.mxu0
      %v781 = vadd.f32 0.0, %v780
      %v782 = vpop.f32.mrf.mxu0
      %v783 = vpop.f32.mrf.mxu0
      %v784 = vadd.f32 0.0, %v783
      %v785 = vpop.f32.mrf.mxu0
      %786 = vmatprep.mubr.bf16.mxu0 0
      %787 = vmatmul.mubr.bf16.gmra.mxu0 %v741
      %v788 = vpop.f32.mrf.mxu0
      %v789 = vadd.f32 0.0, %v788
      %v790 = vpop.f32.mrf.mxu0
      %v791 = vpop.f32.mrf.mxu0
      %v792 = vpop.f32.mrf.mxu0
      %793 = vdwg.mxu0
      %797 = vrot.lane.b32.xlu0 %v451, 8
      %v798 = vpop.permute.xlu0 %797
      %799 = vrot.lane.b32.xlu0 %v454, 8
      %v800 = vpop.permute.xlu0 %799
      %801 = vrot.lane.b32.xlu0 %v459, 8
      %v802 = vpop.permute.xlu0 %801
      %809 = vrot.lane.b32.xlu0 %v616, 16
      %v810 = vpop.permute.xlu0 %809
      %811 = vrot.lane.b32.xlu0 %v619, 16
      %v812 = vpop.permute.xlu0 %811
      %813 = vrot.lane.b32.xlu0 %v624, 16
      %v814 = vpop.permute.xlu0 %813
      %821 = vrot.lane.b32.xlu0 %v781, 24
      %v822 = vpop.permute.xlu0 %821
      %823 = vrot.lane.b32.xlu0 %v784, 24
      %v824 = vpop.permute.xlu0 %823
      %825 = vrot.lane.b32.xlu0 %v789, 24
      %v826 = vpop.permute.xlu0 %825
      %v830 = vsel %vm134, %v284, %v798
      %v831 = vsel %vm134, %v287, %v800
      %v832 = vsel %vm134, %v292, %v802
      %vm833 = vcmask 130048
      %v834 = vsel %vm833, %v830, %v810
      %v835 = vsel %vm833, %v831, %v812
      %v836 = vsel %vm833, %v832, %v814
      %vm837 = vcmask 195584
      %v838 = vsel %vm837, %v834, %v822
      %v839 = vsel %vm837, %v835, %v824
      %v840 = vsel %vm837, %v836, %v826
      %vm841 = vcmask 261120
      %842 = vst.msk [vmem:[%s116] sm:$0xff] %vm841, %v838
      %843 = vst.msk [vmem:[%s116 + $0x8] sm:$0xff] %vm841, %v839
      %vm844 = vcmask 253952
      %845 = vst.msk [vmem:[%s116 + $0x10] sm:$0x1] %vm844, %v840
      %p846 = scmp.lt.s32.totalorder %s12, 1
      %s847 = scalar_select %p846, %s12, 1
      %s848 = smul.addr %s847, 3
      %s849 = smul.addr %s848, 8
      %s850 = scalar_lea.vmem %s1, %s849
      // Predicated region
      $region25: #{vision_transformer.15} parent=23 // pred_check
        %p851 = pneg %p56
      $region26: #{vision_transformer.15} parent=23 // pred_check_branch
        %853 = sbr.rel (%p851) target = $region28
      $region27: #{vision_transformer.15} parent=23 // pred_region
        _
      $region28: #{vision_transformer.15} parent=23 // pred_fallthru
        _
    $region24: #{vision_transformer.15} parent=5 // pred_fallthru
      _
    %p854 = scmp.le.s32.totalorder 2, %s7
    // Predicated region
    $region29: #{vision_transformer.15} parent=5 // pred_check
      %p855 = pneg %p854
    $region30: #{vision_transformer.15} parent=5 // pred_check_branch
      %857 = sbr.rel (%p855) target = $region32
    $region31: #{vision_transformer.15} parent=5 // pred_region
      %s858 = ssub.s32 %s7, 2
      // Predicated region
      $region33: #{vision_transformer.15} parent=31 // pred_check
        %p859 = pneg %p62
      $region34: #{vision_transformer.15} parent=31 // pred_check_branch
        %861 = sbr.rel (%p859) target = $region36
      $region35: #{vision_transformer.15} parent=31 // pred_region
        %p862 = scmp.lt.s32.totalorder %s13, 1
        %s863 = scalar_select %p862, %s13, 1
        %s864 = smul.addr %s863, 3
        %s865 = smul.addr %s864, 8
        %s866 = scalar_lea.vmem %s1, %s865
      $region36: #{vision_transformer.15} parent=31 // pred_fallthru
        _
    $region32: #{vision_transformer.15} parent=5 // pred_fallthru
      _
  $region6: #{vision_transformer.15} parent=0 // loop_footer
    %s11 = sadd.s32 1, %s7
  $region7: #{vision_transformer.15} parent=0 // loop_footer_branch
    %6 = sbr.rel target = $region3
  $region8: #{vision_transformer.15} parent=0 // loop_exit
    _

// kernel: vision_transformer.16
$region0: #{vision_transformer.16}
  #allocation0 [shape = 'u32[]', space=smem, size = 0x4, offset = 0x4, fixed_abs, tag = 'smem constant byte address 0x4 - core index']
  #allocation1 [shape = 'u32[144,128]{1,0:T(1,128)}', space=vmem, size = 0x12000, scoped, tag = 'internal scratch']
  %s0 = inlined_call_operand.vmem [shape: f32[34,32], index: 0, kind: input, shape index: {}]
  %s1 = inlined_call_operand.vmem [shape: f32[32,32], index: 1, kind: input, shape index: {}]
  %s2 = inlined_call_operand.vmem [shape: f32[1,32], index: 2, kind: input, shape index: {}]
  %s3 = inlined_call_operand.vmem [shape: f32[34,32], index: 3, kind: input, shape index: {}]
  %s4 = inlined_call_operand.vmem [shape: f32[34,32], index: 4, kind: output, shape index: {}]
  %s5 = sld [smem:[#allocation0]]
  $region26: #{vision_transformer.16} parent=0
    _
  %s7 = ssub.s32 1, %s5
  %s8 = scalar_select 0, %s7, %s5
  // Predicated region
  $region2: #{vision_transformer.16} parent=0 // pred_check
    _
  $region3: #{vision_transformer.16} parent=0 // pred_check_branch
    %10 = sbr.rel (0) target = $region5
  $region4: #{vision_transformer.16} parent=0 // pred_region
    _
  $region5: #{vision_transformer.16} parent=0 // pred_fallthru
    _
  // Predicated region
  $region6: #{vision_transformer.16} parent=0 // pred_check
    _
  $region7: #{vision_transformer.16} parent=0 // pred_check_branch
    %12 = sbr.rel (0) target = $region9
  $region8: #{vision_transformer.16} parent=0 // pred_region
    _
  $region9: #{vision_transformer.16} parent=0 // pred_fallthru
    _
  // Predicated region
  $region10: #{vision_transformer.16} parent=0 // pred_check
    _
  $region11: #{vision_transformer.16} parent=0 // pred_check_branch
    %14 = sbr.rel (0) target = $region13
  $region12: #{vision_transformer.16} parent=0 // pred_region
    _
  $region13: #{vision_transformer.16} parent=0 // pred_fallthru
    _
  // Predicated region
  $region14: #{vision_transformer.16} parent=0 // pred_check
    _
  $region15: #{vision_transformer.16} parent=0 // pred_check_branch
    %16 = sbr.rel (0) target = $region17
  $region16: #{vision_transformer.16} parent=0 // pred_region
    _
  $region17: #{vision_transformer.16} parent=0 // pred_fallthru
    _
  %v18 = vld [vmem:[%s0] sm:$0xff]
  %v19 = vld [vmem:[%s0 + $0x8] sm:$0xff]
  %v20 = vld [vmem:[%s0 + $0x10] sm:$0xff]
  %v21 = vld [vmem:[%s0 + $0x18] sm:$0xff]
  %v22 = vld [vmem:[%s0 + $0x20] sm:$0x3]
  %v23 = vpack.c.bf16 %v19, %v18
  %v24 = vpack.c.bf16 %v21, %v20
  %v25 = vpack.c.bf16 %v22, %v22
  %v26 = vld [vmem:[%s1] sm:$0xff]
  %v27 = vld [vmem:[%s1 + $0x8] sm:$0xff]
  %v28 = vld [vmem:[%s1 + $0x10] sm:$0xff]
  %v29 = vld [vmem:[%s1 + $0x18] sm:$0xff]
  %v30 = vpack.c.bf16 %v27, %v26
  %v31 = vpack.c.bf16 %v29, %v28
  %v32 = vld [vmem:[%s2] sm:$0x1]
  %v34 = vlaneseq
  %v35 = vshrl.u32 %v34, 7
  %v36 = vsub.s32 0, %v35
  %v37 = vrot.slane %v32, %v36
  %vm39 = vcmask 261120
  %v41 = vsel %vm39, %v23, 0
  %v44 = vsel %vm39, %v24, 0
  %v47 = vsel %vm39, %v25, 0
  %49 = vmatprep.subr.bf16.mxu0 0
  %50 = vmatpush1.bf16.msra.mxu0 0
  %51 = vmatprep.subr.bf16.mxu0 0
  %52 = vmatpush1.bf16.msra.mxu0 0
  %53 = vmatprep.subr.bf16.mxu0 0
  %54 = vmatpush1.bf16.msra.mxu0 0
  %55 = vmatprep.subr.bf16.mxu0 0
  %56 = vmatpush1.bf16.msra.mxu0 0
  %57 = vmatprep.subr.bf16.mxu0 0
  %58 = vmatpush1.bf16.msra.mxu0 0
  %59 = vmatprep.subr.bf16.mxu0 0
  %60 = vmatpush1.bf16.msra.mxu0 0
  %61 = vmatprep.subr.bf16.mxu0 0
  %62 = vmatpush1.bf16.msra.mxu0 %v31
  %63 = vmatprep.subr.bf16.mxu0 0
  %64 = vmatpush1.bf16.msra.mxu0 %v30
  %65 = vmatprep.subr.bf16.mxu0 0
  %66 = vmatpush2.bf16.msra.mxu0 0
  %67 = vmatprep.subr.bf16.mxu0 0
  %68 = vmatpush2.bf16.msra.mxu0 0
  %69 = vmatprep.subr.bf16.mxu0 0
  %70 = vmatpush2.bf16.msra.mxu0 0
  %71 = vmatprep.subr.bf16.mxu0 0
  %72 = vmatpush2.bf16.msra.mxu0 0
  %73 = vmatprep.subr.bf16.mxu0 0
  %74 = vmatpush2.bf16.msra.mxu0 0
  %75 = vmatprep.subr.bf16.mxu0 0
  %76 = vmatpush2.bf16.msra.mxu0 0
  %77 = vmatprep.subr.bf16.mxu0 0
  %78 = vmatpush2.bf16.msra.mxu0 0
  %79 = vmatprep.subr.bf16.mxu0 0
  %80 = vmatpush2.bf16.msra.mxu0 0
  %81 = vmatprep.mubr.bf16.mxu0 0
  %82 = vmatmul.mubr.bf16.gmra.mxu0 %v41
  %v83 = vpop.f32.mrf.mxu0
  %v84 = vadd.f32 %v37, %v83
  %v85 = vpop.f32.mrf.mxu0
  %v86 = vpop.f32.mrf.mxu0
  %v87 = vadd.f32 %v37, %v86
  %v88 = vpop.f32.mrf.mxu0
  %89 = vmatprep.mubr.bf16.mxu0 0
  %90 = vmatmul.mubr.bf16.gmra.mxu0 %v44
  %v91 = vpop.f32.mrf.mxu0
  %v92 = vadd.f32 %v37, %v91
  %v93 = vpop.f32.mrf.mxu0
  %v94 = vpop.f32.mrf.mxu0
  %v95 = vadd.f32 %v37, %v94
  %v96 = vpop.f32.mrf.mxu0
  %97 = vmatprep.mubr.bf16.mxu0 0
  %98 = vmatmul.mubr.bf16.gmra.mxu0 %v47
  %v99 = vpop.f32.mrf.mxu0
  %v100 = vadd.f32 %v37, %v99
  %v101 = vpop.f32.mrf.mxu0
  %v102 = vpop.f32.mrf.mxu0
  %v103 = vpop.f32.mrf.mxu0
  %104 = vdwg.mxu0
  %v105 = vld [vmem:[%s3] sm:$0xff]
  %v106 = vld [vmem:[%s3 + $0x8] sm:$0xff]
  %v107 = vld [vmem:[%s3 + $0x10] sm:$0xff]
  %v108 = vld [vmem:[%s3 + $0x18] sm:$0xff]
  %v109 = vld [vmem:[%s3 + $0x20] sm:$0x3]
  %v110 = vadd.f32 %v84, %v105
  %v111 = vadd.f32 %v87, %v106
  %v112 = vadd.f32 %v92, %v107
  %v113 = vadd.f32 %v95, %v108
  %v114 = vadd.f32 %v100, %v109
  %115 = vst.msk [vmem:[%s4] sm:$0xff] %vm39, %v110
  %116 = vst.msk [vmem:[%s4 + $0x8] sm:$0xff] %vm39, %v111
  %117 = vst.msk [vmem:[%s4 + $0x10] sm:$0xff] %vm39, %v112
  %118 = vst.msk [vmem:[%s4 + $0x18] sm:$0xff] %vm39, %v113
  %vm119 = vcmask 254976
  %120 = vst.msk [vmem:[%s4 + $0x20] sm:$0x3] %vm119, %v114
  // Predicated region
  $region18: #{vision_transformer.16} parent=0 // pred_check
    _
  $region19: #{vision_transformer.16} parent=0 // pred_check_branch
    %122 = sbr.rel (0) target = $region21
  $region20: #{vision_transformer.16} parent=0 // pred_region
    _
  $region21: #{vision_transformer.16} parent=0 // pred_fallthru
    _
  // Predicated region
  $region22: #{vision_transformer.16} parent=0 // pred_check
    _
  $region23: #{vision_transformer.16} parent=0 // pred_check_branch
    %124 = sbr.rel (0) target = $region25
  $region24: #{vision_transformer.16} parent=0 // pred_region
    _
  $region25: #{vision_transformer.16} parent=0 // pred_fallthru
    _

// kernel: vision_transformer.22
$region0: #{vision_transformer.22}
  #allocation0 [shape = 'u32[]', space=smem, size = 0x4, offset = 0x4, fixed_abs, tag = 'smem constant byte address 0x4 - core index']
  #allocation1 [shape = 'u32[144,128]{1,0:T(1,128)}', space=vmem, size = 0x12000, scoped, tag = 'internal scratch']
  %s0 = inlined_call_operand.vmem [shape: f32[2,32], index: 0, kind: input, shape index: {}]
  %s1 = inlined_call_operand.vmem [shape: f32[1,32], index: 1, kind: input, shape index: {}]
  %s2 = inlined_call_operand.vmem [shape: f32[1,32], index: 2, kind: input, shape index: {}]
  %s3 = inlined_call_operand.vmem [shape: f32[2,32], index: 3, kind: output, shape index: {}]
  %s4 = sld [smem:[#allocation0]]
  $region22: #{vision_transformer.22} parent=0
    _
  %s6 = ssub.s32 1, %s4
  %s7 = scalar_select 0, %s6, %s4
  // Predicated region
  $region2: #{vision_transformer.22} parent=0 // pred_check
    _
  $region3: #{vision_transformer.22} parent=0 // pred_check_branch
    %9 = sbr.rel (0) target = $region5
  $region4: #{vision_transformer.22} parent=0 // pred_region
    _
  $region5: #{vision_transformer.22} parent=0 // pred_fallthru
    _
  // Predicated region
  $region6: #{vision_transformer.22} parent=0 // pred_check
    _
  $region7: #{vision_transformer.22} parent=0 // pred_check_branch
    %11 = sbr.rel (0) target = $region9
  $region8: #{vision_transformer.22} parent=0 // pred_region
    _
  $region9: #{vision_transformer.22} parent=0 // pred_fallthru
    _
  // Predicated region
  $region10: #{vision_transformer.22} parent=0 // pred_check
    _
  $region11: #{vision_transformer.22} parent=0 // pred_check_branch
    %13 = sbr.rel (0) target = $region13
  $region12: #{vision_transformer.22} parent=0 // pred_region
    _
  $region13: #{vision_transformer.22} parent=0 // pred_fallthru
    _
  %v14 = vld [vmem:[%s0] sm:$0x3]
  %vm15 = vcmask 254976
  %v16 = vsel %vm15, %v14, 0.0
  %17 = vadd.xlane.f32.xlu0 %v16
  %v18 = vpop.xlane.xlu0 %17
  %v19 = vrcp.pop 32.0
  %v20 = vmul.f32 %v18, %v19
  %v21 = vsub.f32 %v14, %v20
  %v22 = vmul.f32 %v21, %v21
  %v23 = vsel %vm15, %v22, 0.0
  %24 = vadd.xlane.f32.xlu0 %v23
  %v25 = vpop.xlane.xlu0 %24
  %v26 = vmul.f32 %v25, %v19
  %v27 = vadd.f32 %v26, 1e-05
  %v28 = vrsqrt.pop %v27
  %v29 = vmul.f32 %v21, %v28
  %v30 = vld [vmem:[%s1] sm:$0x1]
  %v32 = vlaneseq
  %v33 = vshrl.u32 %v32, 7
  %v34 = vsub.s32 0, %v33
  %v35 = vrot.slane %v30, %v34
  %v37 = vmul.f32 %v29, %v35
  %v38 = vld [vmem:[%s2] sm:$0x1]
  %v40 = vlaneseq
  %v41 = vshrl.u32 %v40, 7
  %v42 = vsub.s32 0, %v41
  %v43 = vrot.slane %v38, %v42
  %v45 = vadd.f32 %v37, %v43
  %46 = vst.msk [vmem:[%s3] sm:$0x3] %vm15, %v45
  // Predicated region
  $region14: #{vision_transformer.22} parent=0 // pred_check
    _
  $region15: #{vision_transformer.22} parent=0 // pred_check_branch
    %48 = sbr.rel (0) target = $region17
  $region16: #{vision_transformer.22} parent=0 // pred_region
    _
  $region17: #{vision_transformer.22} parent=0 // pred_fallthru
    _
  // Predicated region
  $region18: #{vision_transformer.22} parent=0 // pred_check
    _
  $region19: #{vision_transformer.22} parent=0 // pred_check_branch
    %50 = sbr.rel (0) target = $region21
  $region20: #{vision_transformer.22} parent=0 // pred_region
    _
  $region21: #{vision_transformer.22} parent=0 // pred_fallthru
    _

// kernel: vision_transformer.17
$region0: #{vision_transformer.17}
  #allocation0 [shape = 'u32[]', space=smem, size = 0x4, offset = 0x4, fixed_abs, tag = 'smem constant byte address 0x4 - core index']
  #allocation1 [shape = 'u32[144,128]{1,0:T(1,128)}', space=vmem, size = 0x12000, scoped, tag = 'internal scratch']
  #allocation2 [shape = 'bf16[34,32]{1,0:T(8,128)(2,1)}', space=vmem, size = 0x2800, scoped, tag = 'scratch operand']
  #allocation3 [shape = 'f32[34,32]{1,0:T(8,128)}', space=vmem, size = 0x5000, scoped, tag = 'scratch operand']
  %s0 = inlined_call_operand.vmem [shape: f32[34,32], index: 0, kind: input, shape index: {}]
  %s1 = inlined_call_operand.vmem [shape: f32[1,32], index: 1, kind: input, shape index: {}]
  %s2 = inlined_call_operand.vmem [shape: f32[1,32], index: 2, kind: input, shape index: {}]
  %s3 = inlined_call_operand.vmem [shape: f32[32,128], index: 3, kind: input, shape index: {}]
  %s4 = inlined_call_operand.vmem [shape: f32[1,128], index: 4, kind: input, shape index: {}]
  %s5 = inlined_call_operand.vmem [shape: f32[128,32], index: 5, kind: input, shape index: {}]
  %s6 = inlined_call_operand.vmem [shape: f32[1,32], index: 6, kind: input, shape index: {}]
  %s7 = inlined_call_operand.vmem [shape: f32[34,32], index: 7, kind: output, shape index: {}]
  %s8 = sld [smem:[#allocation0]]
  $region46: #{vision_transformer.17} parent=0
    _
  %s10 = ssub.s32 1, %s8
  %s11 = scalar_select 0, %s10, %s8
  // Predicated region
  $region2: #{vision_transformer.17} parent=0 // pred_check
    _
  $region3: #{vision_transformer.17} parent=0 // pred_check_branch
    %13 = sbr.rel (0) target = $region5
  $region4: #{vision_transformer.17} parent=0 // pred_region
    _
  $region5: #{vision_transformer.17} parent=0 // pred_fallthru
    _
  // Predicated region
  $region6: #{vision_transformer.17} parent=0 // pred_check
    _
  $region7: #{vision_transformer.17} parent=0 // pred_check_branch
    %15 = sbr.rel (0) target = $region9
  $region8: #{vision_transformer.17} parent=0 // pred_region
    _
  $region9: #{vision_transformer.17} parent=0 // pred_fallthru
    _
  // Predicated region
  $region10: #{vision_transformer.17} parent=0 // pred_check
    _
  $region11: #{vision_transformer.17} parent=0 // pred_check_branch
    %17 = sbr.rel (0) target = $region13
  $region12: #{vision_transformer.17} parent=0 // pred_region
    _
  $region13: #{vision_transformer.17} parent=0 // pred_fallthru
    _
  // Predicated region
  $region14: #{vision_transformer.17} parent=0 // pred_check
    _
  $region15: #{vision_transformer.17} parent=0 // pred_check_branch
    %19 = sbr.rel (0) target = $region17
  $region16: #{vision_transformer.17} parent=0 // pred_region
    _
  $region17: #{vision_transformer.17} parent=0 // pred_fallthru
    _
  // Predicated region
  $region18: #{vision_transformer.17} parent=0 // pred_check
    _
  $region19: #{vision_transformer.17} parent=0 // pred_check_branch
    %21 = sbr.rel (0) target = $region21
  $region20: #{vision_transformer.17} parent=0 // pred_region
    _
  $region21: #{vision_transformer.17} parent=0 // pred_fallthru
    _
  // Predicated region
  $region22: #{vision_transformer.17} parent=0 // pred_check
    _
  $region23: #{vision_transformer.17} parent=0 // pred_check_branch
    %23 = sbr.rel (0) target = $region25
  $region24: #{vision_transformer.17} parent=0 // pred_region
    _
  $region25: #{vision_transformer.17} parent=0 // pred_fallthru
    _
  // Predicated region
  $region26: #{vision_transformer.17} parent=0 // pred_check
    _
  $region27: #{vision_transformer.17} parent=0 // pred_check_branch
    %25 = sbr.rel (0) target = $region29
  $region28: #{vision_transformer.17} parent=0 // pred_region
    _
  $region29: #{vision_transformer.17} parent=0 // pred_fallthru
    _
  %p27 = scmp.eq.s32.totalorder 0, 0
  // Predicated region
  $region30: #{vision_transformer.17} parent=0 // pred_check
    %p28 = pneg %p27
  $region31: #{vision_transformer.17} parent=0 // pred_check_branch
    %30 = sbr.rel (%p28) target = $region33
  $region32: #{vision_transformer.17} parent=0 // pred_region
    %v31 = vld [vmem:[%s0] sm:$0xff]
    %v32 = vld [vmem:[%s0 + $0x8] sm:$0xff]
    %v33 = vld [vmem:[%s0 + $0x10] sm:$0xff]
    %v34 = vld [vmem:[%s0 + $0x18] sm:$0xff]
    %v35 = vld [vmem:[%s0 + $0x20] sm:$0x3]
    %vm36 = vcmask 261120
    %v37 = vsel %vm36, %v31, 0.0
    %38 = vadd.xlane.f32.xlu0 %v37
    %v39 = vpop.xlane.xlu0 %38
    %v40 = vsel %vm36, %v32, 0.0
    %41 = vadd.xlane.f32.xlu0 %v40
    %v42 = vpop.xlane.xlu0 %41
    %v43 = vsel %vm36, %v33, 0.0
    %44 = vadd.xlane.f32.xlu0 %v43
    %v45 = vpop.xlane.xlu0 %44
    %v46 = vsel %vm36, %v34, 0.0
    %47 = vadd.xlane.f32.xlu0 %v46
    %v48 = vpop.xlane.xlu0 %47
    %vm49 = vcmask 254976
    %v50 = vsel %vm49, %v35, 0.0
    %51 = vadd.xlane.f32.xlu0 %v50
    %v52 = vpop.xlane.xlu0 %51
    %v53 = vrcp.pop 32.0
    %v54 = vmul.f32 %v39, %v53
    %v55 = vmul.f32 %v42, %v53
    %v56 = vmul.f32 %v45, %v53
    %v57 = vmul.f32 %v48, %v53
    %v58 = vmul.f32 %v52, %v53
    %v59 = vsub.f32 %v31, %v54
    %v60 = vsub.f32 %v32, %v55
    %v61 = vsub.f32 %v33, %v56
    %v62 = vsub.f32 %v34, %v57
    %v63 = vsub.f32 %v35, %v58
    %v64 = vmul.f32 %v59, %v59
    %v65 = vmul.f32 %v60, %v60
    %v66 = vmul.f32 %v61, %v61
    %v67 = vmul.f32 %v62, %v62
    %v68 = vmul.f32 %v63, %v63
    %v69 = vsel %vm36, %v64, 0.0
    %70 = vadd.xlane.f32.xlu0 %v69
    %v71 = vpop.xlane.xlu0 %70
    %v72 = vsel %vm36, %v65, 0.0
    %73 = vadd.xlane.f32.xlu0 %v72
    %v74 = vpop.xlane.xlu0 %73
    %v75 = vsel %vm36, %v66, 0.0
    %76 = vadd.xlane.f32.xlu0 %v75
    %v77 = vpop.xlane.xlu0 %76
    %v78 = vsel %vm36, %v67, 0.0
    %79 = vadd.xlane.f32.xlu0 %v78
    %v80 = vpop.xlane.xlu0 %79
    %v81 = vsel %vm49, %v68, 0.0
    %82 = vadd.xlane.f32.xlu0 %v81
    %v83 = vpop.xlane.xlu0 %82
    %v84 = vmul.f32 %v71, %v53
    %v85 = vmul.f32 %v74, %v53
    %v86 = vmul.f32 %v77, %v53
    %v87 = vmul.f32 %v80, %v53
    %v88 = vmul.f32 %v83, %v53
    %v89 = vadd.f32 %v84, 1e-05
    %v90 = vadd.f32 %v85, 1e-05
    %v91 = vadd.f32 %v86, 1e-05
    %v92 = vadd.f32 %v87, 1e-05
    %v93 = vadd.f32 %v88, 1e-05
    %v94 = vrsqrt.pop %v89
    %v95 = vrsqrt.pop %v90
    %v96 = vrsqrt.pop %v91
    %v97 = vrsqrt.pop %v92
    %v98 = vrsqrt.pop %v93
    %v99 = vmul.f32 %v59, %v94
    %v100 = vmul.f32 %v60, %v95
    %v101 = vmul.f32 %v61, %v96
    %v102 = vmul.f32 %v62, %v97
    %v103 = vmul.f32 %v63, %v98
    %v104 = vld [vmem:[%s1] sm:$0x1]
    %v106 = vlaneseq
    %v107 = vshrl.u32 %v106, 7
    %v108 = vsub.s32 0, %v107
    %v109 = vrot.slane %v104, %v108
    %v111 = vmul.f32 %v99, %v109
    %v112 = vmul.f32 %v100, %v109
    %v113 = vmul.f32 %v101, %v109
    %v114 = vmul.f32 %v102, %v109
    %v115 = vmul.f32 %v103, %v109
    %v116 = vld [vmem:[%s2] sm:$0x1]
    %v118 = vlaneseq
    %v119 = vshrl.u32 %v118, 7
    %v120 = vsub.s32 0, %v119
    %v121 = vrot.slane %v116, %v120
    %v123 = vadd.f32 %v111, %v121
    %v124 = vadd.f32 %v112, %v121
    %v125 = vadd.f32 %v113, %v121
    %v126 = vadd.f32 %v114, %v121
    %v127 = vadd.f32 %v115, %v121
    %v128 = vpack.c.bf16 %v124, %v123
    %v129 = vpack.c.bf16 %v126, %v125
    %v130 = vpack.c.bf16 %v127, %v127
    %v134 = vunpack.c.l.b16 %v128
    %v135 = vunpack.c.h.b16 %v128
    %v136 = vunpack.c.l.b16 %v129
    %v137 = vunpack.c.h.b16 %v129
    %v138 = vunpack.c.l.b16 %v130
    %v139 = vpack.c.b16 %v134, %v134
    %v140 = vpack.c.b16 %v135, %v135
    %v141 = vpack.c.b16 %v136, %v136
    %v142 = vpack.c.b16 %v137, %v137
    %v143 = vpack.c.b16 %v138, %v138
    %vm149 = vcmask 257024
    %150 = vst.msk [vmem:[#allocation2] sm:$0xf] %vm149, %v139
    %151 = vst.msk [vmem:[#allocation2 + $0x4] sm:$0xf] %vm149, %v140
    %152 = vst.msk [vmem:[#allocation2 + $0x8] sm:$0xf] %vm149, %v141
    %153 = vst.msk [vmem:[#allocation2 + $0xc] sm:$0xf] %vm149, %v142
    %vm154 = vcmask 253952
    %155 = vst.msk [vmem:[#allocation2 + $0x10] sm:$0x1] %vm154, %v143
    %156 = vst.msk [vmem:[#allocation3] sm:$0xff] %vm36, 0.0
    %157 = vst.msk [vmem:[#allocation3 + $0x8] sm:$0xff] %vm36, 0.0
    %158 = vst.msk [vmem:[#allocation3 + $0x10] sm:$0xff] %vm36, 0.0
    %159 = vst.msk [vmem:[#allocation3 + $0x18] sm:$0xff] %vm36, 0.0
    %160 = vst.msk [vmem:[#allocation3 + $0x20] sm:$0x3] %vm49, 0.0
  $region33: #{vision_transformer.17} parent=0 // pred_fallthru
    _
  %v161 = vld [vmem:[#allocation2] sm:$0xf]
  %v162 = vld [vmem:[#allocation2 + $0x4] sm:$0xf]
  %v163 = vld [vmem:[#allocation2 + $0x8] sm:$0xf]
  %v164 = vld [vmem:[#allocation2 + $0xc] sm:$0xf]
  %v165 = vld [vmem:[#allocation2 + $0x10] sm:$0x1]
  %v166 = vld [vmem:[%s3] sm:$0xff]
  %v167 = vld [vmem:[%s3 + $0x8] sm:$0xff]
  %v168 = vld [vmem:[%s3 + $0x10] sm:$0xff]
  %v169 = vld [vmem:[%s3 + $0x18] sm:$0xff]
  %v170 = vpack.c.bf16 %v167, %v166
  %v171 = vpack.c.bf16 %v169, %v168
  %v172 = vld [vmem:[%s4] sm:$0x1]
  %v174 = vlaneseq
  %v175 = vshrl.u32 %v174, 7
  %v176 = vsub.s32 0, %v175
  %v177 = vrot.slane %v172, %v176
  %v184 = vunpack.c.l.b16 %v161
  %v185 = vunpack.c.l.b16 %v162
  %v186 = vunpack.c.l.b16 %v163
  %v187 = vunpack.c.l.b16 %v164
  %v188 = vunpack.c.l.b16 %v165
  %v189 = vpack.c.b16 %v185, %v184
  %v190 = vpack.c.b16 %v187, %v186
  %v191 = vpack.c.b16 %v188, %v188
  %vm192 = vcmask 261120
  %v194 = vsel %vm192, %v189, 0
  %v197 = vsel %vm192, %v190, 0
  %v200 = vsel %vm192, %v191, 0
  %202 = vmatprep.subr.bf16.mxu0 0
  %203 = vmatpush1.bf16.msra.mxu0 0
  %204 = vmatprep.subr.bf16.mxu0 0
  %205 = vmatpush1.bf16.msra.mxu0 0
  %206 = vmatprep.subr.bf16.mxu0 0
  %207 = vmatpush1.bf16.msra.mxu0 0
  %208 = vmatprep.subr.bf16.mxu0 0
  %209 = vmatpush1.bf16.msra.mxu0 0
  %210 = vmatprep.subr.bf16.mxu0 0
  %211 = vmatpush1.bf16.msra.mxu0 0
  %212 = vmatprep.subr.bf16.mxu0 0
  %213 = vmatpush1.bf16.msra.mxu0 0
  %214 = vmatprep.subr.bf16.mxu0 0
  %215 = vmatpush1.bf16.msra.mxu0 %v171
  %216 = vmatprep.subr.bf16.mxu0 0
  %217 = vmatpush1.bf16.msra.mxu0 %v170
  %218 = vmatprep.subr.bf16.mxu0 0
  %219 = vmatpush2.bf16.msra.mxu0 0
  %220 = vmatprep.subr.bf16.mxu0 0
  %221 = vmatpush2.bf16.msra.mxu0 0
  %222 = vmatprep.subr.bf16.mxu0 0
  %223 = vmatpush2.bf16.msra.mxu0 0
  %224 = vmatprep.subr.bf16.mxu0 0
  %225 = vmatpush2.bf16.msra.mxu0 0
  %226 = vmatprep.subr.bf16.mxu0 0
  %227 = vmatpush2.bf16.msra.mxu0 0
  %228 = vmatprep.subr.bf16.mxu0 0
  %229 = vmatpush2.bf16.msra.mxu0 0
  %230 = vmatprep.subr.bf16.mxu0 0
  %231 = vmatpush2.bf16.msra.mxu0 0
  %232 = vmatprep.subr.bf16.mxu0 0
  %233 = vmatpush2.bf16.msra.mxu0 0
  %234 = vmatprep.mubr.bf16.mxu0 0
  %235 = vmatmul.mubr.bf16.gmra.mxu0 %v194
  %v236 = vpop.f32.mrf.mxu0
  %v237 = vadd.f32 %v177, %v236
  %v238 = vpop.f32.mrf.mxu0
  %v239 = vpop.f32.mrf.mxu0
  %v240 = vadd.f32 %v177, %v239
  %v241 = vpop.f32.mrf.mxu0
  %242 = vmatprep.mubr.bf16.mxu0 0
  %243 = vmatmul.mubr.bf16.gmra.mxu0 %v197
  %v244 = vpop.f32.mrf.mxu0
  %v245 = vadd.f32 %v177, %v244
  %v246 = vpop.f32.mrf.mxu0
  %v247 = vpop.f32.mrf.mxu0
  %v248 = vadd.f32 %v177, %v247
  %v249 = vpop.f32.mrf.mxu0
  %250 = vmatprep.mubr.bf16.mxu0 0
  %251 = vmatmul.mubr.bf16.gmra.mxu0 %v200
  %v252 = vpop.f32.mrf.mxu0
  %v253 = vadd.f32 %v177, %v252
  %v254 = vpop.f32.mrf.mxu0
  %v255 = vpop.f32.mrf.mxu0
  %v256 = vpop.f32.mrf.mxu0
  %257 = vdwg.mxu0
  %v258 = vmul.f32 %v237, 1.702
  %v259 = vmul.f32 %v240, 1.702
  %v260 = vmul.f32 %v245, 1.702
  %v261 = vmul.f32 %v248, 1.702
  %v262 = vmul.f32 %v253, 1.702
  %v263 = vxor.u32 %v258, 2147483648
  %v264 = vxor.u32 %v259, 2147483648
  %v265 = vxor.u32 %v260, 2147483648
  %v266 = vxor.u32 %v261, 2147483648
  %v267 = vxor.u32 %v262, 2147483648
  %v268 = vmul.f32 %v263, 1.442695
  %v269 = vpow.pop %v268
  %v270 = vmul.f32 %v264, 1.442695
  %v271 = vpow.pop %v270
  %v272 = vmul.f32 %v265, 1.442695
  %v273 = vpow.pop %v272
  %v274 = vmul.f32 %v266, 1.442695
  %v275 = vpow.pop %v274
  %v276 = vmul.f32 %v267, 1.442695
  %v277 = vpow.pop %v276
  %v278 = vadd.f32 %v269, 1.0
  %v279 = vadd.f32 %v271, 1.0
  %v280 = vadd.f32 %v273, 1.0
  %v281 = vadd.f32 %v275, 1.0
  %v282 = vadd.f32 %v277, 1.0
  %v283 = vrcp.pop %v278
  %v284 = vmul.f32 1.0, %v283
  %v285 = vrcp.pop %v279
  %v286 = vmul.f32 1.0, %v285
  %v287 = vrcp.pop %v280
  %v288 = vmul.f32 1.0, %v287
  %v289 = vrcp.pop %v281
  %v290 = vmul.f32 1.0, %v289
  %v291 = vrcp.pop %v282
  %v292 = vmul.f32 1.0, %v291
  %v293 = vmul.f32 %v237, %v284
  %v294 = vmul.f32 %v240, %v286
  %v295 = vmul.f32 %v245, %v288
  %v296 = vmul.f32 %v248, %v290
  %v297 = vmul.f32 %v253, %v292
  %v298 = vld [vmem:[#allocation3] sm:$0xff]
  %v299 = vld [vmem:[#allocation3 + $0x8] sm:$0xff]
  %v300 = vld [vmem:[#allocation3 + $0x10] sm:$0xff]
  %v301 = vld [vmem:[#allocation3 + $0x18] sm:$0xff]
  %v302 = vld [vmem:[#allocation3 + $0x20] sm:$0x3]
  %v303 = vpack.c.bf16 %v294, %v293
  %v304 = vpack.c.bf16 %v296, %v295
  %v305 = vpack.c.bf16 %v297, %v297
  %v306 = vld [vmem:[%s5] sm:$0xff]
  %v307 = vld [vmem:[%s5 + $0x8] sm:$0xff]
  %v308 = vld [vmem:[%s5 + $0x10] sm:$0xff]
  %v309 = vld [vmem:[%s5 + $0x18] sm:$0xff]
  %v310 = vld [vmem:[%s5 + $0x20] sm:$0xff]
  %v311 = vld [vmem:[%s5 + $0x28] sm:$0xff]
  %v312 = vld [vmem:[%s5 + $0x30] sm:$0xff]
  %v313 = vld [vmem:[%s5 + $0x38] sm:$0xff]
  %v314 = vld [vmem:[%s5 + $0x40] sm:$0xff]
  %v315 = vld [vmem:[%s5 + $0x48] sm:$0xff]
  %v316 = vld [vmem:[%s5 + $0x50] sm:$0xff]
  %v317 = vld [vmem:[%s5 + $0x58] sm:$0xff]
  %v318 = vld [vmem:[%s5 + $0x60] sm:$0xff]
  %v319 = vld [vmem:[%s5 + $0x68] sm:$0xff]
  %v320 = vld [vmem:[%s5 + $0x70] sm:$0xff]
  %v321 = vld [vmem:[%s5 + $0x78] sm:$0xff]
  %v322 = vpack.c.bf16 %v307, %v306
  %v323 = vpack.c.bf16 %v309, %v308
  %v324 = vpack.c.bf16 %v311, %v310
  %v325 = vpack.c.bf16 %v313, %v312
  %v326 = vpack.c.bf16 %v315, %v314
  %v327 = vpack.c.bf16 %v317, %v316
  %v328 = vpack.c.bf16 %v319, %v318
  %v329 = vpack.c.bf16 %v321, %v320
  %330 = vmatprep.subr.bf16.mxu0 0
  %331 = vmatpush1.bf16.msra.mxu0 %v329
  %332 = vmatprep.subr.bf16.mxu0 0
  %333 = vmatpush1.bf16.msra.mxu0 %v328
  %334 = vmatprep.subr.bf16.mxu0 0
  %335 = vmatpush1.bf16.msra.mxu0 %v327
  %336 = vmatprep.subr.bf16.mxu0 0
  %337 = vmatpush1.bf16.msra.mxu0 %v326
  %338 = vmatprep.subr.bf16.mxu0 0
  %339 = vmatpush1.bf16.msra.mxu0 %v325
  %340 = vmatprep.subr.bf16.mxu0 0
  %341 = vmatpush1.bf16.msra.mxu0 %v324
  %342 = vmatprep.subr.bf16.mxu0 0
  %343 = vmatpush1.bf16.msra.mxu0 %v323
  %344 = vmatprep.subr.bf16.mxu0 0
  %345 = vmatpush1.bf16.msra.mxu0 %v322
  %346 = vmatprep.subr.bf16.mxu0 0
  %347 = vmatpush2.bf16.msra.mxu0 0
  %348 = vmatprep.subr.bf16.mxu0 0
  %349 = vmatpush2.bf16.msra.mxu0 0
  %350 = vmatprep.subr.bf16.mxu0 0
  %351 = vmatpush2.bf16.msra.mxu0 0
  %352 = vmatprep.subr.bf16.mxu0 0
  %353 = vmatpush2.bf16.msra.mxu0 0
  %354 = vmatprep.subr.bf16.mxu0 0
  %355 = vmatpush2.bf16.msra.mxu0 0
  %356 = vmatprep.subr.bf16.mxu0 0
  %357 = vmatpush2.bf16.msra.mxu0 0
  %358 = vmatprep.subr.bf16.mxu0 0
  %359 = vmatpush2.bf16.msra.mxu0 0
  %360 = vmatprep.subr.bf16.mxu0 0
  %361 = vmatpush2.bf16.msra.mxu0 0
  %362 = vmatprep.mubr.bf16.mxu0 0
  %363 = vmatmul.mubr.bf16.gmra.mxu0 %v303
  %v364 = vpop.f32.mrf.mxu0
  %v365 = vadd.f32 0.0, %v364
  %v366 = vpop.f32.mrf.mxu0
  %v367 = vpop.f32.mrf.mxu0
  %v368 = vadd.f32 0.0, %v367
  %v369 = vpop.f32.mrf.mxu0
  %370 = vmatprep.mubr.bf16.mxu0 0
  %371 = vmatmul.mubr.bf16.gmra.mxu0 %v304
  %v372 = vpop.f32.mrf.mxu0
  %v373 = vadd.f32 0.0, %v372
  %v374 = vpop.f32.mrf.mxu0
  %v375 = vpop.f32.mrf.mxu0
  %v376 = vadd.f32 0.0, %v375
  %v377 = vpop.f32.mrf.mxu0
  %378 = vmatprep.mubr.bf16.mxu0 0
  %379 = vmatmul.mubr.bf16.gmra.mxu0 %v305
  %v380 = vpop.f32.mrf.mxu0
  %v381 = vadd.f32 0.0, %v380
  %v382 = vpop.f32.mrf.mxu0
  %v383 = vpop.f32.mrf.mxu0
  %v384 = vpop.f32.mrf.mxu0
  %385 = vdwg.mxu0
  %v386 = vadd.f32 %v298, %v365
  %v387 = vadd.f32 %v299, %v368
  %v388 = vadd.f32 %v300, %v373
  %v389 = vadd.f32 %v301, %v376
  %v390 = vadd.f32 %v302, %v381
  %391 = vst.msk [vmem:[#allocation3] sm:$0xff] %vm192, %v386
  %392 = vst.msk [vmem:[#allocation3 + $0x8] sm:$0xff] %vm192, %v387
  %393 = vst.msk [vmem:[#allocation3 + $0x10] sm:$0xff] %vm192, %v388
  %394 = vst.msk [vmem:[#allocation3 + $0x18] sm:$0xff] %vm192, %v389
  %vm395 = vcmask 254976
  %396 = vst.msk [vmem:[#allocation3 + $0x20] sm:$0x3] %vm395, %v390
  // Predicated region
  $region34: #{vision_transformer.17} parent=0 // pred_check
    %p397 = pneg %p27
  $region35: #{vision_transformer.17} parent=0 // pred_check_branch
    %399 = sbr.rel (%p397) target = $region37
  $region36: #{vision_transformer.17} parent=0 // pred_region
    %v400 = vld [vmem:[#allocation3] sm:$0xff]
    %v401 = vld [vmem:[#allocation3 + $0x8] sm:$0xff]
    %v402 = vld [vmem:[#allocation3 + $0x10] sm:$0xff]
    %v403 = vld [vmem:[#allocation3 + $0x18] sm:$0xff]
    %v404 = vld [vmem:[#allocation3 + $0x20] sm:$0x3]
    %v405 = vld [vmem:[%s6] sm:$0x1]
    %v407 = vlaneseq
    %v408 = vshrl.u32 %v407, 7
    %v409 = vsub.s32 0, %v408
    %v410 = vrot.slane %v405, %v409
    %v412 = vadd.f32 %v400, %v410
    %v413 = vadd.f32 %v401, %v410
    %v414 = vadd.f32 %v402, %v410
    %v415 = vadd.f32 %v403, %v410
    %v416 = vadd.f32 %v404, %v410
    %v417 = vld [vmem:[%s0] sm:$0xff]
    %v418 = vld [vmem:[%s0 + $0x8] sm:$0xff]
    %v419 = vld [vmem:[%s0 + $0x10] sm:$0xff]
    %v420 = vld [vmem:[%s0 + $0x18] sm:$0xff]
    %v421 = vld [vmem:[%s0 + $0x20] sm:$0x3]
    %v422 = vadd.f32 %v412, %v417
    %v423 = vadd.f32 %v413, %v418
    %v424 = vadd.f32 %v414, %v419
    %v425 = vadd.f32 %v415, %v420
    %v426 = vadd.f32 %v416, %v421
    %427 = vst.msk [vmem:[%s7] sm:$0xff] %vm192, %v422
    %428 = vst.msk [vmem:[%s7 + $0x8] sm:$0xff] %vm192, %v423
    %429 = vst.msk [vmem:[%s7 + $0x10] sm:$0xff] %vm192, %v424
    %430 = vst.msk [vmem:[%s7 + $0x18] sm:$0xff] %vm192, %v425
    %431 = vst.msk [vmem:[%s7 + $0x20] sm:$0x3] %vm395, %v426
  $region37: #{vision_transformer.17} parent=0 // pred_fallthru
    _
  // Predicated region
  $region38: #{vision_transformer.17} parent=0 // pred_check
    _
  $region39: #{vision_transformer.17} parent=0 // pred_check_branch
    %433 = sbr.rel (0) target = $region41
  $region40: #{vision_transformer.17} parent=0 // pred_region
    _
  $region41: #{vision_transformer.17} parent=0 // pred_fallthru
    _
  // Predicated region
  $region42: #{vision_transformer.17} parent=0 // pred_check
    _
  $region43: #{vision_transformer.17} parent=0 // pred_check_branch
    %435 = sbr.rel (0) target = $region45
  $region44: #{vision_transformer.17} parent=0 // pred_region
    _
  $region45: #{vision_transformer.17} parent=0 // pred_fallthru
    _

// kernel: vision_transformer.23
$region0: #{vision_transformer.23}
  #allocation0 [shape = 'u32[]', space=smem, size = 0x4, offset = 0x4, fixed_abs, tag = 'smem constant byte address 0x4 - core index']
  #allocation1 [shape = 'u32[144,128]{1,0:T(1,128)}', space=vmem, size = 0x12000, scoped, tag = 'internal scratch']
  %s0 = inlined_call_operand.vmem [shape: f32[2,32], index: 0, kind: input, shape index: {}]
  %s1 = inlined_call_operand.vmem [shape: f32[32,16], index: 1, kind: input, shape index: {}]
  %s2 = inlined_call_operand.vmem [shape: f32[1,16], index: 2, kind: input, shape index: {}]
  %s3 = inlined_call_operand.hbm [shape: f32[2,16], index: 3, kind: output, shape index: {}]
  %s4 = sld [smem:[#allocation0]]
  $region22: #{vision_transformer.23} parent=0
    _
  %s6 = ssub.s32 1, %s4
  %s7 = scalar_select 0, %s6, %s4
  $region1: #{vision_transformer.23} parent=0
    #allocation2 [shape = 'u8[1024]{0}', space=vmem, size = 0x400, scoped, tag = 'output window, operand 0, single buffered']
    #allocation3 [shape = 's32[1]{0}', space=sflag, size = 0x4, scoped, tag = 'scoped memory for vision_transformer.23']
    %8 = vsyncpa [#allocation3], 0
    // Predicated region
    $region2: #{vision_transformer.23} parent=1 // pred_check
      _
    $region3: #{vision_transformer.23} parent=1 // pred_check_branch
      %10 = sbr.rel (0) target = $region5
    $region4: #{vision_transformer.23} parent=1 // pred_region
      _
    $region5: #{vision_transformer.23} parent=1 // pred_fallthru
      _
    // Predicated region
    $region6: #{vision_transformer.23} parent=1 // pred_check
      _
    $region7: #{vision_transformer.23} parent=1 // pred_check_branch
      %12 = sbr.rel (0) target = $region9
    $region8: #{vision_transformer.23} parent=1 // pred_region
      _
    $region9: #{vision_transformer.23} parent=1 // pred_fallthru
      _
    // Predicated region
    $region10: #{vision_transformer.23} parent=1 // pred_check
      _
    $region11: #{vision_transformer.23} parent=1 // pred_check_branch
      %14 = sbr.rel (0) target = $region13
    $region12: #{vision_transformer.23} parent=1 // pred_region
      _
    $region13: #{vision_transformer.23} parent=1 // pred_fallthru
      _
    %v16 = vld [vmem:[%s0] sm:$0x3]
    %v17 = vpack.c.bf16 %v16, %v16
    %v18 = vld [vmem:[%s1] sm:$0xff]
    %v19 = vld [vmem:[%s1 + $0x8] sm:$0xff]
    %v20 = vld [vmem:[%s1 + $0x10] sm:$0xff]
    %v21 = vld [vmem:[%s1 + $0x18] sm:$0xff]
    %v22 = vpack.c.bf16 %v19, %v18
    %v23 = vpack.c.bf16 %v21, %v20
    %v24 = vld [vmem:[%s2] sm:$0x1]
    %v26 = vlaneseq
    %v27 = vshrl.u32 %v26, 7
    %v28 = vsub.s32 0, %v27
    %v29 = vrot.slane %v24, %v28
    %vm31 = vcmask 261120
    %v33 = vsel %vm31, %v17, 0
    %35 = vmatprep.subr.bf16.mxu0 0
    %36 = vmatpush1.bf16.msra.mxu0 0
    %37 = vmatprep.subr.bf16.mxu0 0
    %38 = vmatpush1.bf16.msra.mxu0 0
    %39 = vmatprep.subr.bf16.mxu0 0
    %40 = vmatpush1.bf16.msra.mxu0 0
    %41 = vmatprep.subr.bf16.mxu0 0
    %42 = vmatpush1.bf16.msra.mxu0 0
    %43 = vmatprep.subr.bf16.mxu0 0
    %44 = vmatpush1.bf16.msra.mxu0 0
    %45 = vmatprep.subr.bf16.mxu0 0
    %46 = vmatpush1.bf16.msra.mxu0 0
    %47 = vmatprep.subr.bf16.mxu0 0
    %48 = vmatpush1.bf16.msra.mxu0 %v23
    %49 = vmatprep.subr.bf16.mxu0 0
    %50 = vmatpush1.bf16.msra.mxu0 %v22
    %51 = vmatprep.subr.bf16.mxu0 0
    %52 = vmatpush2.bf16.msra.mxu0 0
    %53 = vmatprep.subr.bf16.mxu0 0
    %54 = vmatpush2.bf16.msra.mxu0 0
    %55 = vmatprep.subr.bf16.mxu0 0
    %56 = vmatpush2.bf16.msra.mxu0 0
    %57 = vmatprep.subr.bf16.mxu0 0
    %58 = vmatpush2.bf16.msra.mxu0 0
    %59 = vmatprep.subr.bf16.mxu0 0
    %60 = vmatpush2.bf16.msra.mxu0 0
    %61 = vmatprep.subr.bf16.mxu0 0
    %62 = vmatpush2.bf16.msra.mxu0 0
    %63 = vmatprep.subr.bf16.mxu0 0
    %64 = vmatpush2.bf16.msra.mxu0 0
    %65 = vmatprep.subr.bf16.mxu0 0
    %66 = vmatpush2.bf16.msra.mxu0 0
    %67 = vmatprep.mubr.bf16.mxu0 0
    %68 = vmatmul.mubr.bf16.gmra.mxu0 %v33
    %v69 = vpop.f32.mrf.mxu0
    %v70 = vadd.f32 %v29, %v69
    %v71 = vpop.f32.mrf.mxu0
    %v72 = vpop.f32.mrf.mxu0
    %v73 = vpop.f32.mrf.mxu0
    %74 = vdwg.mxu0
    %vm75 = vcmask 123904
    %76 = vst.msk [vmem:[#allocation2] sm:$0x3] %vm75, %v70
    // Predicated region
    $region14: #{vision_transformer.23} parent=1 // pred_check
      _
    $region15: #{vision_transformer.23} parent=1 // pred_check_branch
      %78 = sbr.rel (0) target = $region17
    $region16: #{vision_transformer.23} parent=1 // pred_region
      %s80 = ssub.s32 32, 32
      %81 = vsyncadd [#allocation3], %s80
      %s83 = sshll.u32 [#allocation2], 4
      %s84 = int_to_ptr.vmem [resolvable:$true] %s83
      %86 = dma.vmem_to_hbm [thread:$0]  %s84, 32, %s3, [#allocation3]
    $region17: #{vision_transformer.23} parent=1 // pred_fallthru
      _
    // Predicated region
    $region18: #{vision_transformer.23} parent=1 // pred_check
      _
    $region19: #{vision_transformer.23} parent=1 // pred_check_branch
      %88 = sbr.rel (0) target = $region21
    $region20: #{vision_transformer.23} parent=1 // pred_region
      %89 = dma.done [#allocation3], 32
    $region21: #{vision_transformer.23} parent=1 // pred_fallthru
      _
    %90 = vsyncpa [#allocation3], 1

// kernel: vision_transformer.19
$region0: #{vision_transformer.19}
  #allocation0 [shape = 'u32[]', space=smem, size = 0x4, offset = 0x4, fixed_abs, tag = 'smem constant byte address 0x4 - core index']
  #allocation1 [shape = 'u32[144,128]{1,0:T(1,128)}', space=vmem, size = 0x12000, scoped, tag = 'internal scratch']
  %s0 = inlined_call_operand.vmem [shape: f32[2,17,96], index: 0, kind: input, shape index: {}]
  %s1 = inlined_call_operand.vmem [shape: f32[2,17,32], index: 1, kind: output, shape index: {0}]
  %s2 = inlined_call_operand.vmem [shape: f32[2,17,17], index: 2, kind: output, shape index: {1}]
  %3 = xla_tuple %s1, %s2
  %s4 = sld [smem:[#allocation0]]
  $region45: #{vision_transformer.19} parent=0
    _
  %s6 = ssub.s32 1, %s4
  %s7 = scalar_select 0, %s6, %s4
  loop: start=0, step=1, limit=4
  $region2: #{vision_transformer.19} parent=0 // loop_pre_header
    _
  $region3: #{vision_transformer.19} parent=0 // loop_header
    %s9 = sphi 0, %s13
    %p10 = scmp.ge.s32.totalorder %s9, 4
    %s19 = sphi 0, %s21
    %s22 = sphi 0, %s19
    %s23 = sphi 0, %s22
    %s39 = sphi 0, %s23
    %s45 = sphi 0, %s47
    %s48 = sphi 0, %s45
    %s49 = sphi 0, %s48
    %s65 = sphi 0, %s49
    %s71 = sphi 0, %s73
    %s74 = sphi 0, %s71
    %s75 = sphi 0, %s74
    %s91 = sphi 0, %s75
  $region4: #{vision_transformer.19} parent=0 // loop_header_branch
    %12 = sbr.rel (%p10) target = $region8
  $region5: #{vision_transformer.19} parent=0 // loop_body
    %s14 = ssub.s32 %s9, 1
    %s15 = ssub.s32 %s9, 2
    %s16 = sadd.s32 %s9, 1
    %s17 = ssub.s32 %s9, %s16
    %p18 = scmp.eq.s32.totalorder %s17, 0
    %s20 = sadd.s32 %s19, 1
    %s21 = scalar_select %p18, %s19, %s20
    %p24 = pneg %p18
    %p25 = scmp.eq.s32.totalorder %s9, 1
    %p26 = por %p24, %p25
    %p27 = scmp.ne.s32.totalorder %s19, %s22
    %p28 = scmp.eq.s32.totalorder %s9, 0
    %p29 = por %p27, %p28
    %p30 = scmp.ne.s32.totalorder %s19, %s22
    %p31 = scmp.eq.s32.totalorder %s14, 1
    %p32 = por %p30, %p31
    %p33 = scmp.ne.s32.totalorder %s22, %s23
    %p34 = scmp.eq.s32.totalorder %s14, 0
    %p35 = por %p33, %p34
    %p36 = scmp.ne.s32.totalorder %s22, %s23
    %p37 = scmp.eq.s32.totalorder %s15, 1
    %p38 = por %p36, %p37
    %p40 = scmp.ne.s32.totalorder %s23, %s39
    %p41 = scmp.eq.s32.totalorder %s15, 0
    %p42 = por %p40, %p41
    %s43 = ssub.s32 %s9, %s16
    %p44 = scmp.eq.s32.totalorder %s43, 0
    %s46 = sadd.s32 %s45, 1
    %s47 = scalar_select %p44, %s45, %s46
    %p50 = pneg %p44
    %p51 = scmp.eq.s32.totalorder %s9, 1
    %p52 = por %p50, %p51
    %p53 = scmp.ne.s32.totalorder %s45, %s48
    %p54 = scmp.eq.s32.totalorder %s9, 0
    %p55 = por %p53, %p54
    %p56 = scmp.ne.s32.totalorder %s45, %s48
    %p57 = scmp.eq.s32.totalorder %s14, 1
    %p58 = por %p56, %p57
    %p59 = scmp.ne.s32.totalorder %s48, %s49
    %p60 = scmp.eq.s32.totalorder %s14, 0
    %p61 = por %p59, %p60
    %p62 = scmp.ne.s32.totalorder %s48, %s49
    %p63 = scmp.eq.s32.totalorder %s15, 1
    %p64 = por %p62, %p63
    %p66 = scmp.ne.s32.totalorder %s49, %s65
    %p67 = scmp.eq.s32.totalorder %s15, 0
    %p68 = por %p66, %p67
    %s69 = ssub.s32 %s9, %s16
    %p70 = scmp.eq.s32.totalorder %s69, 0
    %s72 = sadd.s32 %s71, 1
    %s73 = scalar_select %p70, %s71, %s72
    %p76 = pneg %p70
    %p77 = scmp.eq.s32.totalorder %s9, 1
    %p78 = por %p76, %p77
    %p79 = scmp.ne.s32.totalorder %s71, %s74
    %p80 = scmp.eq.s32.totalorder %s9, 0
    %p81 = por %p79, %p80
    %p82 = scmp.ne.s32.totalorder %s71, %s74
    %p83 = scmp.eq.s32.totalorder %s14, 1
    %p84 = por %p82, %p83
    %p85 = scmp.ne.s32.totalorder %s74, %s75
    %p86 = scmp.eq.s32.totalorder %s14, 0
    %p87 = por %p85, %p86
    %p88 = scmp.ne.s32.totalorder %s74, %s75
    %p89 = scmp.eq.s32.totalorder %s15, 1
    %p90 = por %p88, %p89
    %p92 = scmp.ne.s32.totalorder %s75, %s91
    %p93 = scmp.eq.s32.totalorder %s15, 0
    %p94 = por %p92, %p93
    %p95 = scmp.le.s32.totalorder 1, %s9
    %p96 = scmp.lt.s32.totalorder %s9, 3
    %p97 = pnand %p95, %p96
    %p98 = pneg %p97
    // Predicated region
    $region9: #{vision_transformer.19} parent=5 // pred_check
      _
    $region10: #{vision_transformer.19} parent=5 // pred_check_branch
      %100 = sbr.rel (%p97) target = $region12
    $region11: #{vision_transformer.19} parent=5 // pred_region
      %s101 = ssub.s32 %s9, 1
    $region12: #{vision_transformer.19} parent=5 // pred_fallthru
      _
    %p102 = scmp.lt.s32.totalorder %s9, 2
    // Predicated region
    $region13: #{vision_transformer.19} parent=5 // pred_check
      %p103 = pneg %p102
    $region14: #{vision_transformer.19} parent=5 // pred_check_branch
      %105 = sbr.rel (%p103) target = $region16
    $region15: #{vision_transformer.19} parent=5 // pred_region
      // Predicated region
      $region17: #{vision_transformer.19} parent=15 // pred_check
        %p106 = pneg %p29
      $region18: #{vision_transformer.19} parent=15 // pred_check_branch
        %108 = sbr.rel (%p106) target = $region20
      $region19: #{vision_transformer.19} parent=15 // pred_region
        %p109 = scmp.lt.s32.totalorder %s9, 1
        %s110 = scalar_select %p109, %s9, 1
        %s111 = smul.addr %s110, 3
        %s112 = smul.addr %s111, 8
        %s113 = scalar_lea.vmem %s0, %s112
      $region20: #{vision_transformer.19} parent=15 // pred_fallthru
        _
    $region16: #{vision_transformer.19} parent=5 // pred_fallthru
      _
    %p114 = scmp.le.s32.totalorder 1, %s9
    %p115 = scmp.lt.s32.totalorder %s9, 3
    %p116 = pnand %p114, %p115
    %p117 = pneg %p116
    // Predicated region
    $region21: #{vision_transformer.19} parent=5 // pred_check
      _
    $region22: #{vision_transformer.19} parent=5 // pred_check_branch
      %119 = sbr.rel (%p116) target = $region24
    $region23: #{vision_transformer.19} parent=5 // pred_region
      %s120 = ssub.s32 %s9, 1
      %p121 = scmp.lt.s32.totalorder %s14, 1
      %s122 = scalar_select %p121, %s14, 1
      %s123 = smul.addr %s122, 3
      %s124 = smul.addr %s123, 8
      %s125 = scalar_lea.vmem %s0, %s124
      %p126 = pneg %p35
      %p127 = pneg %p32
      %p128 = pneg %p61
      %p129 = pneg %p58
      %p130 = scmp.lt.s32.totalorder %s14, 1
      %s131 = scalar_select %p130, %s14, 1
      %s132 = smul.addr %s131, 3
      %s133 = smul.addr %s132, 8
      %s134 = scalar_lea.vmem %s1, %s133
      %p135 = pneg %p87
      %p136 = pneg %p84
      %p137 = scmp.lt.s32.totalorder %s14, 1
      %s138 = scalar_select %p137, %s14, 1
      %s139 = smul.addr %s138, 3
      %s140 = smul.addr %s139, 8
      %s141 = scalar_lea.vmem %s2, %s140
      %p142 = scmp.lt.s32.totalorder %s14, 1
      %s143 = scalar_select %p142, %s14, 1
      %s144 = smul.addr %s143, 3
      %s145 = smul.addr %s144, 8
      %s146 = scalar_lea.vmem %s0, %s145
      %p147 = scmp.lt.s32.totalorder %s14, 1
      %s148 = scalar_select %p147, %s14, 1
      %s149 = smul.addr %s148, 3
      %s150 = smul.addr %s149, 8
      %s151 = scalar_lea.vmem %s1, %s150
      %p152 = scmp.lt.s32.totalorder %s14, 1
      %s153 = scalar_select %p152, %s14, 1
      %s154 = smul.addr %s153, 3
      %s155 = smul.addr %s154, 8
      %s156 = scalar_lea.vmem %s2, %s155
      %v158 = vld [vmem:[%s146] sm:$0xff]
      %v159 = vld [vmem:[%s146 + $0x8] sm:$0xff]
      %v160 = vld [vmem:[%s146 + $0x10] sm:$0x1]
      %v161 = vmul.f32 %v158, 0.35355338
      %v162 = vmul.f32 %v159, 0.35355338
      %v163 = vmul.f32 %v160, 0.35355338
      %v164 = vpack.c.bf16 %v162, %v161
      %v165 = vpack.c.bf16 %v163, %v163
      %v166 = vpack.c.bf16 %v159, %v158
      %v167 = vpack.c.bf16 %v160, %v160
      %170 = vrot.lane.b32.xlu0 %v166, 96
      %v171 = vpop.permute.xlu0 %170
      %172 = vrot.lane.b32.xlu0 %v167, 96
      %v173 = vpop.permute.xlu0 %172
      %vm174 = vcmask 64512
      %v176 = vsel %vm174, %v164, 0
      %v179 = vsel %vm174, %v165, 0
      %v182 = vsel %vm174, %v171, 0
      %v185 = vsel %vm174, %v173, 0
      %187 = vmatprep.subr.bf16.mxu0 0
      %188 = vmatpush1.bf16.xpose.msra.mxu0 0
      %189 = vmatprep.subr.bf16.mxu0 0
      %190 = vmatpush1.bf16.xpose.msra.mxu0 0
      %191 = vmatprep.subr.bf16.mxu0 0
      %192 = vmatpush1.bf16.xpose.msra.mxu0 0
      %193 = vmatprep.subr.bf16.mxu0 0
      %194 = vmatpush1.bf16.xpose.msra.mxu0 0
      %195 = vmatprep.subr.bf16.mxu0 0
      %196 = vmatpush1.bf16.xpose.msra.mxu0 0
      %197 = vmatprep.subr.bf16.mxu0 0
      %198 = vmatpush1.bf16.xpose.msra.mxu0 0
      %199 = vmatprep.subr.bf16.mxu0 0
      %200 = vmatpush1.bf16.xpose.msra.mxu0 %v185
      %201 = vmatprep.subr.bf16.mxu0 0
      %202 = vmatpush1.bf16.xpose.msra.mxu0 %v182
      %203 = vmatprep.subr.bf16.mxu0 0
      %204 = vmatpush2.bf16.xpose.msra.mxu0 0
      %205 = vmatprep.subr.bf16.mxu0 0
      %206 = vmatpush2.bf16.xpose.msra.mxu0 0
      %207 = vmatprep.subr.bf16.mxu0 0
      %208 = vmatpush2.bf16.xpose.msra.mxu0 0
      %209 = vmatprep.subr.bf16.mxu0 0
      %210 = vmatpush2.bf16.xpose.msra.mxu0 0
      %211 = vmatprep.subr.bf16.mxu0 0
      %212 = vmatpush2.bf16.xpose.msra.mxu0 0
      %213 = vmatprep.subr.bf16.mxu0 0
      %214 = vmatpush2.bf16.xpose.msra.mxu0 0
      %215 = vmatprep.subr.bf16.mxu0 0
      %216 = vmatpush2.bf16.xpose.msra.mxu0 0
      %217 = vmatprep.subr.bf16.mxu0 0
      %218 = vmatpush2.bf16.xpose.msra.mxu0 0
      %219 = vmatprep.mubr.bf16.mxu0 0
      %220 = vmatmul.mubr.bf16.gmra.mxu0 %v176
      %v221 = vpop.f32.mrf.mxu0
      %v222 = vadd.f32 0.0, %v221
      %v223 = vpop.f32.mrf.mxu0
      %v224 = vpop.f32.mrf.mxu0
      %v225 = vadd.f32 0.0, %v224
      %v226 = vpop.f32.mrf.mxu0
      %227 = vmatprep.mubr.bf16.mxu0 0
      %228 = vmatmul.mubr.bf16.gmra.mxu0 %v179
      %v229 = vpop.f32.mrf.mxu0
      %v230 = vadd.f32 0.0, %v229
      %v231 = vpop.f32.mrf.mxu0
      %v232 = vpop.f32.mrf.mxu0
      %v233 = vpop.f32.mrf.mxu0
      %234 = vdwg.mxu0
      %vm235 = vcmask 138240
      %v236 = vsel %vm235, %v222, -inf
      %237 = vmax.xlane.f32.xlu0 %v236
      %v238 = vpop.xlane.xlu0 %237
      %v239 = vsel %vm235, %v225, -inf
      %240 = vmax.xlane.f32.xlu0 %v239
      %v241 = vpop.xlane.xlu0 %240
      %vm242 = vcmask 131072
      %v243 = vsel %vm242, %v230, -inf
      %244 = vmax.xlane.f32.xlu0 %v243
      %v245 = vpop.xlane.xlu0 %244
      %v246 = vsub.f32 %v222, %v238
      %v247 = vsub.f32 %v225, %v241
      %v248 = vsub.f32 %v230, %v245
      %v249 = vmul.f32 %v246, 1.442695
      %v250 = vpow.pop %v249
      %v251 = vmul.f32 %v247, 1.442695
      %v252 = vpow.pop %v251
      %v253 = vmul.f32 %v248, 1.442695
      %v254 = vpow.pop %v253
      %v255 = vsel %vm235, %v250, 0.0
      %256 = vadd.xlane.f32.xlu0 %v255
      %v257 = vpop.xlane.xlu0 %256
      %v258 = vsel %vm235, %v252, 0.0
      %259 = vadd.xlane.f32.xlu0 %v258
      %v260 = vpop.xlane.xlu0 %259
      %v261 = vsel %vm242, %v254, 0.0
      %262 = vadd.xlane.f32.xlu0 %v261
      %v263 = vpop.xlane.xlu0 %262
      %v264 = vrcp.pop %v257
      %v265 = vrcp.pop %v260
      %v266 = vrcp.pop %v263
      %v267 = vmul.f32 %v250, %v264
      %v268 = vmul.f32 %v252, %v265
      %v269 = vmul.f32 %v254, %v266
      %v270 = vpack.c.bf16 %v268, %v267
      %v271 = vpack.c.bf16 %v269, %v269
      %272 = vrot.lane.b32.xlu0 %v166, 64
      %v273 = vpop.permute.xlu0 %272
      %274 = vrot.lane.b32.xlu0 %v167, 64
      %v275 = vpop.permute.xlu0 %274
      %v278 = vsel %vm235, %v270, 0
      %v281 = vsel %vm235, %v271, 0
      %vm283 = vcmask 1040384
      %v284 = vsel 0, 4294967295, 65535
      %v285 = vsel %vm283, %v284, 0
      %v287 = vand.u32 %v275, %v285
      %289 = vmatprep.subr.bf16.mxu0 0
      %290 = vmatpush1.bf16.msra.mxu0 0
      %291 = vmatprep.subr.bf16.mxu0 0
      %292 = vmatpush1.bf16.msra.mxu0 0
      %293 = vmatprep.subr.bf16.mxu0 0
      %294 = vmatpush1.bf16.msra.mxu0 0
      %295 = vmatprep.subr.bf16.mxu0 0
      %296 = vmatpush1.bf16.msra.mxu0 0
      %297 = vmatprep.subr.bf16.mxu0 0
      %298 = vmatpush1.bf16.msra.mxu0 0
      %299 = vmatprep.subr.bf16.mxu0 0
      %300 = vmatpush1.bf16.msra.mxu0 0
      %301 = vmatprep.subr.bf16.mxu0 0
      %302 = vmatpush1.bf16.msra.mxu0 %v287
      %303 = vmatprep.subr.bf16.mxu0 0
      %304 = vmatpush1.bf16.msra.mxu0 %v273
      %305 = vmatprep.subr.bf16.mxu0 0
      %306 = vmatpush2.bf16.msra.mxu0 0
      %307 = vmatprep.subr.bf16.mxu0 0
      %308 = vmatpush2.bf16.msra.mxu0 0
      %309 = vmatprep.subr.bf16.mxu0 0
      %310 = vmatpush2.bf16.msra.mxu0 0
      %311 = vmatprep.subr.bf16.mxu0 0
      %312 = vmatpush2.bf16.msra.mxu0 0
      %313 = vmatprep.subr.bf16.mxu0 0
      %314 = vmatpush2.bf16.msra.mxu0 0
      %315 = vmatprep.subr.bf16.mxu0 0
      %316 = vmatpush2.bf16.msra.mxu0 0
      %317 = vmatprep.subr.bf16.mxu0 0
      %318 = vmatpush2.bf16.msra.mxu0 0
      %319 = vmatprep.subr.bf16.mxu0 0
      %320 = vmatpush2.bf16.msra.mxu0 0
      %321 = vmatprep.mubr.bf16.mxu0 0
      %322 = vmatmul.mubr.bf16.gmra.mxu0 %v278
      %v323 = vpop.f32.mrf.mxu0
      %v324 = vadd.f32 0.0, %v323
      %v325 = vpop.f32.mrf.mxu0
      %v326 = vpop.f32.mrf.mxu0
      %v327 = vadd.f32 0.0, %v326
      %v328 = vpop.f32.mrf.mxu0
      %329 = vmatprep.mubr.bf16.mxu0 0
      %330 = vmatmul.mubr.bf16.gmra.mxu0 %v281
      %v331 = vpop.f32.mrf.mxu0
      %v332 = vadd.f32 0.0, %v331
      %v333 = vpop.f32.mrf.mxu0
      %v334 = vpop.f32.mrf.mxu0
      %v335 = vpop.f32.mrf.mxu0
      %336 = vdwg.mxu0
      %339 = vrot.lane.b32.xlu0 %v164, 120
      %v340 = vpop.permute.xlu0 %339
      %341 = vrot.lane.b32.xlu0 %v165, 120
      %v342 = vpop.permute.xlu0 %341
      %343 = vrot.lane.b32.xlu0 %v166, 88
      %v344 = vpop.permute.xlu0 %343
      %345 = vrot.lane.b32.xlu0 %v167, 88
      %v346 = vpop.permute.xlu0 %345
      %v348 = vsel %vm174, %v340, 0
      %v351 = vsel %vm174, %v342, 0
      %v354 = vsel %vm174, %v344, 0
      %v357 = vsel %vm174, %v346, 0
      %359 = vmatprep.subr.bf16.mxu0 0
      %360 = vmatpush1.bf16.xpose.msra.mxu0 0
      %361 = vmatprep.subr.bf16.mxu0 0
      %362 = vmatpush1.bf16.xpose.msra.mxu0 0
      %363 = vmatprep.subr.bf16.mxu0 0
      %364 = vmatpush1.bf16.xpose.msra.mxu0 0
      %365 = vmatprep.subr.bf16.mxu0 0
      %366 = vmatpush1.bf16.xpose.msra.mxu0 0
      %367 = vmatprep.subr.bf16.mxu0 0
      %368 = vmatpush1.bf16.xpose.msra.mxu0 0
      %369 = vmatprep.subr.bf16.mxu0 0
      %370 = vmatpush1.bf16.xpose.msra.mxu0 0
      %371 = vmatprep.subr.bf16.mxu0 0
      %372 = vmatpush1.bf16.xpose.msra.mxu0 %v357
      %373 = vmatprep.subr.bf16.mxu0 0
      %374 = vmatpush1.bf16.xpose.msra.mxu0 %v354
      %375 = vmatprep.subr.bf16.mxu0 0
      %376 = vmatpush2.bf16.xpose.msra.mxu0 0
      %377 = vmatprep.subr.bf16.mxu0 0
      %378 = vmatpush2.bf16.xpose.msra.mxu0 0
      %379 = vmatprep.subr.bf16.mxu0 0
      %380 = vmatpush2.bf16.xpose.msra.mxu0 0
      %381 = vmatprep.subr.bf16.mxu0 0
      %382 = vmatpush2.bf16.xpose.msra.mxu0 0
      %383 = vmatprep.subr.bf16.mxu0 0
      %384 = vmatpush2.bf16.xpose.msra.mxu0 0
      %385 = vmatprep.subr.bf16.mxu0 0
      %386 = vmatpush2.bf16.xpose.msra.mxu0 0
      %387 = vmatprep.subr.bf16.mxu0 0
      %388 = vmatpush2.bf16.xpose.msra.mxu0 0
      %389 = vmatprep.subr.bf16.mxu0 0
      %390 = vmatpush2.bf16.xpose.msra.mxu0 0
      %391 = vmatprep.mubr.bf16.mxu0 0
      %392 = vmatmul.mubr.bf16.gmra.mxu0 %v348
      %v393 = vpop.f32.mrf.mxu0
      %v394 = vadd.f32 0.0, %v393
      %v395 = vpop.f32.mrf.mxu0
      %v396 = vpop.f32.mrf.mxu0
      %v397 = vadd.f32 0.0, %v396
      %v398 = vpop.f32.mrf.mxu0
      %399 = vmatprep.mubr.bf16.mxu0 0
      %400 = vmatmul.mubr.bf16.gmra.mxu0 %v351
      %v401 = vpop.f32.mrf.mxu0
      %v402 = vadd.f32 0.0, %v401
      %v403 = vpop.f32.mrf.mxu0
      %v404 = vpop.f32.mrf.mxu0
      %v405 = vpop.f32.mrf.mxu0
      %406 = vdwg.mxu0
      %v407 = vsel %vm235, %v394, -inf
      %408 = vmax.xlane.f32.xlu0 %v407
      %v409 = vpop.xlane.xlu0 %408
      %v410 = vsel %vm235, %v397, -inf
      %411 = vmax.xlane.f32.xlu0 %v410
      %v412 = vpop.xlane.xlu0 %411
      %v413 = vsel %vm242, %v402, -inf
      %414 = vmax.xlane.f32.xlu0 %v413
      %v415 = vpop.xlane.xlu0 %414
      %v416 = vsub.f32 %v394, %v409
      %v417 = vsub.f32 %v397, %v412
      %v418 = vsub.f32 %v402, %v415
      %v419 = vmul.f32 %v416, 1.442695
      %v420 = vpow.pop %v419
      %v421 = vmul.f32 %v417, 1.442695
      %v422 = vpow.pop %v421
      %v423 = vmul.f32 %v418, 1.442695
      %v424 = vpow.pop %v423
      %v425 = vsel %vm235, %v420, 0.0
      %426 = vadd.xlane.f32.xlu0 %v425
      %v427 = vpop.xlane.xlu0 %426
      %v428 = vsel %vm235, %v422, 0.0
      %429 = vadd.xlane.f32.xlu0 %v428
      %v430 = vpop.xlane.xlu0 %429
      %v431 = vsel %vm242, %v424, 0.0
      %432 = vadd.xlane.f32.xlu0 %v431
      %v433 = vpop.xlane.xlu0 %432
      %v434 = vrcp.pop %v427
      %v435 = vrcp.pop %v430
      %v436 = vrcp.pop %v433
      %v437 = vmul.f32 %v420, %v434
      %v438 = vmul.f32 %v422, %v435
      %v439 = vmul.f32 %v424, %v436
      %v440 = vpack.c.bf16 %v438, %v437
      %v441 = vpack.c.bf16 %v439, %v439
      %442 = vrot.lane.b32.xlu0 %v166, 56
      %v443 = vpop.permute.xlu0 %442
      %444 = vrot.lane.b32.xlu0 %v167, 56
      %v445 = vpop.permute.xlu0 %444
      %v448 = vsel %vm235, %v440, 0
      %v451 = vsel %vm235, %v441, 0
      %v454 = vand.u32 %v445, %v285
      %456 = vmatprep.subr.bf16.mxu0 0
      %457 = vmatpush1.bf16.msra.mxu0 0
      %458 = vmatprep.subr.bf16.mxu0 0
      %459 = vmatpush1.bf16.msra.mxu0 0
      %460 = vmatprep.subr.bf16.mxu0 0
      %461 = vmatpush1.bf16.msra.mxu0 0
      %462 = vmatprep.subr.bf16.mxu0 0
      %463 = vmatpush1.bf16.msra.mxu0 0
      %464 = vmatprep.subr.bf16.mxu0 0
      %465 = vmatpush1.bf16.msra.mxu0 0
      %466 = vmatprep.subr.bf16.mxu0 0
      %467 = vmatpush1.bf16.msra.mxu0 0
      %468 = vmatprep.subr.bf16.mxu0 0
      %469 = vmatpush1.bf16.msra.mxu0 %v454
      %470 = vmatprep.subr.bf16.mxu0 0
      %471 = vmatpush1.bf16.msra.mxu0 %v443
      %472 = vmatprep.subr.bf16.mxu0 0
      %473 = vmatpush2.bf16.msra.mxu0 0
      %474 = vmatprep.subr.bf16.mxu0 0
      %475 = vmatpush2.bf16.msra.mxu0 0
      %476 = vmatprep.subr.bf16.mxu0 0
      %477 = vmatpush2.bf16.msra.mxu0 0
      %478 = vmatprep.subr.bf16.mxu0 0
      %479 = vmatpush2.bf16.msra.mxu0 0
      %480 = vmatprep.subr.bf16.mxu0 0
      %481 = vmatpush2.bf16.msra.mxu0 0
      %482 = vmatprep.subr.bf16.mxu0 0
      %483 = vmatpush2.bf16.msra.mxu0 0
      %484 = vmatprep.subr.bf16.mxu0 0
      %485 = vmatpush2.bf16.msra.mxu0 0
      %486 = vmatprep.subr.bf16.mxu0 0
      %487 = vmatpush2.bf16.msra.mxu0 0
      %488 = vmatprep.mubr.bf16.mxu0 0
      %489 = vmatmul.mubr.bf16.gmra.mxu0 %v448
      %v490 = vpop.f32.mrf.mxu0
      %v491 = vadd.f32 0.0, %v490
      %v492 = vpop.f32.mrf.mxu0
      %v493 = vpop.f32.mrf.mxu0
      %v494 = vadd.f32 0.0, %v493
      %v495 = vpop.f32.mrf.mxu0
      %496 = vmatprep.mubr.bf16.mxu0 0
      %497 = vmatmul.mubr.bf16.gmra.mxu0 %v451
      %v498 = vpop.f32.mrf.mxu0
      %v499 = vadd.f32 0.0, %v498
      %v500 = vpop.f32.mrf.mxu0
      %v501 = vpop.f32.mrf.mxu0
      %v502 = vpop.f32.mrf.mxu0
      %503 = vdwg.mxu0
      %v504 = vadd.f32 %v267, %v437
      %v505 = vadd.f32 %v268, %v438
      %v506 = vadd.f32 %v269, %v439
      %507 = vrot.lane.b32.xlu0 %v164, 112
      %v508 = vpop.permute.xlu0 %507
      %509 = vrot.lane.b32.xlu0 %v165, 112
      %v510 = vpop.permute.xlu0 %509
      %511 = vrot.lane.b32.xlu0 %v166, 80
      %v512 = vpop.permute.xlu0 %511
      %513 = vrot.lane.b32.xlu0 %v167, 80
      %v514 = vpop.permute.xlu0 %513
      %v516 = vsel %vm174, %v508, 0
      %v519 = vsel %vm174, %v510, 0
      %v522 = vsel %vm174, %v512, 0
      %v525 = vsel %vm174, %v514, 0
      %527 = vmatprep.subr.bf16.mxu0 0
      %528 = vmatpush1.bf16.xpose.msra.mxu0 0
      %529 = vmatprep.subr.bf16.mxu0 0
      %530 = vmatpush1.bf16.xpose.msra.mxu0 0
      %531 = vmatprep.subr.bf16.mxu0 0
      %532 = vmatpush1.bf16.xpose.msra.mxu0 0
      %533 = vmatprep.subr.bf16.mxu0 0
      %534 = vmatpush1.bf16.xpose.msra.mxu0 0
      %535 = vmatprep.subr.bf16.mxu0 0
      %536 = vmatpush1.bf16.xpose.msra.mxu0 0
      %537 = vmatprep.subr.bf16.mxu0 0
      %538 = vmatpush1.bf16.xpose.msra.mxu0 0
      %539 = vmatprep.subr.bf16.mxu0 0
      %540 = vmatpush1.bf16.xpose.msra.mxu0 %v525
      %541 = vmatprep.subr.bf16.mxu0 0
      %542 = vmatpush1.bf16.xpose.msra.mxu0 %v522
      %543 = vmatprep.subr.bf16.mxu0 0
      %544 = vmatpush2.bf16.xpose.msra.mxu0 0
      %545 = vmatprep.subr.bf16.mxu0 0
      %546 = vmatpush2.bf16.xpose.msra.mxu0 0
      %547 = vmatprep.subr.bf16.mxu0 0
      %548 = vmatpush2.bf16.xpose.msra.mxu0 0
      %549 = vmatprep.subr.bf16.mxu0 0
      %550 = vmatpush2.bf16.xpose.msra.mxu0 0
      %551 = vmatprep.subr.bf16.mxu0 0
      %552 = vmatpush2.bf16.xpose.msra.mxu0 0
      %553 = vmatprep.subr.bf16.mxu0 0
      %554 = vmatpush2.bf16.xpose.msra.mxu0 0
      %555 = vmatprep.subr.bf16.mxu0 0
      %556 = vmatpush2.bf16.xpose.msra.mxu0 0
      %557 = vmatprep.subr.bf16.mxu0 0
      %558 = vmatpush2.bf16.xpose.msra.mxu0 0
      %559 = vmatprep.mubr.bf16.mxu0 0
      %560 = vmatmul.mubr.bf16.gmra.mxu0 %v516
      %v561 = vpop.f32.mrf.mxu0
      %v562 = vadd.f32 0.0, %v561
      %v563 = vpop.f32.mrf.mxu0
      %v564 = vpop.f32.mrf.mxu0
      %v565 = vadd.f32 0.0, %v564
      %v566 = vpop.f32.mrf.mxu0
      %567 = vmatprep.mubr.bf16.mxu0 0
      %568 = vmatmul.mubr.bf16.gmra.mxu0 %v519
      %v569 = vpop.f32.mrf.mxu0
      %v570 = vadd.f32 0.0, %v569
      %v571 = vpop.f32.mrf.mxu0
      %v572 = vpop.f32.mrf.mxu0
      %v573 = vpop.f32.mrf.mxu0
      %574 = vdwg.mxu0
      %v575 = vsel %vm235, %v562, -inf
      %576 = vmax.xlane.f32.xlu0 %v575
      %v577 = vpop.xlane.xlu0 %576
      %v578 = vsel %vm235, %v565, -inf
      %579 = vmax.xlane.f32.xlu0 %v578
      %v580 = vpop.xlane.xlu0 %579
      %v581 = vsel %vm242, %v570, -inf
      %582 = vmax.xlane.f32.xlu0 %v581
      %v583 = vpop.xlane.xlu0 %582
      %v584 = vsub.f32 %v562, %v577
      %v585 = vsub.f32 %v565, %v580
      %v586 = vsub.f32 %v570, %v583
      %v587 = vmul.f32 %v584, 1.442695
      %v588 = vpow.pop %v587
      %v589 = vmul.f32 %v585, 1.442695
      %v590 = vpow.pop %v589
      %v591 = vmul.f32 %v586, 1.442695
      %v592 = vpow.pop %v591
      %v593 = vsel %vm235, %v588, 0.0
      %594 = vadd.xlane.f32.xlu0 %v593
      %v595 = vpop.xlane.xlu0 %594
      %v596 = vsel %vm235, %v590, 0.0
      %597 = vadd.xlane.f32.xlu0 %v596
      %v598 = vpop.xlane.xlu0 %597
      %v599 = vsel %vm242, %v592, 0.0
      %600 = vadd.xlane.f32.xlu0 %v599
      %v601 = vpop.xlane.xlu0 %600
      %v602 = vrcp.pop %v595
      %v603 = vrcp.pop %v598
      %v604 = vrcp.pop %v601
      %v605 = vmul.f32 %v588, %v602
      %v606 = vmul.f32 %v590, %v603
      %v607 = vmul.f32 %v592, %v604
      %v608 = vpack.c.bf16 %v606, %v605
      %v609 = vpack.c.bf16 %v607, %v607
      %610 = vrot.lane.b32.xlu0 %v166, 48
      %v611 = vpop.permute.xlu0 %610
      %612 = vrot.lane.b32.xlu0 %v167, 48
      %v613 = vpop.permute.xlu0 %612
      %v616 = vsel %vm235, %v608, 0
      %v619 = vsel %vm235, %v609, 0
      %v622 = vand.u32 %v613, %v285
      %624 = vmatprep.subr.bf16.mxu0 0
      %625 = vmatpush1.bf16.msra.mxu0 0
      %626 = vmatprep.subr.bf16.mxu0 0
      %627 = vmatpush1.bf16.msra.mxu0 0
      %628 = vmatprep.subr.bf16.mxu0 0
      %629 = vmatpush1.bf16.msra.mxu0 0
      %630 = vmatprep.subr.bf16.mxu0 0
      %631 = vmatpush1.bf16.msra.mxu0 0
      %632 = vmatprep.subr.bf16.mxu0 0
      %633 = vmatpush1.bf16.msra.mxu0 0
      %634 = vmatprep.subr.bf16.mxu0 0
      %635 = vmatpush1.bf16.msra.mxu0 0
      %636 = vmatprep.subr.bf16.mxu0 0
      %637 = vmatpush1.bf16.msra.mxu0 %v622
      %638 = vmatprep.subr.bf16.mxu0 0
      %639 = vmatpush1.bf16.msra.mxu0 %v611
      %640 = vmatprep.subr.bf16.mxu0 0
      %641 = vmatpush2.bf16.msra.mxu0 0
      %642 = vmatprep.subr.bf16.mxu0 0
      %643 = vmatpush2.bf16.msra.mxu0 0
      %644 = vmatprep.subr.bf16.mxu0 0
      %645 = vmatpush2.bf16.msra.mxu0 0
      %646 = vmatprep.subr.bf16.mxu0 0
      %647 = vmatpush2.bf16.msra.mxu0 0
      %648 = vmatprep.subr.bf16.mxu0 0
      %649 = vmatpush2.bf16.msra.mxu0 0
      %650 = vmatprep.subr.bf16.mxu0 0
      %651 = vmatpush2.bf16.msra.mxu0 0
      %652 = vmatprep.subr.bf16.mxu0 0
      %653 = vmatpush2.bf16.msra.mxu0 0
      %654 = vmatprep.subr.bf16.mxu0 0
      %655 = vmatpush2.bf16.msra.mxu0 0
      %656 = vmatprep.mubr.bf16.mxu0 0
      %657 = vmatmul.mubr.bf16.gmra.mxu0 %v616
      %v658 = vpop.f32.mrf.mxu0
      %v659 = vadd.f32 0.0, %v658
      %v660 = vpop.f32.mrf.mxu0
      %v661 = vpop.f32.mrf.mxu0
      %v662 = vadd.f32 0.0, %v661
      %v663 = vpop.f32.mrf.mxu0
      %664 = vmatprep.mubr.bf16.mxu0 0
      %665 = vmatmul.mubr.bf16.gmra.mxu0 %v619
      %v666 = vpop.f32.mrf.mxu0
      %v667 = vadd.f32 0.0, %v666
      %v668 = vpop.f32.mrf.mxu0
      %v669 = vpop.f32.mrf.mxu0
      %v670 = vpop.f32.mrf.mxu0
      %671 = vdwg.mxu0
      %v672 = vadd.f32 %v504, %v605
      %v673 = vadd.f32 %v505, %v606
      %v674 = vadd.f32 %v506, %v607
      %675 = vrot.lane.b32.xlu0 %v164, 104
      %v676 = vpop.permute.xlu0 %675
      %677 = vrot.lane.b32.xlu0 %v165, 104
      %v678 = vpop.permute.xlu0 %677
      %679 = vrot.lane.b32.xlu0 %v166, 72
      %v680 = vpop.permute.xlu0 %679
      %681 = vrot.lane.b32.xlu0 %v167, 72
      %v682 = vpop.permute.xlu0 %681
      %v684 = vsel %vm174, %v676, 0
      %v687 = vsel %vm174, %v678, 0
      %v690 = vsel %vm174, %v680, 0
      %v693 = vsel %vm174, %v682, 0
      %695 = vmatprep.subr.bf16.mxu0 0
      %696 = vmatpush1.bf16.xpose.msra.mxu0 0
      %697 = vmatprep.subr.bf16.mxu0 0
      %698 = vmatpush1.bf16.xpose.msra.mxu0 0
      %699 = vmatprep.subr.bf16.mxu0 0
      %700 = vmatpush1.bf16.xpose.msra.mxu0 0
      %701 = vmatprep.subr.bf16.mxu0 0
      %702 = vmatpush1.bf16.xpose.msra.mxu0 0
      %703 = vmatprep.subr.bf16.mxu0 0
      %704 = vmatpush1.bf16.xpose.msra.mxu0 0
      %705 = vmatprep.subr.bf16.mxu0 0
      %706 = vmatpush1.bf16.xpose.msra.mxu0 0
      %707 = vmatprep.subr.bf16.mxu0 0
      %708 = vmatpush1.bf16.xpose.msra.mxu0 %v693
      %709 = vmatprep.subr.bf16.mxu0 0
      %710 = vmatpush1.bf16.xpose.msra.mxu0 %v690
      %711 = vmatprep.subr.bf16.mxu0 0
      %712 = vmatpush2.bf16.xpose.msra.mxu0 0
      %713 = vmatprep.subr.bf16.mxu0 0
      %714 = vmatpush2.bf16.xpose.msra.mxu0 0
      %715 = vmatprep.subr.bf16.mxu0 0
      %716 = vmatpush2.bf16.xpose.msra.mxu0 0
      %717 = vmatprep.subr.bf16.mxu0 0
      %718 = vmatpush2.bf16.xpose.msra.mxu0 0
      %719 = vmatprep.subr.bf16.mxu0 0
      %720 = vmatpush2.bf16.xpose.msra.mxu0 0
      %721 = vmatprep.subr.bf16.mxu0 0
      %722 = vmatpush2.bf16.xpose.msra.mxu0 0
      %723 = vmatprep.subr.bf16.mxu0 0
      %724 = vmatpush2.bf16.xpose.msra.mxu0 0
      %725 = vmatprep.subr.bf16.mxu0 0
      %726 = vmatpush2.bf16.xpose.msra.mxu0 0
      %727 = vmatprep.mubr.bf16.mxu0 0
      %728 = vmatmul.mubr.bf16.gmra.mxu0 %v684
      %v729 = vpop.f32.mrf.mxu0
      %v730 = vadd.f32 0.0, %v729
      %v731 = vpop.f32.mrf.mxu0
      %v732 = vpop.f32.mrf.mxu0
      %v733 = vadd.f32 0.0, %v732
      %v734 = vpop.f32.mrf.mxu0
      %735 = vmatprep.mubr.bf16.mxu0 0
      %736 = vmatmul.mubr.bf16.gmra.mxu0 %v687
      %v737 = vpop.f32.mrf.mxu0
      %v738 = vadd.f32 0.0, %v737
      %v739 = vpop.f32.mrf.mxu0
      %v740 = vpop.f32.mrf.mxu0
      %v741 = vpop.f32.mrf.mxu0
      %742 = vdwg.mxu0
      %v743 = vsel %vm235, %v730, -inf
      %744 = vmax.xlane.f32.xlu0 %v743
      %v745 = vpop.xlane.xlu0 %744
      %v746 = vsel %vm235, %v733, -inf
      %747 = vmax.xlane.f32.xlu0 %v746
      %v748 = vpop.xlane.xlu0 %747
      %v749 = vsel %vm242, %v738, -inf
      %750 = vmax.xlane.f32.xlu0 %v749
      %v751 = vpop.xlane.xlu0 %750
      %v752 = vsub.f32 %v730, %v745
      %v753 = vsub.f32 %v733, %v748
      %v754 = vsub.f32 %v738, %v751
      %v755 = vmul.f32 %v752, 1.442695
      %v756 = vpow.pop %v755
      %v757 = vmul.f32 %v753, 1.442695
      %v758 = vpow.pop %v757
      %v759 = vmul.f32 %v754, 1.442695
      %v760 = vpow.pop %v759
      %v761 = vsel %vm235, %v756, 0.0
      %762 = vadd.xlane.f32.xlu0 %v761
      %v763 = vpop.xlane.xlu0 %762
      %v764 = vsel %vm235, %v758, 0.0
      %765 = vadd.xlane.f32.xlu0 %v764
      %v766 = vpop.xlane.xlu0 %765
      %v767 = vsel %vm242, %v760, 0.0
      %768 = vadd.xlane.f32.xlu0 %v767
      %v769 = vpop.xlane.xlu0 %768
      %v770 = vrcp.pop %v763
      %v771 = vrcp.pop %v766
      %v772 = vrcp.pop %v769
      %v773 = vmul.f32 %v756, %v770
      %v774 = vmul.f32 %v758, %v771
      %v775 = vmul.f32 %v760, %v772
      %v776 = vpack.c.bf16 %v774, %v773
      %v777 = vpack.c.bf16 %v775, %v775
      %778 = vrot.lane.b32.xlu0 %v166, 40
      %v779 = vpop.permute.xlu0 %778
      %780 = vrot.lane.b32.xlu0 %v167, 40
      %v781 = vpop.permute.xlu0 %780
      %v784 = vsel %vm235, %v776, 0
      %v787 = vsel %vm235, %v777, 0
      %v790 = vand.u32 %v781, %v285
      %792 = vmatprep.subr.bf16.mxu0 0
      %793 = vmatpush1.bf16.msra.mxu0 0
      %794 = vmatprep.subr.bf16.mxu0 0
      %795 = vmatpush1.bf16.msra.mxu0 0
      %796 = vmatprep.subr.bf16.mxu0 0
      %797 = vmatpush1.bf16.msra.mxu0 0
      %798 = vmatprep.subr.bf16.mxu0 0
      %799 = vmatpush1.bf16.msra.mxu0 0
      %800 = vmatprep.subr.bf16.mxu0 0
      %801 = vmatpush1.bf16.msra.mxu0 0
      %802 = vmatprep.subr.bf16.mxu0 0
      %803 = vmatpush1.bf16.msra.mxu0 0
      %804 = vmatprep.subr.bf16.mxu0 0
      %805 = vmatpush1.bf16.msra.mxu0 %v790
      %806 = vmatprep.subr.bf16.mxu0 0
      %807 = vmatpush1.bf16.msra.mxu0 %v779
      %808 = vmatprep.subr.bf16.mxu0 0
      %809 = vmatpush2.bf16.msra.mxu0 0
      %810 = vmatprep.subr.bf16.mxu0 0
      %811 = vmatpush2.bf16.msra.mxu0 0
      %812 = vmatprep.subr.bf16.mxu0 0
      %813 = vmatpush2.bf16.msra.mxu0 0
      %814 = vmatprep.subr.bf16.mxu0 0
      %815 = vmatpush2.bf16.msra.mxu0 0
      %816 = vmatprep.subr.bf16.mxu0 0
      %817 = vmatpush2.bf16.msra.mxu0 0
      %818 = vmatprep.subr.bf16.mxu0 0
      %819 = vmatpush2.bf16.msra.mxu0 0
      %820 = vmatprep.subr.bf16.mxu0 0
      %821 = vmatpush2.bf16.msra.mxu0 0
      %822 = vmatprep.subr.bf16.mxu0 0
      %823 = vmatpush2.bf16.msra.mxu0 0
      %824 = vmatprep.mubr.bf16.mxu0 0
      %825 = vmatmul.mubr.bf16.gmra.mxu0 %v784
      %v826 = vpop.f32.mrf.mxu0
      %v827 = vadd.f32 0.0, %v826
      %v828 = vpop.f32.mrf.mxu0
      %v829 = vpop.f32.mrf.mxu0
      %v830 = vadd.f32 0.0, %v829
      %v831 = vpop.f32.mrf.mxu0
      %832 = vmatprep.mubr.bf16.mxu0 0
      %833 = vmatmul.mubr.bf16.gmra.mxu0 %v787
      %v834 = vpop.f32.mrf.mxu0
      %v835 = vadd.f32 0.0, %v834
      %v836 = vpop.f32.mrf.mxu0
      %v837 = vpop.f32.mrf.mxu0
      %v838 = vpop.f32.mrf.mxu0
      %839 = vdwg.mxu0
      %v840 = vadd.f32 %v672, %v773
      %v841 = vadd.f32 %v673, %v774
      %v842 = vadd.f32 %v674, %v775
      %846 = vrot.lane.b32.xlu0 %v491, 8
      %v847 = vpop.permute.xlu0 %846
      %848 = vrot.lane.b32.xlu0 %v494, 8
      %v849 = vpop.permute.xlu0 %848
      %850 = vrot.lane.b32.xlu0 %v499, 8
      %v851 = vpop.permute.xlu0 %850
      %858 = vrot.lane.b32.xlu0 %v659, 16
      %v859 = vpop.permute.xlu0 %858
      %860 = vrot.lane.b32.xlu0 %v662, 16
      %v861 = vpop.permute.xlu0 %860
      %862 = vrot.lane.b32.xlu0 %v667, 16
      %v863 = vpop.permute.xlu0 %862
      %870 = vrot.lane.b32.xlu0 %v827, 24
      %v871 = vpop.permute.xlu0 %870
      %872 = vrot.lane.b32.xlu0 %v830, 24
      %v873 = vpop.permute.xlu0 %872
      %874 = vrot.lane.b32.xlu0 %v835, 24
      %v875 = vpop.permute.xlu0 %874
      %v879 = vsel %vm174, %v324, %v847
      %v880 = vsel %vm174, %v327, %v849
      %v881 = vsel %vm174, %v332, %v851
      %vm882 = vcmask 130048
      %v883 = vsel %vm882, %v879, %v859
      %v884 = vsel %vm882, %v880, %v861
      %v885 = vsel %vm882, %v881, %v863
      %vm886 = vcmask 195584
      %v887 = vsel %vm886, %v883, %v871
      %v888 = vsel %vm886, %v884, %v873
      %v889 = vsel %vm886, %v885, %v875
      %vm890 = vcmask 261120
      %891 = vst.msk [vmem:[%s151] sm:$0xff] %vm890, %v887
      %892 = vst.msk [vmem:[%s151 + $0x8] sm:$0xff] %vm890, %v888
      %vm893 = vcmask 253952
      %894 = vst.msk [vmem:[%s151 + $0x10] sm:$0x1] %vm893, %v889
      %v895 = vmul.f32 %v840, 0.25
      %v896 = vmul.f32 %v841, 0.25
      %v897 = vmul.f32 %v842, 0.25
      %898 = vst.msk [vmem:[%s156] sm:$0xff] %vm235, %v895
      %899 = vst.msk [vmem:[%s156 + $0x8] sm:$0xff] %vm235, %v896
      %900 = vst.msk [vmem:[%s156 + $0x10] sm:$0x1] %vm242, %v897
      %p901 = scmp.lt.s32.totalorder %s14, 1
      %s902 = scalar_select %p901, %s14, 1
      %s903 = smul.addr %s902, 3
      %s904 = smul.addr %s903, 8
      %s905 = scalar_lea.vmem %s1, %s904
      %p906 = scmp.lt.s32.totalorder %s14, 1
      %s907 = scalar_select %p906, %s14, 1
      %s908 = smul.addr %s907, 3
      %s909 = smul.addr %s908, 8
      %s910 = scalar_lea.vmem %s2, %s909
      // Predicated region
      $region25: #{vision_transformer.19} parent=23 // pred_check
        %p911 = pneg %p58
      $region26: #{vision_transformer.19} parent=23 // pred_check_branch
        %913 = sbr.rel (%p911) target = $region28
      $region27: #{vision_transformer.19} parent=23 // pred_region
        _
      $region28: #{vision_transformer.19} parent=23 // pred_fallthru
        _
      // Predicated region
      $region29: #{vision_transformer.19} parent=23 // pred_check
        %p914 = pneg %p84
      $region30: #{vision_transformer.19} parent=23 // pred_check_branch
        %916 = sbr.rel (%p914) target = $region32
      $region31: #{vision_transformer.19} parent=23 // pred_region
        _
      $region32: #{vision_transformer.19} parent=23 // pred_fallthru
        _
    $region24: #{vision_transformer.19} parent=5 // pred_fallthru
      _
    %p917 = scmp.le.s32.totalorder 2, %s9
    // Predicated region
    $region33: #{vision_transformer.19} parent=5 // pred_check
      %p918 = pneg %p917
    $region34: #{vision_transformer.19} parent=5 // pred_check_branch
      %920 = sbr.rel (%p918) target = $region36
    $region35: #{vision_transformer.19} parent=5 // pred_region
      %s921 = ssub.s32 %s9, 2
      // Predicated region
      $region37: #{vision_transformer.19} parent=35 // pred_check
        %p922 = pneg %p64
      $region38: #{vision_transformer.19} parent=35 // pred_check_branch
        %924 = sbr.rel (%p922) target = $region40
      $region39: #{vision_transformer.19} parent=35 // pred_region
        %p925 = scmp.lt.s32.totalorder %s15, 1
        %s926 = scalar_select %p925, %s15, 1
        %s927 = smul.addr %s926, 3
        %s928 = smul.addr %s927, 8
        %s929 = scalar_lea.vmem %s1, %s928
      $region40: #{vision_transformer.19} parent=35 // pred_fallthru
        _
      // Predicated region
      $region41: #{vision_transformer.19} parent=35 // pred_check
        %p930 = pneg %p90
      $region42: #{vision_transformer.19} parent=35 // pred_check_branch
        %932 = sbr.rel (%p930) target = $region44
      $region43: #{vision_transformer.19} parent=35 // pred_region
        %p933 = scmp.lt.s32.totalorder %s15, 1
        %s934 = scalar_select %p933, %s15, 1
        %s935 = smul.addr %s934, 3
        %s936 = smul.addr %s935, 8
        %s937 = scalar_lea.vmem %s2, %s936
      $region44: #{vision_transformer.19} parent=35 // pred_fallthru
        _
    $region36: #{vision_transformer.19} parent=5 // pred_fallthru
      _
  $region6: #{vision_transformer.19} parent=0 // loop_footer
    %s13 = sadd.s32 1, %s9
  $region7: #{vision_transformer.19} parent=0 // loop_footer_branch
    %8 = sbr.rel target = $region3
  $region8: #{vision_transformer.19} parent=0 // loop_exit
    _

</llo_original>
